<compile_context>
chip_gen: v7x
topology: tpu7x:2x2x1
jax: 0.10.0
libtpu: 0.0.40
codegen_flags: <defaults>
</compile_context>

<pallas_src>
import jax
import jax.numpy as jnp
from jax.experimental import pallas as pl
from jax.experimental.pallas import tpu as pltpu

# ----------------------------- problem size ---------------------------------
B, C, H, W = 2, 4, 16, 16        # batch, inplanes == planes, spatial
HW = H * W                       # 256 -> lane axis (2 full 128-lane groups)
KH = KW = 3
BN_EPS = 1e-5


# ------------------------------ kernel helpers -------------------------------
def _border_masks():
    """f32 multiplier masks (B, HW) per 3x3 tap offset; None == all-valid.

    Taps are built by rolling the flattened H*W axis, so positions whose
    source (h+dh, w+dw) falls outside the HxW image (the conv zero padding,
    including the row-wrap of the flat roll) must be zeroed."""
    p = jax.lax.broadcasted_iota(jnp.int32, (B, HW), 1)   # flat position h*W+w
    wmod = jnp.bitwise_and(p, W - 1)                      # w = p % W (W pow2)
    row_lo = p >= W                                       # h >= 1
    row_hi = p < (H - 1) * W                              # h <= H-2
    col_lo = wmod >= 1                                    # w >= 1
    col_hi = wmod <= W - 2                                # w <= W-2
    masks = {}
    for kh in range(KH):
        for kw in range(KW):
            conds = []
            if kh == 0:
                conds.append(row_lo)
            if kh == 2:
                conds.append(row_hi)
            if kw == 0:
                conds.append(col_lo)
            if kw == 2:
                conds.append(col_hi)
            if not conds:
                masks[(kh, kw)] = None
            else:
                m = conds[0]
                for extra in conds[1:]:
                    m = jnp.logical_and(m, extra)
                masks[(kh, kw)] = m.astype(jnp.float32)
    return masks


def _conv3x3_vpu(xs, w_ref, masks):
    """3x3 / stride-1 / pad-1 conv (bias=False) on lane-dense rows.

    xs: list of C arrays (B, HW) f32, one per input channel (H*W on lanes).
    w_ref: flat (C*C*9,) SMEM ref, row-major (Cout, Cin, 3, 3) PyTorch layout.
    Tap-outer / co-inner: only one shifted tap + C accumulators are live."""
    accs = [jnp.zeros((B, HW), jnp.float32) for _ in range(C)]
    for ci in range(C):
        xc = xs[ci]
        for kh in range(KH):
            for kw in range(KW):
                s = (kh - 1) * W + (kw - 1)               # flat source offset
                # tap[p] = xc[p + s]  (wrap positions zeroed by the mask)
                tap = xc if s == 0 else pltpu.roll(xc, (-s) % HW, axis=1)
                m = masks[(kh, kw)]
                if m is not None:
                    tap = tap * m
                for co in range(C):
                    wv = w_ref[((co * C + ci) * KH + kh) * KW + kw]
                    accs[co] = accs[co] + wv * tap
    return accs


def _bn2d_fused(chans, g_ref, b_ref, relu):
    """Train-mode BatchNorm2d (biased batch stats) folded into one FMA/elem."""
    inv_n = 1.0 / (B * HW)
    out = []
    for c in range(C):
        h = chans[c]                                              # (B, HW)
        s1 = jnp.sum(jnp.sum(h, axis=1, keepdims=True), axis=0, keepdims=True)
        s2 = jnp.sum(jnp.sum(h * h, axis=1, keepdims=True), axis=0,
                     keepdims=True)
        mean = s1 * inv_n                                         # (1, 1)
        var = s2 * inv_n - mean * mean                            # (1, 1)
        scale = g_ref[c] * jax.lax.rsqrt(var + BN_EPS)            # (1, 1)
        shift = b_ref[c] - mean * scale                           # (1, 1)
        y = h * scale + shift
        if relu:
            y = jnp.maximum(y, 0.0)
        out.append(y)
    return out


# -------------------------------- the kernel ---------------------------------
def basic_block_kernel(x_ref, w1_ref, g1_ref, b1_ref, w2_ref, g2_ref, b2_ref,
                       o_ref):
    masks = _border_masks()
    # Per-channel lane-dense rows; also the residual for the skip connection.
    xs = [x_ref[c * B:(c + 1) * B, :] for c in range(C)]
    # conv1 -> bn1 -> relu   (intermediate stays in vregs, no scratch)
    h = _conv3x3_vpu(xs, w1_ref, masks)
    h = _bn2d_fused(h, g1_ref, b1_ref, relu=True)
    # conv2 -> bn2
    h = _conv3x3_vpu(h, w2_ref, masks)
    h = _bn2d_fused(h, g2_ref, b2_ref, relu=False)
    # residual add (downsample is None, stride == 1) + final relu,
    # stored as full 256-lane rows of the dense output slab.
    for c in range(C):
        o_ref[c * B:(c + 1) * B, :] = jnp.maximum(h[c] + xs[c], 0.0)


def basic_block_forward(x, params):
    # Lane-dense working slab: (C*B, H*W), row = c*B + b, H*W on the lane axis.
    xd = jnp.transpose(x, (1, 0, 2, 3)).reshape(C * B, H * W)
    smem = pl.BlockSpec(memory_space=pltpu.MemorySpace.SMEM)
    vmem = pl.BlockSpec(memory_space=pltpu.MemorySpace.VMEM)
    out = pl.pallas_call(
        basic_block_kernel,
        in_specs=[vmem, smem, smem, smem, smem, smem, smem],
        out_specs=vmem,
        out_shape=jax.ShapeDtypeStruct((C * B, H * W), jnp.float32),
    )(xd, params["w1"], params["g1"], params["b1"],
      params["w2"], params["g2"], params["b2"])
    return jnp.transpose(out.reshape(C, B, H, W), (1, 0, 2, 3))


# --------------------------- pure-JAX reference -------------------------------
def basic_block_reference(x, params):
    def conv(v, w_flat):
        w = w_flat.reshape(C, C, KH, KW)                          # OIHW
        return jax.lax.conv_general_dilated(
            v, w, window_strides=(1, 1), padding=((1, 1), (1, 1)),
            dimension_numbers=("NCHW", "OIHW", "NCHW"))

    def bn(h, g, b):
        mean = jnp.mean(h, axis=(0, 2, 3), keepdims=True)
        var = jnp.mean(jnp.square(h - mean), axis=(0, 2, 3), keepdims=True)
        return ((h - mean) * jax.lax.rsqrt(var + BN_EPS)
                * g.reshape(1, C, 1, 1) + b.reshape(1, C, 1, 1))

    h = jax.nn.relu(bn(conv(x, params["w1"]), params["g1"], params["b1"]))
    h = bn(conv(h, params["w2"]), params["g2"], params["b2"])
    return jax.nn.relu(h + x)


# ------------------------------------ main ------------------------------------
if __name__ == "__main__":
    key = jax.random.PRNGKey(0)
    kx, kw1, kw2, kg1, kb1, kg2, kb2 = jax.random.split(key, 7)
    x = jax.random.normal(kx, (B, C, H, W), jnp.float32)
    params = {
        # conv weights: row-major flattened (Cout, Cin, 3, 3), bias=False
        "w1": jax.random.normal(kw1, (C * C * KH * KW,), jnp.float32) * 0.1,
        "g1": 1.0 + 0.1 * jax.random.normal(kg1, (C,), jnp.float32),
        "b1": 0.1 * jax.random.normal(kb1, (C,), jnp.float32),
        "w2": jax.random.normal(kw2, (C * C * KH * KW,), jnp.float32) * 0.1,
        "g2": 1.0 + 0.1 * jax.random.normal(kg2, (C,), jnp.float32),
        "b2": 0.1 * jax.random.normal(kb2, (C,), jnp.float32),
    }

    out = jax.jit(basic_block_forward)(x, params)
    jax.block_until_ready(out)
    assert out.shape == (B, C, H, W), out.shape

    ref = basic_block_reference(x, params)
    err = float(jnp.max(jnp.abs(out - ref)))
    assert err < 1e-3, f"max abs error vs reference: {err}"
    print("KERNEL_OK")
</pallas_src>

<mosaic_0001>
module attributes {stable_mosaic.version = 11 : i64} {
  func.func @basic_block_kernel(%arg0: memref<8x256xf32, #tpu.memory_space<vmem>>, %arg1: memref<144xf32, #tpu.memory_space<smem>>, %arg2: memref<4xf32, #tpu.memory_space<smem>>, %arg3: memref<4xf32, #tpu.memory_space<smem>>, %arg4: memref<144xf32, #tpu.memory_space<smem>>, %arg5: memref<4xf32, #tpu.memory_space<smem>>, %arg6: memref<4xf32, #tpu.memory_space<smem>>, %arg7: memref<8x256xf32, #tpu.memory_space<vmem>>) attributes {dimension_semantics = [], scalar_prefetch = 0 : i64, scratch_operands = 0 : i64, tpu.core_type = #tpu.core_type<tc>} {
    %0 = tpu.iota {dimensions = array<i32: 1>} : vector<2x256xi32>
    %c15_i32 = arith.constant 15 : i32
    %1 = vector.broadcast %c15_i32 : i32 to vector<2x256xi32>
    %2 = arith.andi %0, %1 : vector<2x256xi32>
    %c16_i32 = arith.constant 16 : i32
    %3 = vector.broadcast %c16_i32 : i32 to vector<2x256xi32>
    %4 = arith.cmpi sge, %0, %3 : vector<2x256xi32>
    %c240_i32 = arith.constant 240 : i32
    %5 = vector.broadcast %c240_i32 : i32 to vector<2x256xi32>
    %6 = arith.cmpi slt, %0, %5 : vector<2x256xi32>
    %c1_i32 = arith.constant 1 : i32
    %7 = vector.broadcast %c1_i32 : i32 to vector<2x256xi32>
    %8 = arith.cmpi sge, %2, %7 : vector<2x256xi32>
    %c14_i32 = arith.constant 14 : i32
    %9 = vector.broadcast %c14_i32 : i32 to vector<2x256xi32>
    %10 = arith.cmpi sle, %2, %9 : vector<2x256xi32>
    %11 = arith.andi %4, %8 : vector<2x256xi1>
    %12 = arith.extui %11 : vector<2x256xi1> to vector<2x256xi32>
    %13 = arith.sitofp %12 : vector<2x256xi32> to vector<2x256xf32>
    %14 = arith.extui %4 : vector<2x256xi1> to vector<2x256xi32>
    %15 = arith.sitofp %14 : vector<2x256xi32> to vector<2x256xf32>
    %16 = arith.andi %4, %10 : vector<2x256xi1>
    %17 = arith.extui %16 : vector<2x256xi1> to vector<2x256xi32>
    %18 = arith.sitofp %17 : vector<2x256xi32> to vector<2x256xf32>
    %19 = arith.extui %8 : vector<2x256xi1> to vector<2x256xi32>
    %20 = arith.sitofp %19 : vector<2x256xi32> to vector<2x256xf32>
    %21 = arith.extui %10 : vector<2x256xi1> to vector<2x256xi32>
    %22 = arith.sitofp %21 : vector<2x256xi32> to vector<2x256xf32>
    %23 = arith.andi %6, %8 : vector<2x256xi1>
    %24 = arith.extui %23 : vector<2x256xi1> to vector<2x256xi32>
    %25 = arith.sitofp %24 : vector<2x256xi32> to vector<2x256xf32>
    %26 = arith.extui %6 : vector<2x256xi1> to vector<2x256xi32>
    %27 = arith.sitofp %26 : vector<2x256xi32> to vector<2x256xf32>
    %28 = arith.andi %6, %10 : vector<2x256xi1>
    %29 = arith.extui %28 : vector<2x256xi1> to vector<2x256xi32>
    %30 = arith.sitofp %29 : vector<2x256xi32> to vector<2x256xf32>
    %c0 = arith.constant 0 : index
    %c0_0 = arith.constant 0 : index
    %31 = vector.load %arg0[%c0, %c0_0] : memref<8x256xf32, #tpu.memory_space<vmem>>, vector<2x256xf32>
    %c2 = arith.constant 2 : index
    %c0_1 = arith.constant 0 : index
    %32 = vector.load %arg0[%c2, %c0_1] : memref<8x256xf32, #tpu.memory_space<vmem>>, vector<2x256xf32>
    %c4 = arith.constant 4 : index
    %c0_2 = arith.constant 0 : index
    %33 = vector.load %arg0[%c4, %c0_2] : memref<8x256xf32, #tpu.memory_space<vmem>>, vector<2x256xf32>
    %c6 = arith.constant 6 : index
    %c0_3 = arith.constant 0 : index
    %34 = vector.load %arg0[%c6, %c0_3] : memref<8x256xf32, #tpu.memory_space<vmem>>, vector<2x256xf32>
    %cst = arith.constant 0.000000e+00 : f32
    %35 = vector.broadcast %cst : f32 to vector<2x256xf32>
    %cst_4 = arith.constant 0.000000e+00 : f32
    %36 = vector.broadcast %cst_4 : f32 to vector<2x256xf32>
    %cst_5 = arith.constant 0.000000e+00 : f32
    %37 = vector.broadcast %cst_5 : f32 to vector<2x256xf32>
    %cst_6 = arith.constant 0.000000e+00 : f32
    %38 = vector.broadcast %cst_6 : f32 to vector<2x256xf32>
    %c17_i32 = arith.constant 17 : i32
    %39 = tpu.dynamic_rotate %31 by %c17_i32 dim 1 : vector<2x256xf32>, i32 -> vector<2x256xf32>
    %40 = arith.mulf %39, %13 : vector<2x256xf32>
    %c0_7 = arith.constant 0 : index
    %41 = memref.load %arg1[%c0_7] : memref<144xf32, #tpu.memory_space<smem>>
    %42 = vector.broadcast %41 : f32 to vector<2x256xf32>
    %43 = arith.mulf %42, %40 : vector<2x256xf32>
    %44 = arith.addf %35, %43 : vector<2x256xf32>
    %c36 = arith.constant 36 : index
    %45 = memref.load %arg1[%c36] : memref<144xf32, #tpu.memory_space<smem>>
    %46 = vector.broadcast %45 : f32 to vector<2x256xf32>
    %47 = arith.mulf %46, %40 : vector<2x256xf32>
    %48 = arith.addf %36, %47 : vector<2x256xf32>
    %c72 = arith.constant 72 : index
    %49 = memref.load %arg1[%c72] : memref<144xf32, #tpu.memory_space<smem>>
    %50 = vector.broadcast %49 : f32 to vector<2x256xf32>
    %51 = arith.mulf %50, %40 : vector<2x256xf32>
    %52 = arith.addf %37, %51 : vector<2x256xf32>
    %c108 = arith.constant 108 : index
    %53 = memref.load %arg1[%c108] : memref<144xf32, #tpu.memory_space<smem>>
    %54 = vector.broadcast %53 : f32 to vector<2x256xf32>
    %55 = arith.mulf %54, %40 : vector<2x256xf32>
    %56 = arith.addf %38, %55 : vector<2x256xf32>
    %c16_i32_8 = arith.constant 16 : i32
    %57 = tpu.dynamic_rotate %31 by %c16_i32_8 dim 1 : vector<2x256xf32>, i32 -> vector<2x256xf32>
    %58 = arith.mulf %57, %15 : vector<2x256xf32>
    %c1 = arith.constant 1 : index
    %59 = memref.load %arg1[%c1] : memref<144xf32, #tpu.memory_space<smem>>
    %60 = vector.broadcast %59 : f32 to vector<2x256xf32>
    %61 = arith.mulf %60, %58 : vector<2x256xf32>
    %62 = arith.addf %44, %61 : vector<2x256xf32>
    %c37 = arith.constant 37 : index
    %63 = memref.load %arg1[%c37] : memref<144xf32, #tpu.memory_space<smem>>
    %64 = vector.broadcast %63 : f32 to vector<2x256xf32>
    %65 = arith.mulf %64, %58 : vector<2x256xf32>
    %66 = arith.addf %48, %65 : vector<2x256xf32>
    %c73 = arith.constant 73 : index
    %67 = memref.load %arg1[%c73] : memref<144xf32, #tpu.memory_space<smem>>
    %68 = vector.broadcast %67 : f32 to vector<2x256xf32>
    %69 = arith.mulf %68, %58 : vector<2x256xf32>
    %70 = arith.addf %52, %69 : vector<2x256xf32>
    %c109 = arith.constant 109 : index
    %71 = memref.load %arg1[%c109] : memref<144xf32, #tpu.memory_space<smem>>
    %72 = vector.broadcast %71 : f32 to vector<2x256xf32>
    %73 = arith.mulf %72, %58 : vector<2x256xf32>
    %74 = arith.addf %56, %73 : vector<2x256xf32>
    %c15_i32_9 = arith.constant 15 : i32
    %75 = tpu.dynamic_rotate %31 by %c15_i32_9 dim 1 : vector<2x256xf32>, i32 -> vector<2x256xf32>
    %76 = arith.mulf %75, %18 : vector<2x256xf32>
    %c2_10 = arith.constant 2 : index
    %77 = memref.load %arg1[%c2_10] : memref<144xf32, #tpu.memory_space<smem>>
    %78 = vector.broadcast %77 : f32 to vector<2x256xf32>
    %79 = arith.mulf %78, %76 : vector<2x256xf32>
    %80 = arith.addf %62, %79 : vector<2x256xf32>
    %c38 = arith.constant 38 : index
    %81 = memref.load %arg1[%c38] : memref<144xf32, #tpu.memory_space<smem>>
    %82 = vector.broadcast %81 : f32 to vector<2x256xf32>
    %83 = arith.mulf %82, %76 : vector<2x256xf32>
    %84 = arith.addf %66, %83 : vector<2x256xf32>
    %c74 = arith.constant 74 : index
    %85 = memref.load %arg1[%c74] : memref<144xf32, #tpu.memory_space<smem>>
    %86 = vector.broadcast %85 : f32 to vector<2x256xf32>
    %87 = arith.mulf %86, %76 : vector<2x256xf32>
    %88 = arith.addf %70, %87 : vector<2x256xf32>
    %c110 = arith.constant 110 : index
    %89 = memref.load %arg1[%c110] : memref<144xf32, #tpu.memory_space<smem>>
    %90 = vector.broadcast %89 : f32 to vector<2x256xf32>
    %91 = arith.mulf %90, %76 : vector<2x256xf32>
    %92 = arith.addf %74, %91 : vector<2x256xf32>
    %c1_i32_11 = arith.constant 1 : i32
    %93 = tpu.dynamic_rotate %31 by %c1_i32_11 dim 1 : vector<2x256xf32>, i32 -> vector<2x256xf32>
    %94 = arith.mulf %93, %20 : vector<2x256xf32>
    %c3 = arith.constant 3 : index
    %95 = memref.load %arg1[%c3] : memref<144xf32, #tpu.memory_space<smem>>
    %96 = vector.broadcast %95 : f32 to vector<2x256xf32>
    %97 = arith.mulf %96, %94 : vector<2x256xf32>
    %98 = arith.addf %80, %97 : vector<2x256xf32>
    %c39 = arith.constant 39 : index
    %99 = memref.load %arg1[%c39] : memref<144xf32, #tpu.memory_space<smem>>
    %100 = vector.broadcast %99 : f32 to vector<2x256xf32>
    %101 = arith.mulf %100, %94 : vector<2x256xf32>
    %102 = arith.addf %84, %101 : vector<2x256xf32>
    %c75 = arith.constant 75 : index
    %103 = memref.load %arg1[%c75] : memref<144xf32, #tpu.memory_space<smem>>
    %104 = vector.broadcast %103 : f32 to vector<2x256xf32>
    %105 = arith.mulf %104, %94 : vector<2x256xf32>
    %106 = arith.addf %88, %105 : vector<2x256xf32>
    %c111 = arith.constant 111 : index
    %107 = memref.load %arg1[%c111] : memref<144xf32, #tpu.memory_space<smem>>
    %108 = vector.broadcast %107 : f32 to vector<2x256xf32>
    %109 = arith.mulf %108, %94 : vector<2x256xf32>
    %110 = arith.addf %92, %109 : vector<2x256xf32>
    %c4_12 = arith.constant 4 : index
    %111 = memref.load %arg1[%c4_12] : memref<144xf32, #tpu.memory_space<smem>>
    %112 = vector.broadcast %111 : f32 to vector<2x256xf32>
    %113 = arith.mulf %112, %31 : vector<2x256xf32>
    %114 = arith.addf %98, %113 : vector<2x256xf32>
    %c40 = arith.constant 40 : index
    %115 = memref.load %arg1[%c40] : memref<144xf32, #tpu.memory_space<smem>>
    %116 = vector.broadcast %115 : f32 to vector<2x256xf32>
    %117 = arith.mulf %116, %31 : vector<2x256xf32>
    %118 = arith.addf %102, %117 : vector<2x256xf32>
    %c76 = arith.constant 76 : index
    %119 = memref.load %arg1[%c76] : memref<144xf32, #tpu.memory_space<smem>>
    %120 = vector.broadcast %119 : f32 to vector<2x256xf32>
    %121 = arith.mulf %120, %31 : vector<2x256xf32>
    %122 = arith.addf %106, %121 : vector<2x256xf32>
    %c112 = arith.constant 112 : index
    %123 = memref.load %arg1[%c112] : memref<144xf32, #tpu.memory_space<smem>>
    %124 = vector.broadcast %123 : f32 to vector<2x256xf32>
    %125 = arith.mulf %124, %31 : vector<2x256xf32>
    %126 = arith.addf %110, %125 : vector<2x256xf32>
    %c255_i32 = arith.constant 255 : i32
    %127 = tpu.dynamic_rotate %31 by %c255_i32 dim 1 : vector<2x256xf32>, i32 -> vector<2x256xf32>
    %128 = arith.mulf %127, %22 : vector<2x256xf32>
    %c5 = arith.constant 5 : index
    %129 = memref.load %arg1[%c5] : memref<144xf32, #tpu.memory_space<smem>>
    %130 = vector.broadcast %129 : f32 to vector<2x256xf32>
    %131 = arith.mulf %130, %128 : vector<2x256xf32>
    %132 = arith.addf %114, %131 : vector<2x256xf32>
    %c41 = arith.constant 41 : index
    %133 = memref.load %arg1[%c41] : memref<144xf32, #tpu.memory_space<smem>>
    %134 = vector.broadcast %133 : f32 to vector<2x256xf32>
    %135 = arith.mulf %134, %128 : vector<2x256xf32>
    %136 = arith.addf %118, %135 : vector<2x256xf32>
    %c77 = arith.constant 77 : index
    %137 = memref.load %arg1[%c77] : memref<144xf32, #tpu.memory_space<smem>>
    %138 = vector.broadcast %137 : f32 to vector<2x256xf32>
    %139 = arith.mulf %138, %128 : vector<2x256xf32>
    %140 = arith.addf %122, %139 : vector<2x256xf32>
    %c113 = arith.constant 113 : index
    %141 = memref.load %arg1[%c113] : memref<144xf32, #tpu.memory_space<smem>>
    %142 = vector.broadcast %141 : f32 to vector<2x256xf32>
    %143 = arith.mulf %142, %128 : vector<2x256xf32>
    %144 = arith.addf %126, %143 : vector<2x256xf32>
    %c241_i32 = arith.constant 241 : i32
    %145 = tpu.dynamic_rotate %31 by %c241_i32 dim 1 : vector<2x256xf32>, i32 -> vector<2x256xf32>
    %146 = arith.mulf %145, %25 : vector<2x256xf32>
    %c6_13 = arith.constant 6 : index
    %147 = memref.load %arg1[%c6_13] : memref<144xf32, #tpu.memory_space<smem>>
    %148 = vector.broadcast %147 : f32 to vector<2x256xf32>
    %149 = arith.mulf %148, %146 : vector<2x256xf32>
    %150 = arith.addf %132, %149 : vector<2x256xf32>
    %c42 = arith.constant 42 : index
    %151 = memref.load %arg1[%c42] : memref<144xf32, #tpu.memory_space<smem>>
    %152 = vector.broadcast %151 : f32 to vector<2x256xf32>
    %153 = arith.mulf %152, %146 : vector<2x256xf32>
    %154 = arith.addf %136, %153 : vector<2x256xf32>
    %c78 = arith.constant 78 : index
    %155 = memref.load %arg1[%c78] : memref<144xf32, #tpu.memory_space<smem>>
    %156 = vector.broadcast %155 : f32 to vector<2x256xf32>
    %157 = arith.mulf %156, %146 : vector<2x256xf32>
    %158 = arith.addf %140, %157 : vector<2x256xf32>
    %c114 = arith.constant 114 : index
    %159 = memref.load %arg1[%c114] : memref<144xf32, #tpu.memory_space<smem>>
    %160 = vector.broadcast %159 : f32 to vector<2x256xf32>
    %161 = arith.mulf %160, %146 : vector<2x256xf32>
    %162 = arith.addf %144, %161 : vector<2x256xf32>
    %c240_i32_14 = arith.constant 240 : i32
    %163 = tpu.dynamic_rotate %31 by %c240_i32_14 dim 1 : vector<2x256xf32>, i32 -> vector<2x256xf32>
    %164 = arith.mulf %163, %27 : vector<2x256xf32>
    %c7 = arith.constant 7 : index
    %165 = memref.load %arg1[%c7] : memref<144xf32, #tpu.memory_space<smem>>
    %166 = vector.broadcast %165 : f32 to vector<2x256xf32>
    %167 = arith.mulf %166, %164 : vector<2x256xf32>
    %168 = arith.addf %150, %167 : vector<2x256xf32>
    %c43 = arith.constant 43 : index
    %169 = memref.load %arg1[%c43] : memref<144xf32, #tpu.memory_space<smem>>
    %170 = vector.broadcast %169 : f32 to vector<2x256xf32>
    %171 = arith.mulf %170, %164 : vector<2x256xf32>
    %172 = arith.addf %154, %171 : vector<2x256xf32>
    %c79 = arith.constant 79 : index
    %173 = memref.load %arg1[%c79] : memref<144xf32, #tpu.memory_space<smem>>
    %174 = vector.broadcast %173 : f32 to vector<2x256xf32>
    %175 = arith.mulf %174, %164 : vector<2x256xf32>
    %176 = arith.addf %158, %175 : vector<2x256xf32>
    %c115 = arith.constant 115 : index
    %177 = memref.load %arg1[%c115] : memref<144xf32, #tpu.memory_space<smem>>
    %178 = vector.broadcast %177 : f32 to vector<2x256xf32>
    %179 = arith.mulf %178, %164 : vector<2x256xf32>
    %180 = arith.addf %162, %179 : vector<2x256xf32>
    %c239_i32 = arith.constant 239 : i32
    %181 = tpu.dynamic_rotate %31 by %c239_i32 dim 1 : vector<2x256xf32>, i32 -> vector<2x256xf32>
    %182 = arith.mulf %181, %30 : vector<2x256xf32>
    %c8 = arith.constant 8 : index
    %183 = memref.load %arg1[%c8] : memref<144xf32, #tpu.memory_space<smem>>
    %184 = vector.broadcast %183 : f32 to vector<2x256xf32>
    %185 = arith.mulf %184, %182 : vector<2x256xf32>
    %186 = arith.addf %168, %185 : vector<2x256xf32>
    %c44 = arith.constant 44 : index
    %187 = memref.load %arg1[%c44] : memref<144xf32, #tpu.memory_space<smem>>
    %188 = vector.broadcast %187 : f32 to vector<2x256xf32>
    %189 = arith.mulf %188, %182 : vector<2x256xf32>
    %190 = arith.addf %172, %189 : vector<2x256xf32>
    %c80 = arith.constant 80 : index
    %191 = memref.load %arg1[%c80] : memref<144xf32, #tpu.memory_space<smem>>
    %192 = vector.broadcast %191 : f32 to vector<2x256xf32>
    %193 = arith.mulf %192, %182 : vector<2x256xf32>
    %194 = arith.addf %176, %193 : vector<2x256xf32>
    %c116 = arith.constant 116 : index
    %195 = memref.load %arg1[%c116] : memref<144xf32, #tpu.memory_space<smem>>
    %196 = vector.broadcast %195 : f32 to vector<2x256xf32>
    %197 = arith.mulf %196, %182 : vector<2x256xf32>
    %198 = arith.addf %180, %197 : vector<2x256xf32>
    %c17_i32_15 = arith.constant 17 : i32
    %199 = tpu.dynamic_rotate %32 by %c17_i32_15 dim 1 : vector<2x256xf32>, i32 -> vector<2x256xf32>
    %200 = arith.mulf %199, %13 : vector<2x256xf32>
    %c9 = arith.constant 9 : index
    %201 = memref.load %arg1[%c9] : memref<144xf32, #tpu.memory_space<smem>>
    %202 = vector.broadcast %201 : f32 to vector<2x256xf32>
    %203 = arith.mulf %202, %200 : vector<2x256xf32>
    %204 = arith.addf %186, %203 : vector<2x256xf32>
    %c45 = arith.constant 45 : index
    %205 = memref.load %arg1[%c45] : memref<144xf32, #tpu.memory_space<smem>>
    %206 = vector.broadcast %205 : f32 to vector<2x256xf32>
    %207 = arith.mulf %206, %200 : vector<2x256xf32>
    %208 = arith.addf %190, %207 : vector<2x256xf32>
    %c81 = arith.constant 81 : index
    %209 = memref.load %arg1[%c81] : memref<144xf32, #tpu.memory_space<smem>>
    %210 = vector.broadcast %209 : f32 to vector<2x256xf32>
    %211 = arith.mulf %210, %200 : vector<2x256xf32>
    %212 = arith.addf %194, %211 : vector<2x256xf32>
    %c117 = arith.constant 117 : index
    %213 = memref.load %arg1[%c117] : memref<144xf32, #tpu.memory_space<smem>>
    %214 = vector.broadcast %213 : f32 to vector<2x256xf32>
    %215 = arith.mulf %214, %200 : vector<2x256xf32>
    %216 = arith.addf %198, %215 : vector<2x256xf32>
    %c16_i32_16 = arith.constant 16 : i32
    %217 = tpu.dynamic_rotate %32 by %c16_i32_16 dim 1 : vector<2x256xf32>, i32 -> vector<2x256xf32>
    %218 = arith.mulf %217, %15 : vector<2x256xf32>
    %c10 = arith.constant 10 : index
    %219 = memref.load %arg1[%c10] : memref<144xf32, #tpu.memory_space<smem>>
    %220 = vector.broadcast %219 : f32 to vector<2x256xf32>
    %221 = arith.mulf %220, %218 : vector<2x256xf32>
    %222 = arith.addf %204, %221 : vector<2x256xf32>
    %c46 = arith.constant 46 : index
    %223 = memref.load %arg1[%c46] : memref<144xf32, #tpu.memory_space<smem>>
    %224 = vector.broadcast %223 : f32 to vector<2x256xf32>
    %225 = arith.mulf %224, %218 : vector<2x256xf32>
    %226 = arith.addf %208, %225 : vector<2x256xf32>
    %c82 = arith.constant 82 : index
    %227 = memref.load %arg1[%c82] : memref<144xf32, #tpu.memory_space<smem>>
    %228 = vector.broadcast %227 : f32 to vector<2x256xf32>
    %229 = arith.mulf %228, %218 : vector<2x256xf32>
    %230 = arith.addf %212, %229 : vector<2x256xf32>
    %c118 = arith.constant 118 : index
    %231 = memref.load %arg1[%c118] : memref<144xf32, #tpu.memory_space<smem>>
    %232 = vector.broadcast %231 : f32 to vector<2x256xf32>
    %233 = arith.mulf %232, %218 : vector<2x256xf32>
    %234 = arith.addf %216, %233 : vector<2x256xf32>
    %c15_i32_17 = arith.constant 15 : i32
    %235 = tpu.dynamic_rotate %32 by %c15_i32_17 dim 1 : vector<2x256xf32>, i32 -> vector<2x256xf32>
    %236 = arith.mulf %235, %18 : vector<2x256xf32>
    %c11 = arith.constant 11 : index
    %237 = memref.load %arg1[%c11] : memref<144xf32, #tpu.memory_space<smem>>
    %238 = vector.broadcast %237 : f32 to vector<2x256xf32>
    %239 = arith.mulf %238, %236 : vector<2x256xf32>
    %240 = arith.addf %222, %239 : vector<2x256xf32>
    %c47 = arith.constant 47 : index
    %241 = memref.load %arg1[%c47] : memref<144xf32, #tpu.memory_space<smem>>
    %242 = vector.broadcast %241 : f32 to vector<2x256xf32>
    %243 = arith.mulf %242, %236 : vector<2x256xf32>
    %244 = arith.addf %226, %243 : vector<2x256xf32>
    %c83 = arith.constant 83 : index
    %245 = memref.load %arg1[%c83] : memref<144xf32, #tpu.memory_space<smem>>
    %246 = vector.broadcast %245 : f32 to vector<2x256xf32>
    %247 = arith.mulf %246, %236 : vector<2x256xf32>
    %248 = arith.addf %230, %247 : vector<2x256xf32>
    %c119 = arith.constant 119 : index
    %249 = memref.load %arg1[%c119] : memref<144xf32, #tpu.memory_space<smem>>
    %250 = vector.broadcast %249 : f32 to vector<2x256xf32>
    %251 = arith.mulf %250, %236 : vector<2x256xf32>
    %252 = arith.addf %234, %251 : vector<2x256xf32>
    %c1_i32_18 = arith.constant 1 : i32
    %253 = tpu.dynamic_rotate %32 by %c1_i32_18 dim 1 : vector<2x256xf32>, i32 -> vector<2x256xf32>
    %254 = arith.mulf %253, %20 : vector<2x256xf32>
    %c12 = arith.constant 12 : index
    %255 = memref.load %arg1[%c12] : memref<144xf32, #tpu.memory_space<smem>>
    %256 = vector.broadcast %255 : f32 to vector<2x256xf32>
    %257 = arith.mulf %256, %254 : vector<2x256xf32>
    %258 = arith.addf %240, %257 : vector<2x256xf32>
    %c48 = arith.constant 48 : index
    %259 = memref.load %arg1[%c48] : memref<144xf32, #tpu.memory_space<smem>>
    %260 = vector.broadcast %259 : f32 to vector<2x256xf32>
    %261 = arith.mulf %260, %254 : vector<2x256xf32>
    %262 = arith.addf %244, %261 : vector<2x256xf32>
    %c84 = arith.constant 84 : index
    %263 = memref.load %arg1[%c84] : memref<144xf32, #tpu.memory_space<smem>>
    %264 = vector.broadcast %263 : f32 to vector<2x256xf32>
    %265 = arith.mulf %264, %254 : vector<2x256xf32>
    %266 = arith.addf %248, %265 : vector<2x256xf32>
    %c120 = arith.constant 120 : index
    %267 = memref.load %arg1[%c120] : memref<144xf32, #tpu.memory_space<smem>>
    %268 = vector.broadcast %267 : f32 to vector<2x256xf32>
    %269 = arith.mulf %268, %254 : vector<2x256xf32>
    %270 = arith.addf %252, %269 : vector<2x256xf32>
    %c13 = arith.constant 13 : index
    %271 = memref.load %arg1[%c13] : memref<144xf32, #tpu.memory_space<smem>>
    %272 = vector.broadcast %271 : f32 to vector<2x256xf32>
    %273 = arith.mulf %272, %32 : vector<2x256xf32>
    %274 = arith.addf %258, %273 : vector<2x256xf32>
    %c49 = arith.constant 49 : index
    %275 = memref.load %arg1[%c49] : memref<144xf32, #tpu.memory_space<smem>>
    %276 = vector.broadcast %275 : f32 to vector<2x256xf32>
    %277 = arith.mulf %276, %32 : vector<2x256xf32>
    %278 = arith.addf %262, %277 : vector<2x256xf32>
    %c85 = arith.constant 85 : index
    %279 = memref.load %arg1[%c85] : memref<144xf32, #tpu.memory_space<smem>>
    %280 = vector.broadcast %279 : f32 to vector<2x256xf32>
    %281 = arith.mulf %280, %32 : vector<2x256xf32>
    %282 = arith.addf %266, %281 : vector<2x256xf32>
    %c121 = arith.constant 121 : index
    %283 = memref.load %arg1[%c121] : memref<144xf32, #tpu.memory_space<smem>>
    %284 = vector.broadcast %283 : f32 to vector<2x256xf32>
    %285 = arith.mulf %284, %32 : vector<2x256xf32>
    %286 = arith.addf %270, %285 : vector<2x256xf32>
    %c255_i32_19 = arith.constant 255 : i32
    %287 = tpu.dynamic_rotate %32 by %c255_i32_19 dim 1 : vector<2x256xf32>, i32 -> vector<2x256xf32>
    %288 = arith.mulf %287, %22 : vector<2x256xf32>
    %c14 = arith.constant 14 : index
    %289 = memref.load %arg1[%c14] : memref<144xf32, #tpu.memory_space<smem>>
    %290 = vector.broadcast %289 : f32 to vector<2x256xf32>
    %291 = arith.mulf %290, %288 : vector<2x256xf32>
    %292 = arith.addf %274, %291 : vector<2x256xf32>
    %c50 = arith.constant 50 : index
    %293 = memref.load %arg1[%c50] : memref<144xf32, #tpu.memory_space<smem>>
    %294 = vector.broadcast %293 : f32 to vector<2x256xf32>
    %295 = arith.mulf %294, %288 : vector<2x256xf32>
    %296 = arith.addf %278, %295 : vector<2x256xf32>
    %c86 = arith.constant 86 : index
    %297 = memref.load %arg1[%c86] : memref<144xf32, #tpu.memory_space<smem>>
    %298 = vector.broadcast %297 : f32 to vector<2x256xf32>
    %299 = arith.mulf %298, %288 : vector<2x256xf32>
    %300 = arith.addf %282, %299 : vector<2x256xf32>
    %c122 = arith.constant 122 : index
    %301 = memref.load %arg1[%c122] : memref<144xf32, #tpu.memory_space<smem>>
    %302 = vector.broadcast %301 : f32 to vector<2x256xf32>
    %303 = arith.mulf %302, %288 : vector<2x256xf32>
    %304 = arith.addf %286, %303 : vector<2x256xf32>
    %c241_i32_20 = arith.constant 241 : i32
    %305 = tpu.dynamic_rotate %32 by %c241_i32_20 dim 1 : vector<2x256xf32>, i32 -> vector<2x256xf32>
    %306 = arith.mulf %305, %25 : vector<2x256xf32>
    %c15 = arith.constant 15 : index
    %307 = memref.load %arg1[%c15] : memref<144xf32, #tpu.memory_space<smem>>
    %308 = vector.broadcast %307 : f32 to vector<2x256xf32>
    %309 = arith.mulf %308, %306 : vector<2x256xf32>
    %310 = arith.addf %292, %309 : vector<2x256xf32>
    %c51 = arith.constant 51 : index
    %311 = memref.load %arg1[%c51] : memref<144xf32, #tpu.memory_space<smem>>
    %312 = vector.broadcast %311 : f32 to vector<2x256xf32>
    %313 = arith.mulf %312, %306 : vector<2x256xf32>
    %314 = arith.addf %296, %313 : vector<2x256xf32>
    %c87 = arith.constant 87 : index
    %315 = memref.load %arg1[%c87] : memref<144xf32, #tpu.memory_space<smem>>
    %316 = vector.broadcast %315 : f32 to vector<2x256xf32>
    %317 = arith.mulf %316, %306 : vector<2x256xf32>
    %318 = arith.addf %300, %317 : vector<2x256xf32>
    %c123 = arith.constant 123 : index
    %319 = memref.load %arg1[%c123] : memref<144xf32, #tpu.memory_space<smem>>
    %320 = vector.broadcast %319 : f32 to vector<2x256xf32>
    %321 = arith.mulf %320, %306 : vector<2x256xf32>
    %322 = arith.addf %304, %321 : vector<2x256xf32>
    %c240_i32_21 = arith.constant 240 : i32
    %323 = tpu.dynamic_rotate %32 by %c240_i32_21 dim 1 : vector<2x256xf32>, i32 -> vector<2x256xf32>
    %324 = arith.mulf %323, %27 : vector<2x256xf32>
    %c16 = arith.constant 16 : index
    %325 = memref.load %arg1[%c16] : memref<144xf32, #tpu.memory_space<smem>>
    %326 = vector.broadcast %325 : f32 to vector<2x256xf32>
    %327 = arith.mulf %326, %324 : vector<2x256xf32>
    %328 = arith.addf %310, %327 : vector<2x256xf32>
    %c52 = arith.constant 52 : index
    %329 = memref.load %arg1[%c52] : memref<144xf32, #tpu.memory_space<smem>>
    %330 = vector.broadcast %329 : f32 to vector<2x256xf32>
    %331 = arith.mulf %330, %324 : vector<2x256xf32>
    %332 = arith.addf %314, %331 : vector<2x256xf32>
    %c88 = arith.constant 88 : index
    %333 = memref.load %arg1[%c88] : memref<144xf32, #tpu.memory_space<smem>>
    %334 = vector.broadcast %333 : f32 to vector<2x256xf32>
    %335 = arith.mulf %334, %324 : vector<2x256xf32>
    %336 = arith.addf %318, %335 : vector<2x256xf32>
    %c124 = arith.constant 124 : index
    %337 = memref.load %arg1[%c124] : memref<144xf32, #tpu.memory_space<smem>>
    %338 = vector.broadcast %337 : f32 to vector<2x256xf32>
    %339 = arith.mulf %338, %324 : vector<2x256xf32>
    %340 = arith.addf %322, %339 : vector<2x256xf32>
    %c239_i32_22 = arith.constant 239 : i32
    %341 = tpu.dynamic_rotate %32 by %c239_i32_22 dim 1 : vector<2x256xf32>, i32 -> vector<2x256xf32>
    %342 = arith.mulf %341, %30 : vector<2x256xf32>
    %c17 = arith.constant 17 : index
    %343 = memref.load %arg1[%c17] : memref<144xf32, #tpu.memory_space<smem>>
    %344 = vector.broadcast %343 : f32 to vector<2x256xf32>
    %345 = arith.mulf %344, %342 : vector<2x256xf32>
    %346 = arith.addf %328, %345 : vector<2x256xf32>
    %c53 = arith.constant 53 : index
    %347 = memref.load %arg1[%c53] : memref<144xf32, #tpu.memory_space<smem>>
    %348 = vector.broadcast %347 : f32 to vector<2x256xf32>
    %349 = arith.mulf %348, %342 : vector<2x256xf32>
    %350 = arith.addf %332, %349 : vector<2x256xf32>
    %c89 = arith.constant 89 : index
    %351 = memref.load %arg1[%c89] : memref<144xf32, #tpu.memory_space<smem>>
    %352 = vector.broadcast %351 : f32 to vector<2x256xf32>
    %353 = arith.mulf %352, %342 : vector<2x256xf32>
    %354 = arith.addf %336, %353 : vector<2x256xf32>
    %c125 = arith.constant 125 : index
    %355 = memref.load %arg1[%c125] : memref<144xf32, #tpu.memory_space<smem>>
    %356 = vector.broadcast %355 : f32 to vector<2x256xf32>
    %357 = arith.mulf %356, %342 : vector<2x256xf32>
    %358 = arith.addf %340, %357 : vector<2x256xf32>
    %c17_i32_23 = arith.constant 17 : i32
    %359 = tpu.dynamic_rotate %33 by %c17_i32_23 dim 1 : vector<2x256xf32>, i32 -> vector<2x256xf32>
    %360 = arith.mulf %359, %13 : vector<2x256xf32>
    %c18 = arith.constant 18 : index
    %361 = memref.load %arg1[%c18] : memref<144xf32, #tpu.memory_space<smem>>
    %362 = vector.broadcast %361 : f32 to vector<2x256xf32>
    %363 = arith.mulf %362, %360 : vector<2x256xf32>
    %364 = arith.addf %346, %363 : vector<2x256xf32>
    %c54 = arith.constant 54 : index
    %365 = memref.load %arg1[%c54] : memref<144xf32, #tpu.memory_space<smem>>
    %366 = vector.broadcast %365 : f32 to vector<2x256xf32>
    %367 = arith.mulf %366, %360 : vector<2x256xf32>
    %368 = arith.addf %350, %367 : vector<2x256xf32>
    %c90 = arith.constant 90 : index
    %369 = memref.load %arg1[%c90] : memref<144xf32, #tpu.memory_space<smem>>
    %370 = vector.broadcast %369 : f32 to vector<2x256xf32>
    %371 = arith.mulf %370, %360 : vector<2x256xf32>
    %372 = arith.addf %354, %371 : vector<2x256xf32>
    %c126 = arith.constant 126 : index
    %373 = memref.load %arg1[%c126] : memref<144xf32, #tpu.memory_space<smem>>
    %374 = vector.broadcast %373 : f32 to vector<2x256xf32>
    %375 = arith.mulf %374, %360 : vector<2x256xf32>
    %376 = arith.addf %358, %375 : vector<2x256xf32>
    %c16_i32_24 = arith.constant 16 : i32
    %377 = tpu.dynamic_rotate %33 by %c16_i32_24 dim 1 : vector<2x256xf32>, i32 -> vector<2x256xf32>
    %378 = arith.mulf %377, %15 : vector<2x256xf32>
    %c19 = arith.constant 19 : index
    %379 = memref.load %arg1[%c19] : memref<144xf32, #tpu.memory_space<smem>>
    %380 = vector.broadcast %379 : f32 to vector<2x256xf32>
    %381 = arith.mulf %380, %378 : vector<2x256xf32>
    %382 = arith.addf %364, %381 : vector<2x256xf32>
    %c55 = arith.constant 55 : index
    %383 = memref.load %arg1[%c55] : memref<144xf32, #tpu.memory_space<smem>>
    %384 = vector.broadcast %383 : f32 to vector<2x256xf32>
    %385 = arith.mulf %384, %378 : vector<2x256xf32>
    %386 = arith.addf %368, %385 : vector<2x256xf32>
    %c91 = arith.constant 91 : index
    %387 = memref.load %arg1[%c91] : memref<144xf32, #tpu.memory_space<smem>>
    %388 = vector.broadcast %387 : f32 to vector<2x256xf32>
    %389 = arith.mulf %388, %378 : vector<2x256xf32>
    %390 = arith.addf %372, %389 : vector<2x256xf32>
    %c127 = arith.constant 127 : index
    %391 = memref.load %arg1[%c127] : memref<144xf32, #tpu.memory_space<smem>>
    %392 = vector.broadcast %391 : f32 to vector<2x256xf32>
    %393 = arith.mulf %392, %378 : vector<2x256xf32>
    %394 = arith.addf %376, %393 : vector<2x256xf32>
    %c15_i32_25 = arith.constant 15 : i32
    %395 = tpu.dynamic_rotate %33 by %c15_i32_25 dim 1 : vector<2x256xf32>, i32 -> vector<2x256xf32>
    %396 = arith.mulf %395, %18 : vector<2x256xf32>
    %c20 = arith.constant 20 : index
    %397 = memref.load %arg1[%c20] : memref<144xf32, #tpu.memory_space<smem>>
    %398 = vector.broadcast %397 : f32 to vector<2x256xf32>
    %399 = arith.mulf %398, %396 : vector<2x256xf32>
    %400 = arith.addf %382, %399 : vector<2x256xf32>
    %c56 = arith.constant 56 : index
    %401 = memref.load %arg1[%c56] : memref<144xf32, #tpu.memory_space<smem>>
    %402 = vector.broadcast %401 : f32 to vector<2x256xf32>
    %403 = arith.mulf %402, %396 : vector<2x256xf32>
    %404 = arith.addf %386, %403 : vector<2x256xf32>
    %c92 = arith.constant 92 : index
    %405 = memref.load %arg1[%c92] : memref<144xf32, #tpu.memory_space<smem>>
    %406 = vector.broadcast %405 : f32 to vector<2x256xf32>
    %407 = arith.mulf %406, %396 : vector<2x256xf32>
    %408 = arith.addf %390, %407 : vector<2x256xf32>
    %c128 = arith.constant 128 : index
    %409 = memref.load %arg1[%c128] : memref<144xf32, #tpu.memory_space<smem>>
    %410 = vector.broadcast %409 : f32 to vector<2x256xf32>
    %411 = arith.mulf %410, %396 : vector<2x256xf32>
    %412 = arith.addf %394, %411 : vector<2x256xf32>
    %c1_i32_26 = arith.constant 1 : i32
    %413 = tpu.dynamic_rotate %33 by %c1_i32_26 dim 1 : vector<2x256xf32>, i32 -> vector<2x256xf32>
    %414 = arith.mulf %413, %20 : vector<2x256xf32>
    %c21 = arith.constant 21 : index
    %415 = memref.load %arg1[%c21] : memref<144xf32, #tpu.memory_space<smem>>
    %416 = vector.broadcast %415 : f32 to vector<2x256xf32>
    %417 = arith.mulf %416, %414 : vector<2x256xf32>
    %418 = arith.addf %400, %417 : vector<2x256xf32>
    %c57 = arith.constant 57 : index
    %419 = memref.load %arg1[%c57] : memref<144xf32, #tpu.memory_space<smem>>
    %420 = vector.broadcast %419 : f32 to vector<2x256xf32>
    %421 = arith.mulf %420, %414 : vector<2x256xf32>
    %422 = arith.addf %404, %421 : vector<2x256xf32>
    %c93 = arith.constant 93 : index
    %423 = memref.load %arg1[%c93] : memref<144xf32, #tpu.memory_space<smem>>
    %424 = vector.broadcast %423 : f32 to vector<2x256xf32>
    %425 = arith.mulf %424, %414 : vector<2x256xf32>
    %426 = arith.addf %408, %425 : vector<2x256xf32>
    %c129 = arith.constant 129 : index
    %427 = memref.load %arg1[%c129] : memref<144xf32, #tpu.memory_space<smem>>
    %428 = vector.broadcast %427 : f32 to vector<2x256xf32>
    %429 = arith.mulf %428, %414 : vector<2x256xf32>
    %430 = arith.addf %412, %429 : vector<2x256xf32>
    %c22 = arith.constant 22 : index
    %431 = memref.load %arg1[%c22] : memref<144xf32, #tpu.memory_space<smem>>
    %432 = vector.broadcast %431 : f32 to vector<2x256xf32>
    %433 = arith.mulf %432, %33 : vector<2x256xf32>
    %434 = arith.addf %418, %433 : vector<2x256xf32>
    %c58 = arith.constant 58 : index
    %435 = memref.load %arg1[%c58] : memref<144xf32, #tpu.memory_space<smem>>
    %436 = vector.broadcast %435 : f32 to vector<2x256xf32>
    %437 = arith.mulf %436, %33 : vector<2x256xf32>
    %438 = arith.addf %422, %437 : vector<2x256xf32>
    %c94 = arith.constant 94 : index
    %439 = memref.load %arg1[%c94] : memref<144xf32, #tpu.memory_space<smem>>
    %440 = vector.broadcast %439 : f32 to vector<2x256xf32>
    %441 = arith.mulf %440, %33 : vector<2x256xf32>
    %442 = arith.addf %426, %441 : vector<2x256xf32>
    %c130 = arith.constant 130 : index
    %443 = memref.load %arg1[%c130] : memref<144xf32, #tpu.memory_space<smem>>
    %444 = vector.broadcast %443 : f32 to vector<2x256xf32>
    %445 = arith.mulf %444, %33 : vector<2x256xf32>
    %446 = arith.addf %430, %445 : vector<2x256xf32>
    %c255_i32_27 = arith.constant 255 : i32
    %447 = tpu.dynamic_rotate %33 by %c255_i32_27 dim 1 : vector<2x256xf32>, i32 -> vector<2x256xf32>
    %448 = arith.mulf %447, %22 : vector<2x256xf32>
    %c23 = arith.constant 23 : index
    %449 = memref.load %arg1[%c23] : memref<144xf32, #tpu.memory_space<smem>>
    %450 = vector.broadcast %449 : f32 to vector<2x256xf32>
    %451 = arith.mulf %450, %448 : vector<2x256xf32>
    %452 = arith.addf %434, %451 : vector<2x256xf32>
    %c59 = arith.constant 59 : index
    %453 = memref.load %arg1[%c59] : memref<144xf32, #tpu.memory_space<smem>>
    %454 = vector.broadcast %453 : f32 to vector<2x256xf32>
    %455 = arith.mulf %454, %448 : vector<2x256xf32>
    %456 = arith.addf %438, %455 : vector<2x256xf32>
    %c95 = arith.constant 95 : index
    %457 = memref.load %arg1[%c95] : memref<144xf32, #tpu.memory_space<smem>>
    %458 = vector.broadcast %457 : f32 to vector<2x256xf32>
    %459 = arith.mulf %458, %448 : vector<2x256xf32>
    %460 = arith.addf %442, %459 : vector<2x256xf32>
    %c131 = arith.constant 131 : index
    %461 = memref.load %arg1[%c131] : memref<144xf32, #tpu.memory_space<smem>>
    %462 = vector.broadcast %461 : f32 to vector<2x256xf32>
    %463 = arith.mulf %462, %448 : vector<2x256xf32>
    %464 = arith.addf %446, %463 : vector<2x256xf32>
    %c241_i32_28 = arith.constant 241 : i32
    %465 = tpu.dynamic_rotate %33 by %c241_i32_28 dim 1 : vector<2x256xf32>, i32 -> vector<2x256xf32>
    %466 = arith.mulf %465, %25 : vector<2x256xf32>
    %c24 = arith.constant 24 : index
    %467 = memref.load %arg1[%c24] : memref<144xf32, #tpu.memory_space<smem>>
    %468 = vector.broadcast %467 : f32 to vector<2x256xf32>
    %469 = arith.mulf %468, %466 : vector<2x256xf32>
    %470 = arith.addf %452, %469 : vector<2x256xf32>
    %c60 = arith.constant 60 : index
    %471 = memref.load %arg1[%c60] : memref<144xf32, #tpu.memory_space<smem>>
    %472 = vector.broadcast %471 : f32 to vector<2x256xf32>
    %473 = arith.mulf %472, %466 : vector<2x256xf32>
    %474 = arith.addf %456, %473 : vector<2x256xf32>
    %c96 = arith.constant 96 : index
    %475 = memref.load %arg1[%c96] : memref<144xf32, #tpu.memory_space<smem>>
    %476 = vector.broadcast %475 : f32 to vector<2x256xf32>
    %477 = arith.mulf %476, %466 : vector<2x256xf32>
    %478 = arith.addf %460, %477 : vector<2x256xf32>
    %c132 = arith.constant 132 : index
    %479 = memref.load %arg1[%c132] : memref<144xf32, #tpu.memory_space<smem>>
    %480 = vector.broadcast %479 : f32 to vector<2x256xf32>
    %481 = arith.mulf %480, %466 : vector<2x256xf32>
    %482 = arith.addf %464, %481 : vector<2x256xf32>
    %c240_i32_29 = arith.constant 240 : i32
    %483 = tpu.dynamic_rotate %33 by %c240_i32_29 dim 1 : vector<2x256xf32>, i32 -> vector<2x256xf32>
    %484 = arith.mulf %483, %27 : vector<2x256xf32>
    %c25 = arith.constant 25 : index
    %485 = memref.load %arg1[%c25] : memref<144xf32, #tpu.memory_space<smem>>
    %486 = vector.broadcast %485 : f32 to vector<2x256xf32>
    %487 = arith.mulf %486, %484 : vector<2x256xf32>
    %488 = arith.addf %470, %487 : vector<2x256xf32>
    %c61 = arith.constant 61 : index
    %489 = memref.load %arg1[%c61] : memref<144xf32, #tpu.memory_space<smem>>
    %490 = vector.broadcast %489 : f32 to vector<2x256xf32>
    %491 = arith.mulf %490, %484 : vector<2x256xf32>
    %492 = arith.addf %474, %491 : vector<2x256xf32>
    %c97 = arith.constant 97 : index
    %493 = memref.load %arg1[%c97] : memref<144xf32, #tpu.memory_space<smem>>
    %494 = vector.broadcast %493 : f32 to vector<2x256xf32>
    %495 = arith.mulf %494, %484 : vector<2x256xf32>
    %496 = arith.addf %478, %495 : vector<2x256xf32>
    %c133 = arith.constant 133 : index
    %497 = memref.load %arg1[%c133] : memref<144xf32, #tpu.memory_space<smem>>
    %498 = vector.broadcast %497 : f32 to vector<2x256xf32>
    %499 = arith.mulf %498, %484 : vector<2x256xf32>
    %500 = arith.addf %482, %499 : vector<2x256xf32>
    %c239_i32_30 = arith.constant 239 : i32
    %501 = tpu.dynamic_rotate %33 by %c239_i32_30 dim 1 : vector<2x256xf32>, i32 -> vector<2x256xf32>
    %502 = arith.mulf %501, %30 : vector<2x256xf32>
    %c26 = arith.constant 26 : index
    %503 = memref.load %arg1[%c26] : memref<144xf32, #tpu.memory_space<smem>>
    %504 = vector.broadcast %503 : f32 to vector<2x256xf32>
    %505 = arith.mulf %504, %502 : vector<2x256xf32>
    %506 = arith.addf %488, %505 : vector<2x256xf32>
    %c62 = arith.constant 62 : index
    %507 = memref.load %arg1[%c62] : memref<144xf32, #tpu.memory_space<smem>>
    %508 = vector.broadcast %507 : f32 to vector<2x256xf32>
    %509 = arith.mulf %508, %502 : vector<2x256xf32>
    %510 = arith.addf %492, %509 : vector<2x256xf32>
    %c98 = arith.constant 98 : index
    %511 = memref.load %arg1[%c98] : memref<144xf32, #tpu.memory_space<smem>>
    %512 = vector.broadcast %511 : f32 to vector<2x256xf32>
    %513 = arith.mulf %512, %502 : vector<2x256xf32>
    %514 = arith.addf %496, %513 : vector<2x256xf32>
    %c134 = arith.constant 134 : index
    %515 = memref.load %arg1[%c134] : memref<144xf32, #tpu.memory_space<smem>>
    %516 = vector.broadcast %515 : f32 to vector<2x256xf32>
    %517 = arith.mulf %516, %502 : vector<2x256xf32>
    %518 = arith.addf %500, %517 : vector<2x256xf32>
    %c17_i32_31 = arith.constant 17 : i32
    %519 = tpu.dynamic_rotate %34 by %c17_i32_31 dim 1 : vector<2x256xf32>, i32 -> vector<2x256xf32>
    %520 = arith.mulf %519, %13 : vector<2x256xf32>
    %c27 = arith.constant 27 : index
    %521 = memref.load %arg1[%c27] : memref<144xf32, #tpu.memory_space<smem>>
    %522 = vector.broadcast %521 : f32 to vector<2x256xf32>
    %523 = arith.mulf %522, %520 : vector<2x256xf32>
    %524 = arith.addf %506, %523 : vector<2x256xf32>
    %c63 = arith.constant 63 : index
    %525 = memref.load %arg1[%c63] : memref<144xf32, #tpu.memory_space<smem>>
    %526 = vector.broadcast %525 : f32 to vector<2x256xf32>
    %527 = arith.mulf %526, %520 : vector<2x256xf32>
    %528 = arith.addf %510, %527 : vector<2x256xf32>
    %c99 = arith.constant 99 : index
    %529 = memref.load %arg1[%c99] : memref<144xf32, #tpu.memory_space<smem>>
    %530 = vector.broadcast %529 : f32 to vector<2x256xf32>
    %531 = arith.mulf %530, %520 : vector<2x256xf32>
    %532 = arith.addf %514, %531 : vector<2x256xf32>
    %c135 = arith.constant 135 : index
    %533 = memref.load %arg1[%c135] : memref<144xf32, #tpu.memory_space<smem>>
    %534 = vector.broadcast %533 : f32 to vector<2x256xf32>
    %535 = arith.mulf %534, %520 : vector<2x256xf32>
    %536 = arith.addf %518, %535 : vector<2x256xf32>
    %c16_i32_32 = arith.constant 16 : i32
    %537 = tpu.dynamic_rotate %34 by %c16_i32_32 dim 1 : vector<2x256xf32>, i32 -> vector<2x256xf32>
    %538 = arith.mulf %537, %15 : vector<2x256xf32>
    %c28 = arith.constant 28 : index
    %539 = memref.load %arg1[%c28] : memref<144xf32, #tpu.memory_space<smem>>
    %540 = vector.broadcast %539 : f32 to vector<2x256xf32>
    %541 = arith.mulf %540, %538 : vector<2x256xf32>
    %542 = arith.addf %524, %541 : vector<2x256xf32>
    %c64 = arith.constant 64 : index
    %543 = memref.load %arg1[%c64] : memref<144xf32, #tpu.memory_space<smem>>
    %544 = vector.broadcast %543 : f32 to vector<2x256xf32>
    %545 = arith.mulf %544, %538 : vector<2x256xf32>
    %546 = arith.addf %528, %545 : vector<2x256xf32>
    %c100 = arith.constant 100 : index
    %547 = memref.load %arg1[%c100] : memref<144xf32, #tpu.memory_space<smem>>
    %548 = vector.broadcast %547 : f32 to vector<2x256xf32>
    %549 = arith.mulf %548, %538 : vector<2x256xf32>
    %550 = arith.addf %532, %549 : vector<2x256xf32>
    %c136 = arith.constant 136 : index
    %551 = memref.load %arg1[%c136] : memref<144xf32, #tpu.memory_space<smem>>
    %552 = vector.broadcast %551 : f32 to vector<2x256xf32>
    %553 = arith.mulf %552, %538 : vector<2x256xf32>
    %554 = arith.addf %536, %553 : vector<2x256xf32>
    %c15_i32_33 = arith.constant 15 : i32
    %555 = tpu.dynamic_rotate %34 by %c15_i32_33 dim 1 : vector<2x256xf32>, i32 -> vector<2x256xf32>
    %556 = arith.mulf %555, %18 : vector<2x256xf32>
    %c29 = arith.constant 29 : index
    %557 = memref.load %arg1[%c29] : memref<144xf32, #tpu.memory_space<smem>>
    %558 = vector.broadcast %557 : f32 to vector<2x256xf32>
    %559 = arith.mulf %558, %556 : vector<2x256xf32>
    %560 = arith.addf %542, %559 : vector<2x256xf32>
    %c65 = arith.constant 65 : index
    %561 = memref.load %arg1[%c65] : memref<144xf32, #tpu.memory_space<smem>>
    %562 = vector.broadcast %561 : f32 to vector<2x256xf32>
    %563 = arith.mulf %562, %556 : vector<2x256xf32>
    %564 = arith.addf %546, %563 : vector<2x256xf32>
    %c101 = arith.constant 101 : index
    %565 = memref.load %arg1[%c101] : memref<144xf32, #tpu.memory_space<smem>>
    %566 = vector.broadcast %565 : f32 to vector<2x256xf32>
    %567 = arith.mulf %566, %556 : vector<2x256xf32>
    %568 = arith.addf %550, %567 : vector<2x256xf32>
    %c137 = arith.constant 137 : index
    %569 = memref.load %arg1[%c137] : memref<144xf32, #tpu.memory_space<smem>>
    %570 = vector.broadcast %569 : f32 to vector<2x256xf32>
    %571 = arith.mulf %570, %556 : vector<2x256xf32>
    %572 = arith.addf %554, %571 : vector<2x256xf32>
    %c1_i32_34 = arith.constant 1 : i32
    %573 = tpu.dynamic_rotate %34 by %c1_i32_34 dim 1 : vector<2x256xf32>, i32 -> vector<2x256xf32>
    %574 = arith.mulf %573, %20 : vector<2x256xf32>
    %c30 = arith.constant 30 : index
    %575 = memref.load %arg1[%c30] : memref<144xf32, #tpu.memory_space<smem>>
    %576 = vector.broadcast %575 : f32 to vector<2x256xf32>
    %577 = arith.mulf %576, %574 : vector<2x256xf32>
    %578 = arith.addf %560, %577 : vector<2x256xf32>
    %c66 = arith.constant 66 : index
    %579 = memref.load %arg1[%c66] : memref<144xf32, #tpu.memory_space<smem>>
    %580 = vector.broadcast %579 : f32 to vector<2x256xf32>
    %581 = arith.mulf %580, %574 : vector<2x256xf32>
    %582 = arith.addf %564, %581 : vector<2x256xf32>
    %c102 = arith.constant 102 : index
    %583 = memref.load %arg1[%c102] : memref<144xf32, #tpu.memory_space<smem>>
    %584 = vector.broadcast %583 : f32 to vector<2x256xf32>
    %585 = arith.mulf %584, %574 : vector<2x256xf32>
    %586 = arith.addf %568, %585 : vector<2x256xf32>
    %c138 = arith.constant 138 : index
    %587 = memref.load %arg1[%c138] : memref<144xf32, #tpu.memory_space<smem>>
    %588 = vector.broadcast %587 : f32 to vector<2x256xf32>
    %589 = arith.mulf %588, %574 : vector<2x256xf32>
    %590 = arith.addf %572, %589 : vector<2x256xf32>
    %c31 = arith.constant 31 : index
    %591 = memref.load %arg1[%c31] : memref<144xf32, #tpu.memory_space<smem>>
    %592 = vector.broadcast %591 : f32 to vector<2x256xf32>
    %593 = arith.mulf %592, %34 : vector<2x256xf32>
    %594 = arith.addf %578, %593 : vector<2x256xf32>
    %c67 = arith.constant 67 : index
    %595 = memref.load %arg1[%c67] : memref<144xf32, #tpu.memory_space<smem>>
    %596 = vector.broadcast %595 : f32 to vector<2x256xf32>
    %597 = arith.mulf %596, %34 : vector<2x256xf32>
    %598 = arith.addf %582, %597 : vector<2x256xf32>
    %c103 = arith.constant 103 : index
    %599 = memref.load %arg1[%c103] : memref<144xf32, #tpu.memory_space<smem>>
    %600 = vector.broadcast %599 : f32 to vector<2x256xf32>
    %601 = arith.mulf %600, %34 : vector<2x256xf32>
    %602 = arith.addf %586, %601 : vector<2x256xf32>
    %c139 = arith.constant 139 : index
    %603 = memref.load %arg1[%c139] : memref<144xf32, #tpu.memory_space<smem>>
    %604 = vector.broadcast %603 : f32 to vector<2x256xf32>
    %605 = arith.mulf %604, %34 : vector<2x256xf32>
    %606 = arith.addf %590, %605 : vector<2x256xf32>
    %c255_i32_35 = arith.constant 255 : i32
    %607 = tpu.dynamic_rotate %34 by %c255_i32_35 dim 1 : vector<2x256xf32>, i32 -> vector<2x256xf32>
    %608 = arith.mulf %607, %22 : vector<2x256xf32>
    %c32 = arith.constant 32 : index
    %609 = memref.load %arg1[%c32] : memref<144xf32, #tpu.memory_space<smem>>
    %610 = vector.broadcast %609 : f32 to vector<2x256xf32>
    %611 = arith.mulf %610, %608 : vector<2x256xf32>
    %612 = arith.addf %594, %611 : vector<2x256xf32>
    %c68 = arith.constant 68 : index
    %613 = memref.load %arg1[%c68] : memref<144xf32, #tpu.memory_space<smem>>
    %614 = vector.broadcast %613 : f32 to vector<2x256xf32>
    %615 = arith.mulf %614, %608 : vector<2x256xf32>
    %616 = arith.addf %598, %615 : vector<2x256xf32>
    %c104 = arith.constant 104 : index
    %617 = memref.load %arg1[%c104] : memref<144xf32, #tpu.memory_space<smem>>
    %618 = vector.broadcast %617 : f32 to vector<2x256xf32>
    %619 = arith.mulf %618, %608 : vector<2x256xf32>
    %620 = arith.addf %602, %619 : vector<2x256xf32>
    %c140 = arith.constant 140 : index
    %621 = memref.load %arg1[%c140] : memref<144xf32, #tpu.memory_space<smem>>
    %622 = vector.broadcast %621 : f32 to vector<2x256xf32>
    %623 = arith.mulf %622, %608 : vector<2x256xf32>
    %624 = arith.addf %606, %623 : vector<2x256xf32>
    %c241_i32_36 = arith.constant 241 : i32
    %625 = tpu.dynamic_rotate %34 by %c241_i32_36 dim 1 : vector<2x256xf32>, i32 -> vector<2x256xf32>
    %626 = arith.mulf %625, %25 : vector<2x256xf32>
    %c33 = arith.constant 33 : index
    %627 = memref.load %arg1[%c33] : memref<144xf32, #tpu.memory_space<smem>>
    %628 = vector.broadcast %627 : f32 to vector<2x256xf32>
    %629 = arith.mulf %628, %626 : vector<2x256xf32>
    %630 = arith.addf %612, %629 : vector<2x256xf32>
    %c69 = arith.constant 69 : index
    %631 = memref.load %arg1[%c69] : memref<144xf32, #tpu.memory_space<smem>>
    %632 = vector.broadcast %631 : f32 to vector<2x256xf32>
    %633 = arith.mulf %632, %626 : vector<2x256xf32>
    %634 = arith.addf %616, %633 : vector<2x256xf32>
    %c105 = arith.constant 105 : index
    %635 = memref.load %arg1[%c105] : memref<144xf32, #tpu.memory_space<smem>>
    %636 = vector.broadcast %635 : f32 to vector<2x256xf32>
    %637 = arith.mulf %636, %626 : vector<2x256xf32>
    %638 = arith.addf %620, %637 : vector<2x256xf32>
    %c141 = arith.constant 141 : index
    %639 = memref.load %arg1[%c141] : memref<144xf32, #tpu.memory_space<smem>>
    %640 = vector.broadcast %639 : f32 to vector<2x256xf32>
    %641 = arith.mulf %640, %626 : vector<2x256xf32>
    %642 = arith.addf %624, %641 : vector<2x256xf32>
    %c240_i32_37 = arith.constant 240 : i32
    %643 = tpu.dynamic_rotate %34 by %c240_i32_37 dim 1 : vector<2x256xf32>, i32 -> vector<2x256xf32>
    %644 = arith.mulf %643, %27 : vector<2x256xf32>
    %c34 = arith.constant 34 : index
    %645 = memref.load %arg1[%c34] : memref<144xf32, #tpu.memory_space<smem>>
    %646 = vector.broadcast %645 : f32 to vector<2x256xf32>
    %647 = arith.mulf %646, %644 : vector<2x256xf32>
    %648 = arith.addf %630, %647 : vector<2x256xf32>
    %c70 = arith.constant 70 : index
    %649 = memref.load %arg1[%c70] : memref<144xf32, #tpu.memory_space<smem>>
    %650 = vector.broadcast %649 : f32 to vector<2x256xf32>
    %651 = arith.mulf %650, %644 : vector<2x256xf32>
    %652 = arith.addf %634, %651 : vector<2x256xf32>
    %c106 = arith.constant 106 : index
    %653 = memref.load %arg1[%c106] : memref<144xf32, #tpu.memory_space<smem>>
    %654 = vector.broadcast %653 : f32 to vector<2x256xf32>
    %655 = arith.mulf %654, %644 : vector<2x256xf32>
    %656 = arith.addf %638, %655 : vector<2x256xf32>
    %c142 = arith.constant 142 : index
    %657 = memref.load %arg1[%c142] : memref<144xf32, #tpu.memory_space<smem>>
    %658 = vector.broadcast %657 : f32 to vector<2x256xf32>
    %659 = arith.mulf %658, %644 : vector<2x256xf32>
    %660 = arith.addf %642, %659 : vector<2x256xf32>
    %c239_i32_38 = arith.constant 239 : i32
    %661 = tpu.dynamic_rotate %34 by %c239_i32_38 dim 1 : vector<2x256xf32>, i32 -> vector<2x256xf32>
    %662 = arith.mulf %661, %30 : vector<2x256xf32>
    %c35 = arith.constant 35 : index
    %663 = memref.load %arg1[%c35] : memref<144xf32, #tpu.memory_space<smem>>
    %664 = vector.broadcast %663 : f32 to vector<2x256xf32>
    %665 = arith.mulf %664, %662 : vector<2x256xf32>
    %666 = arith.addf %648, %665 : vector<2x256xf32>
    %c71 = arith.constant 71 : index
    %667 = memref.load %arg1[%c71] : memref<144xf32, #tpu.memory_space<smem>>
    %668 = vector.broadcast %667 : f32 to vector<2x256xf32>
    %669 = arith.mulf %668, %662 : vector<2x256xf32>
    %670 = arith.addf %652, %669 : vector<2x256xf32>
    %c107 = arith.constant 107 : index
    %671 = memref.load %arg1[%c107] : memref<144xf32, #tpu.memory_space<smem>>
    %672 = vector.broadcast %671 : f32 to vector<2x256xf32>
    %673 = arith.mulf %672, %662 : vector<2x256xf32>
    %674 = arith.addf %656, %673 : vector<2x256xf32>
    %c143 = arith.constant 143 : index
    %675 = memref.load %arg1[%c143] : memref<144xf32, #tpu.memory_space<smem>>
    %676 = vector.broadcast %675 : f32 to vector<2x256xf32>
    %677 = arith.mulf %676, %662 : vector<2x256xf32>
    %678 = arith.addf %660, %677 : vector<2x256xf32>
    %cst_39 = arith.constant dense<0.000000e+00> : vector<2xf32>
    %679 = vector.multi_reduction <add>, %666, %cst_39 [1] : vector<2x256xf32> to vector<2xf32>
    %680 = vector.shape_cast %679 : vector<2xf32> to vector<2x1xf32>
    %cst_40 = arith.constant dense<0.000000e+00> : vector<1xf32>
    %681 = vector.multi_reduction <add>, %680, %cst_40 [0] : vector<2x1xf32> to vector<1xf32>
    %682 = vector.shape_cast %681 : vector<1xf32> to vector<1x1xf32>
    %683 = arith.mulf %666, %666 : vector<2x256xf32>
    %cst_41 = arith.constant dense<0.000000e+00> : vector<2xf32>
    %684 = vector.multi_reduction <add>, %683, %cst_41 [1] : vector<2x256xf32> to vector<2xf32>
    %685 = vector.shape_cast %684 : vector<2xf32> to vector<2x1xf32>
    %cst_42 = arith.constant dense<0.000000e+00> : vector<1xf32>
    %686 = vector.multi_reduction <add>, %685, %cst_42 [0] : vector<2x1xf32> to vector<1xf32>
    %687 = vector.shape_cast %686 : vector<1xf32> to vector<1x1xf32>
    %cst_43 = arith.constant 0.001953125 : f32
    %688 = vector.broadcast %cst_43 : f32 to vector<1x1xf32>
    %689 = arith.mulf %682, %688 : vector<1x1xf32>
    %cst_44 = arith.constant 0.001953125 : f32
    %690 = vector.broadcast %cst_44 : f32 to vector<1x1xf32>
    %691 = arith.mulf %687, %690 : vector<1x1xf32>
    %692 = arith.mulf %689, %689 : vector<1x1xf32>
    %693 = arith.subf %691, %692 : vector<1x1xf32>
    %c0_45 = arith.constant 0 : index
    %694 = memref.load %arg2[%c0_45] : memref<4xf32, #tpu.memory_space<smem>>
    %cst_46 = arith.constant 9.99999974E-6 : f32
    %695 = vector.broadcast %cst_46 : f32 to vector<1x1xf32>
    %696 = arith.addf %693, %695 : vector<1x1xf32>
    %697 = math.rsqrt %696 : vector<1x1xf32>
    %698 = vector.broadcast %694 : f32 to vector<1x1xf32>
    %699 = arith.mulf %698, %697 : vector<1x1xf32>
    %c0_47 = arith.constant 0 : index
    %700 = memref.load %arg3[%c0_47] : memref<4xf32, #tpu.memory_space<smem>>
    %701 = arith.mulf %689, %699 : vector<1x1xf32>
    %702 = vector.broadcast %700 : f32 to vector<1x1xf32>
    %703 = arith.subf %702, %701 : vector<1x1xf32>
    %704 = vector.broadcast %699 : vector<1x1xf32> to vector<2x256xf32>
    %705 = arith.mulf %666, %704 : vector<2x256xf32>
    %706 = vector.broadcast %703 : vector<1x1xf32> to vector<2x256xf32>
    %707 = arith.addf %705, %706 : vector<2x256xf32>
    %cst_48 = arith.constant 0.000000e+00 : f32
    %708 = vector.broadcast %cst_48 : f32 to vector<2x256xf32>
    %709 = arith.maximumf %707, %708 : vector<2x256xf32>
    %cst_49 = arith.constant dense<0.000000e+00> : vector<2xf32>
    %710 = vector.multi_reduction <add>, %670, %cst_49 [1] : vector<2x256xf32> to vector<2xf32>
    %711 = vector.shape_cast %710 : vector<2xf32> to vector<2x1xf32>
    %cst_50 = arith.constant dense<0.000000e+00> : vector<1xf32>
    %712 = vector.multi_reduction <add>, %711, %cst_50 [0] : vector<2x1xf32> to vector<1xf32>
    %713 = vector.shape_cast %712 : vector<1xf32> to vector<1x1xf32>
    %714 = arith.mulf %670, %670 : vector<2x256xf32>
    %cst_51 = arith.constant dense<0.000000e+00> : vector<2xf32>
    %715 = vector.multi_reduction <add>, %714, %cst_51 [1] : vector<2x256xf32> to vector<2xf32>
    %716 = vector.shape_cast %715 : vector<2xf32> to vector<2x1xf32>
    %cst_52 = arith.constant dense<0.000000e+00> : vector<1xf32>
    %717 = vector.multi_reduction <add>, %716, %cst_52 [0] : vector<2x1xf32> to vector<1xf32>
    %718 = vector.shape_cast %717 : vector<1xf32> to vector<1x1xf32>
    %cst_53 = arith.constant 0.001953125 : f32
    %719 = vector.broadcast %cst_53 : f32 to vector<1x1xf32>
    %720 = arith.mulf %713, %719 : vector<1x1xf32>
    %cst_54 = arith.constant 0.001953125 : f32
    %721 = vector.broadcast %cst_54 : f32 to vector<1x1xf32>
    %722 = arith.mulf %718, %721 : vector<1x1xf32>
    %723 = arith.mulf %720, %720 : vector<1x1xf32>
    %724 = arith.subf %722, %723 : vector<1x1xf32>
    %c1_55 = arith.constant 1 : index
    %725 = memref.load %arg2[%c1_55] : memref<4xf32, #tpu.memory_space<smem>>
    %cst_56 = arith.constant 9.99999974E-6 : f32
    %726 = vector.broadcast %cst_56 : f32 to vector<1x1xf32>
    %727 = arith.addf %724, %726 : vector<1x1xf32>
    %728 = math.rsqrt %727 : vector<1x1xf32>
    %729 = vector.broadcast %725 : f32 to vector<1x1xf32>
    %730 = arith.mulf %729, %728 : vector<1x1xf32>
    %c1_57 = arith.constant 1 : index
    %731 = memref.load %arg3[%c1_57] : memref<4xf32, #tpu.memory_space<smem>>
    %732 = arith.mulf %720, %730 : vector<1x1xf32>
    %733 = vector.broadcast %731 : f32 to vector<1x1xf32>
    %734 = arith.subf %733, %732 : vector<1x1xf32>
    %735 = vector.broadcast %730 : vector<1x1xf32> to vector<2x256xf32>
    %736 = arith.mulf %670, %735 : vector<2x256xf32>
    %737 = vector.broadcast %734 : vector<1x1xf32> to vector<2x256xf32>
    %738 = arith.addf %736, %737 : vector<2x256xf32>
    %cst_58 = arith.constant 0.000000e+00 : f32
    %739 = vector.broadcast %cst_58 : f32 to vector<2x256xf32>
    %740 = arith.maximumf %738, %739 : vector<2x256xf32>
    %cst_59 = arith.constant dense<0.000000e+00> : vector<2xf32>
    %741 = vector.multi_reduction <add>, %674, %cst_59 [1] : vector<2x256xf32> to vector<2xf32>
    %742 = vector.shape_cast %741 : vector<2xf32> to vector<2x1xf32>
    %cst_60 = arith.constant dense<0.000000e+00> : vector<1xf32>
    %743 = vector.multi_reduction <add>, %742, %cst_60 [0] : vector<2x1xf32> to vector<1xf32>
    %744 = vector.shape_cast %743 : vector<1xf32> to vector<1x1xf32>
    %745 = arith.mulf %674, %674 : vector<2x256xf32>
    %cst_61 = arith.constant dense<0.000000e+00> : vector<2xf32>
    %746 = vector.multi_reduction <add>, %745, %cst_61 [1] : vector<2x256xf32> to vector<2xf32>
    %747 = vector.shape_cast %746 : vector<2xf32> to vector<2x1xf32>
    %cst_62 = arith.constant dense<0.000000e+00> : vector<1xf32>
    %748 = vector.multi_reduction <add>, %747, %cst_62 [0] : vector<2x1xf32> to vector<1xf32>
    %749 = vector.shape_cast %748 : vector<1xf32> to vector<1x1xf32>
    %cst_63 = arith.constant 0.001953125 : f32
    %750 = vector.broadcast %cst_63 : f32 to vector<1x1xf32>
    %751 = arith.mulf %744, %750 : vector<1x1xf32>
    %cst_64 = arith.constant 0.001953125 : f32
    %752 = vector.broadcast %cst_64 : f32 to vector<1x1xf32>
    %753 = arith.mulf %749, %752 : vector<1x1xf32>
    %754 = arith.mulf %751, %751 : vector<1x1xf32>
    %755 = arith.subf %753, %754 : vector<1x1xf32>
    %c2_65 = arith.constant 2 : index
    %756 = memref.load %arg2[%c2_65] : memref<4xf32, #tpu.memory_space<smem>>
    %cst_66 = arith.constant 9.99999974E-6 : f32
    %757 = vector.broadcast %cst_66 : f32 to vector<1x1xf32>
    %758 = arith.addf %755, %757 : vector<1x1xf32>
    %759 = math.rsqrt %758 : vector<1x1xf32>
    %760 = vector.broadcast %756 : f32 to vector<1x1xf32>
    %761 = arith.mulf %760, %759 : vector<1x1xf32>
    %c2_67 = arith.constant 2 : index
    %762 = memref.load %arg3[%c2_67] : memref<4xf32, #tpu.memory_space<smem>>
    %763 = arith.mulf %751, %761 : vector<1x1xf32>
    %764 = vector.broadcast %762 : f32 to vector<1x1xf32>
    %765 = arith.subf %764, %763 : vector<1x1xf32>
    %766 = vector.broadcast %761 : vector<1x1xf32> to vector<2x256xf32>
    %767 = arith.mulf %674, %766 : vector<2x256xf32>
    %768 = vector.broadcast %765 : vector<1x1xf32> to vector<2x256xf32>
    %769 = arith.addf %767, %768 : vector<2x256xf32>
    %cst_68 = arith.constant 0.000000e+00 : f32
    %770 = vector.broadcast %cst_68 : f32 to vector<2x256xf32>
    %771 = arith.maximumf %769, %770 : vector<2x256xf32>
    %cst_69 = arith.constant dense<0.000000e+00> : vector<2xf32>
    %772 = vector.multi_reduction <add>, %678, %cst_69 [1] : vector<2x256xf32> to vector<2xf32>
    %773 = vector.shape_cast %772 : vector<2xf32> to vector<2x1xf32>
    %cst_70 = arith.constant dense<0.000000e+00> : vector<1xf32>
    %774 = vector.multi_reduction <add>, %773, %cst_70 [0] : vector<2x1xf32> to vector<1xf32>
    %775 = vector.shape_cast %774 : vector<1xf32> to vector<1x1xf32>
    %776 = arith.mulf %678, %678 : vector<2x256xf32>
    %cst_71 = arith.constant dense<0.000000e+00> : vector<2xf32>
    %777 = vector.multi_reduction <add>, %776, %cst_71 [1] : vector<2x256xf32> to vector<2xf32>
    %778 = vector.shape_cast %777 : vector<2xf32> to vector<2x1xf32>
    %cst_72 = arith.constant dense<0.000000e+00> : vector<1xf32>
    %779 = vector.multi_reduction <add>, %778, %cst_72 [0] : vector<2x1xf32> to vector<1xf32>
    %780 = vector.shape_cast %779 : vector<1xf32> to vector<1x1xf32>
    %cst_73 = arith.constant 0.001953125 : f32
    %781 = vector.broadcast %cst_73 : f32 to vector<1x1xf32>
    %782 = arith.mulf %775, %781 : vector<1x1xf32>
    %cst_74 = arith.constant 0.001953125 : f32
    %783 = vector.broadcast %cst_74 : f32 to vector<1x1xf32>
    %784 = arith.mulf %780, %783 : vector<1x1xf32>
    %785 = arith.mulf %782, %782 : vector<1x1xf32>
    %786 = arith.subf %784, %785 : vector<1x1xf32>
    %c3_75 = arith.constant 3 : index
    %787 = memref.load %arg2[%c3_75] : memref<4xf32, #tpu.memory_space<smem>>
    %cst_76 = arith.constant 9.99999974E-6 : f32
    %788 = vector.broadcast %cst_76 : f32 to vector<1x1xf32>
    %789 = arith.addf %786, %788 : vector<1x1xf32>
    %790 = math.rsqrt %789 : vector<1x1xf32>
    %791 = vector.broadcast %787 : f32 to vector<1x1xf32>
    %792 = arith.mulf %791, %790 : vector<1x1xf32>
    %c3_77 = arith.constant 3 : index
    %793 = memref.load %arg3[%c3_77] : memref<4xf32, #tpu.memory_space<smem>>
    %794 = arith.mulf %782, %792 : vector<1x1xf32>
    %795 = vector.broadcast %793 : f32 to vector<1x1xf32>
    %796 = arith.subf %795, %794 : vector<1x1xf32>
    %797 = vector.broadcast %792 : vector<1x1xf32> to vector<2x256xf32>
    %798 = arith.mulf %678, %797 : vector<2x256xf32>
    %799 = vector.broadcast %796 : vector<1x1xf32> to vector<2x256xf32>
    %800 = arith.addf %798, %799 : vector<2x256xf32>
    %cst_78 = arith.constant 0.000000e+00 : f32
    %801 = vector.broadcast %cst_78 : f32 to vector<2x256xf32>
    %802 = arith.maximumf %800, %801 : vector<2x256xf32>
    %cst_79 = arith.constant 0.000000e+00 : f32
    %803 = vector.broadcast %cst_79 : f32 to vector<2x256xf32>
    %cst_80 = arith.constant 0.000000e+00 : f32
    %804 = vector.broadcast %cst_80 : f32 to vector<2x256xf32>
    %cst_81 = arith.constant 0.000000e+00 : f32
    %805 = vector.broadcast %cst_81 : f32 to vector<2x256xf32>
    %cst_82 = arith.constant 0.000000e+00 : f32
    %806 = vector.broadcast %cst_82 : f32 to vector<2x256xf32>
    %c17_i32_83 = arith.constant 17 : i32
    %807 = tpu.dynamic_rotate %709 by %c17_i32_83 dim 1 : vector<2x256xf32>, i32 -> vector<2x256xf32>
    %808 = arith.mulf %807, %13 : vector<2x256xf32>
    %c0_84 = arith.constant 0 : index
    %809 = memref.load %arg4[%c0_84] : memref<144xf32, #tpu.memory_space<smem>>
    %810 = vector.broadcast %809 : f32 to vector<2x256xf32>
    %811 = arith.mulf %810, %808 : vector<2x256xf32>
    %812 = arith.addf %803, %811 : vector<2x256xf32>
    %c36_85 = arith.constant 36 : index
    %813 = memref.load %arg4[%c36_85] : memref<144xf32, #tpu.memory_space<smem>>
    %814 = vector.broadcast %813 : f32 to vector<2x256xf32>
    %815 = arith.mulf %814, %808 : vector<2x256xf32>
    %816 = arith.addf %804, %815 : vector<2x256xf32>
    %c72_86 = arith.constant 72 : index
    %817 = memref.load %arg4[%c72_86] : memref<144xf32, #tpu.memory_space<smem>>
    %818 = vector.broadcast %817 : f32 to vector<2x256xf32>
    %819 = arith.mulf %818, %808 : vector<2x256xf32>
    %820 = arith.addf %805, %819 : vector<2x256xf32>
    %c108_87 = arith.constant 108 : index
    %821 = memref.load %arg4[%c108_87] : memref<144xf32, #tpu.memory_space<smem>>
    %822 = vector.broadcast %821 : f32 to vector<2x256xf32>
    %823 = arith.mulf %822, %808 : vector<2x256xf32>
    %824 = arith.addf %806, %823 : vector<2x256xf32>
    %c16_i32_88 = arith.constant 16 : i32
    %825 = tpu.dynamic_rotate %709 by %c16_i32_88 dim 1 : vector<2x256xf32>, i32 -> vector<2x256xf32>
    %826 = arith.mulf %825, %15 : vector<2x256xf32>
    %c1_89 = arith.constant 1 : index
    %827 = memref.load %arg4[%c1_89] : memref<144xf32, #tpu.memory_space<smem>>
    %828 = vector.broadcast %827 : f32 to vector<2x256xf32>
    %829 = arith.mulf %828, %826 : vector<2x256xf32>
    %830 = arith.addf %812, %829 : vector<2x256xf32>
    %c37_90 = arith.constant 37 : index
    %831 = memref.load %arg4[%c37_90] : memref<144xf32, #tpu.memory_space<smem>>
    %832 = vector.broadcast %831 : f32 to vector<2x256xf32>
    %833 = arith.mulf %832, %826 : vector<2x256xf32>
    %834 = arith.addf %816, %833 : vector<2x256xf32>
    %c73_91 = arith.constant 73 : index
    %835 = memref.load %arg4[%c73_91] : memref<144xf32, #tpu.memory_space<smem>>
    %836 = vector.broadcast %835 : f32 to vector<2x256xf32>
    %837 = arith.mulf %836, %826 : vector<2x256xf32>
    %838 = arith.addf %820, %837 : vector<2x256xf32>
    %c109_92 = arith.constant 109 : index
    %839 = memref.load %arg4[%c109_92] : memref<144xf32, #tpu.memory_space<smem>>
    %840 = vector.broadcast %839 : f32 to vector<2x256xf32>
    %841 = arith.mulf %840, %826 : vector<2x256xf32>
    %842 = arith.addf %824, %841 : vector<2x256xf32>
    %c15_i32_93 = arith.constant 15 : i32
    %843 = tpu.dynamic_rotate %709 by %c15_i32_93 dim 1 : vector<2x256xf32>, i32 -> vector<2x256xf32>
    %844 = arith.mulf %843, %18 : vector<2x256xf32>
    %c2_94 = arith.constant 2 : index
    %845 = memref.load %arg4[%c2_94] : memref<144xf32, #tpu.memory_space<smem>>
    %846 = vector.broadcast %845 : f32 to vector<2x256xf32>
    %847 = arith.mulf %846, %844 : vector<2x256xf32>
    %848 = arith.addf %830, %847 : vector<2x256xf32>
    %c38_95 = arith.constant 38 : index
    %849 = memref.load %arg4[%c38_95] : memref<144xf32, #tpu.memory_space<smem>>
    %850 = vector.broadcast %849 : f32 to vector<2x256xf32>
    %851 = arith.mulf %850, %844 : vector<2x256xf32>
    %852 = arith.addf %834, %851 : vector<2x256xf32>
    %c74_96 = arith.constant 74 : index
    %853 = memref.load %arg4[%c74_96] : memref<144xf32, #tpu.memory_space<smem>>
    %854 = vector.broadcast %853 : f32 to vector<2x256xf32>
    %855 = arith.mulf %854, %844 : vector<2x256xf32>
    %856 = arith.addf %838, %855 : vector<2x256xf32>
    %c110_97 = arith.constant 110 : index
    %857 = memref.load %arg4[%c110_97] : memref<144xf32, #tpu.memory_space<smem>>
    %858 = vector.broadcast %857 : f32 to vector<2x256xf32>
    %859 = arith.mulf %858, %844 : vector<2x256xf32>
    %860 = arith.addf %842, %859 : vector<2x256xf32>
    %c1_i32_98 = arith.constant 1 : i32
    %861 = tpu.dynamic_rotate %709 by %c1_i32_98 dim 1 : vector<2x256xf32>, i32 -> vector<2x256xf32>
    %862 = arith.mulf %861, %20 : vector<2x256xf32>
    %c3_99 = arith.constant 3 : index
    %863 = memref.load %arg4[%c3_99] : memref<144xf32, #tpu.memory_space<smem>>
    %864 = vector.broadcast %863 : f32 to vector<2x256xf32>
    %865 = arith.mulf %864, %862 : vector<2x256xf32>
    %866 = arith.addf %848, %865 : vector<2x256xf32>
    %c39_100 = arith.constant 39 : index
    %867 = memref.load %arg4[%c39_100] : memref<144xf32, #tpu.memory_space<smem>>
    %868 = vector.broadcast %867 : f32 to vector<2x256xf32>
    %869 = arith.mulf %868, %862 : vector<2x256xf32>
    %870 = arith.addf %852, %869 : vector<2x256xf32>
    %c75_101 = arith.constant 75 : index
    %871 = memref.load %arg4[%c75_101] : memref<144xf32, #tpu.memory_space<smem>>
    %872 = vector.broadcast %871 : f32 to vector<2x256xf32>
    %873 = arith.mulf %872, %862 : vector<2x256xf32>
    %874 = arith.addf %856, %873 : vector<2x256xf32>
    %c111_102 = arith.constant 111 : index
    %875 = memref.load %arg4[%c111_102] : memref<144xf32, #tpu.memory_space<smem>>
    %876 = vector.broadcast %875 : f32 to vector<2x256xf32>
    %877 = arith.mulf %876, %862 : vector<2x256xf32>
    %878 = arith.addf %860, %877 : vector<2x256xf32>
    %c4_103 = arith.constant 4 : index
    %879 = memref.load %arg4[%c4_103] : memref<144xf32, #tpu.memory_space<smem>>
    %880 = vector.broadcast %879 : f32 to vector<2x256xf32>
    %881 = arith.mulf %880, %709 : vector<2x256xf32>
    %882 = arith.addf %866, %881 : vector<2x256xf32>
    %c40_104 = arith.constant 40 : index
    %883 = memref.load %arg4[%c40_104] : memref<144xf32, #tpu.memory_space<smem>>
    %884 = vector.broadcast %883 : f32 to vector<2x256xf32>
    %885 = arith.mulf %884, %709 : vector<2x256xf32>
    %886 = arith.addf %870, %885 : vector<2x256xf32>
    %c76_105 = arith.constant 76 : index
    %887 = memref.load %arg4[%c76_105] : memref<144xf32, #tpu.memory_space<smem>>
    %888 = vector.broadcast %887 : f32 to vector<2x256xf32>
    %889 = arith.mulf %888, %709 : vector<2x256xf32>
    %890 = arith.addf %874, %889 : vector<2x256xf32>
    %c112_106 = arith.constant 112 : index
    %891 = memref.load %arg4[%c112_106] : memref<144xf32, #tpu.memory_space<smem>>
    %892 = vector.broadcast %891 : f32 to vector<2x256xf32>
    %893 = arith.mulf %892, %709 : vector<2x256xf32>
    %894 = arith.addf %878, %893 : vector<2x256xf32>
    %c255_i32_107 = arith.constant 255 : i32
    %895 = tpu.dynamic_rotate %709 by %c255_i32_107 dim 1 : vector<2x256xf32>, i32 -> vector<2x256xf32>
    %896 = arith.mulf %895, %22 : vector<2x256xf32>
    %c5_108 = arith.constant 5 : index
    %897 = memref.load %arg4[%c5_108] : memref<144xf32, #tpu.memory_space<smem>>
    %898 = vector.broadcast %897 : f32 to vector<2x256xf32>
    %899 = arith.mulf %898, %896 : vector<2x256xf32>
    %900 = arith.addf %882, %899 : vector<2x256xf32>
    %c41_109 = arith.constant 41 : index
    %901 = memref.load %arg4[%c41_109] : memref<144xf32, #tpu.memory_space<smem>>
    %902 = vector.broadcast %901 : f32 to vector<2x256xf32>
    %903 = arith.mulf %902, %896 : vector<2x256xf32>
    %904 = arith.addf %886, %903 : vector<2x256xf32>
    %c77_110 = arith.constant 77 : index
    %905 = memref.load %arg4[%c77_110] : memref<144xf32, #tpu.memory_space<smem>>
    %906 = vector.broadcast %905 : f32 to vector<2x256xf32>
    %907 = arith.mulf %906, %896 : vector<2x256xf32>
    %908 = arith.addf %890, %907 : vector<2x256xf32>
    %c113_111 = arith.constant 113 : index
    %909 = memref.load %arg4[%c113_111] : memref<144xf32, #tpu.memory_space<smem>>
    %910 = vector.broadcast %909 : f32 to vector<2x256xf32>
    %911 = arith.mulf %910, %896 : vector<2x256xf32>
    %912 = arith.addf %894, %911 : vector<2x256xf32>
    %c241_i32_112 = arith.constant 241 : i32
    %913 = tpu.dynamic_rotate %709 by %c241_i32_112 dim 1 : vector<2x256xf32>, i32 -> vector<2x256xf32>
    %914 = arith.mulf %913, %25 : vector<2x256xf32>
    %c6_113 = arith.constant 6 : index
    %915 = memref.load %arg4[%c6_113] : memref<144xf32, #tpu.memory_space<smem>>
    %916 = vector.broadcast %915 : f32 to vector<2x256xf32>
    %917 = arith.mulf %916, %914 : vector<2x256xf32>
    %918 = arith.addf %900, %917 : vector<2x256xf32>
    %c42_114 = arith.constant 42 : index
    %919 = memref.load %arg4[%c42_114] : memref<144xf32, #tpu.memory_space<smem>>
    %920 = vector.broadcast %919 : f32 to vector<2x256xf32>
    %921 = arith.mulf %920, %914 : vector<2x256xf32>
    %922 = arith.addf %904, %921 : vector<2x256xf32>
    %c78_115 = arith.constant 78 : index
    %923 = memref.load %arg4[%c78_115] : memref<144xf32, #tpu.memory_space<smem>>
    %924 = vector.broadcast %923 : f32 to vector<2x256xf32>
    %925 = arith.mulf %924, %914 : vector<2x256xf32>
    %926 = arith.addf %908, %925 : vector<2x256xf32>
    %c114_116 = arith.constant 114 : index
    %927 = memref.load %arg4[%c114_116] : memref<144xf32, #tpu.memory_space<smem>>
    %928 = vector.broadcast %927 : f32 to vector<2x256xf32>
    %929 = arith.mulf %928, %914 : vector<2x256xf32>
    %930 = arith.addf %912, %929 : vector<2x256xf32>
    %c240_i32_117 = arith.constant 240 : i32
    %931 = tpu.dynamic_rotate %709 by %c240_i32_117 dim 1 : vector<2x256xf32>, i32 -> vector<2x256xf32>
    %932 = arith.mulf %931, %27 : vector<2x256xf32>
    %c7_118 = arith.constant 7 : index
    %933 = memref.load %arg4[%c7_118] : memref<144xf32, #tpu.memory_space<smem>>
    %934 = vector.broadcast %933 : f32 to vector<2x256xf32>
    %935 = arith.mulf %934, %932 : vector<2x256xf32>
    %936 = arith.addf %918, %935 : vector<2x256xf32>
    %c43_119 = arith.constant 43 : index
    %937 = memref.load %arg4[%c43_119] : memref<144xf32, #tpu.memory_space<smem>>
    %938 = vector.broadcast %937 : f32 to vector<2x256xf32>
    %939 = arith.mulf %938, %932 : vector<2x256xf32>
    %940 = arith.addf %922, %939 : vector<2x256xf32>
    %c79_120 = arith.constant 79 : index
    %941 = memref.load %arg4[%c79_120] : memref<144xf32, #tpu.memory_space<smem>>
    %942 = vector.broadcast %941 : f32 to vector<2x256xf32>
    %943 = arith.mulf %942, %932 : vector<2x256xf32>
    %944 = arith.addf %926, %943 : vector<2x256xf32>
    %c115_121 = arith.constant 115 : index
    %945 = memref.load %arg4[%c115_121] : memref<144xf32, #tpu.memory_space<smem>>
    %946 = vector.broadcast %945 : f32 to vector<2x256xf32>
    %947 = arith.mulf %946, %932 : vector<2x256xf32>
    %948 = arith.addf %930, %947 : vector<2x256xf32>
    %c239_i32_122 = arith.constant 239 : i32
    %949 = tpu.dynamic_rotate %709 by %c239_i32_122 dim 1 : vector<2x256xf32>, i32 -> vector<2x256xf32>
    %950 = arith.mulf %949, %30 : vector<2x256xf32>
    %c8_123 = arith.constant 8 : index
    %951 = memref.load %arg4[%c8_123] : memref<144xf32, #tpu.memory_space<smem>>
    %952 = vector.broadcast %951 : f32 to vector<2x256xf32>
    %953 = arith.mulf %952, %950 : vector<2x256xf32>
    %954 = arith.addf %936, %953 : vector<2x256xf32>
    %c44_124 = arith.constant 44 : index
    %955 = memref.load %arg4[%c44_124] : memref<144xf32, #tpu.memory_space<smem>>
    %956 = vector.broadcast %955 : f32 to vector<2x256xf32>
    %957 = arith.mulf %956, %950 : vector<2x256xf32>
    %958 = arith.addf %940, %957 : vector<2x256xf32>
    %c80_125 = arith.constant 80 : index
    %959 = memref.load %arg4[%c80_125] : memref<144xf32, #tpu.memory_space<smem>>
    %960 = vector.broadcast %959 : f32 to vector<2x256xf32>
    %961 = arith.mulf %960, %950 : vector<2x256xf32>
    %962 = arith.addf %944, %961 : vector<2x256xf32>
    %c116_126 = arith.constant 116 : index
    %963 = memref.load %arg4[%c116_126] : memref<144xf32, #tpu.memory_space<smem>>
    %964 = vector.broadcast %963 : f32 to vector<2x256xf32>
    %965 = arith.mulf %964, %950 : vector<2x256xf32>
    %966 = arith.addf %948, %965 : vector<2x256xf32>
    %c17_i32_127 = arith.constant 17 : i32
    %967 = tpu.dynamic_rotate %740 by %c17_i32_127 dim 1 : vector<2x256xf32>, i32 -> vector<2x256xf32>
    %968 = arith.mulf %967, %13 : vector<2x256xf32>
    %c9_128 = arith.constant 9 : index
    %969 = memref.load %arg4[%c9_128] : memref<144xf32, #tpu.memory_space<smem>>
    %970 = vector.broadcast %969 : f32 to vector<2x256xf32>
    %971 = arith.mulf %970, %968 : vector<2x256xf32>
    %972 = arith.addf %954, %971 : vector<2x256xf32>
    %c45_129 = arith.constant 45 : index
    %973 = memref.load %arg4[%c45_129] : memref<144xf32, #tpu.memory_space<smem>>
    %974 = vector.broadcast %973 : f32 to vector<2x256xf32>
    %975 = arith.mulf %974, %968 : vector<2x256xf32>
    %976 = arith.addf %958, %975 : vector<2x256xf32>
    %c81_130 = arith.constant 81 : index
    %977 = memref.load %arg4[%c81_130] : memref<144xf32, #tpu.memory_space<smem>>
    %978 = vector.broadcast %977 : f32 to vector<2x256xf32>
    %979 = arith.mulf %978, %968 : vector<2x256xf32>
    %980 = arith.addf %962, %979 : vector<2x256xf32>
    %c117_131 = arith.constant 117 : index
    %981 = memref.load %arg4[%c117_131] : memref<144xf32, #tpu.memory_space<smem>>
    %982 = vector.broadcast %981 : f32 to vector<2x256xf32>
    %983 = arith.mulf %982, %968 : vector<2x256xf32>
    %984 = arith.addf %966, %983 : vector<2x256xf32>
    %c16_i32_132 = arith.constant 16 : i32
    %985 = tpu.dynamic_rotate %740 by %c16_i32_132 dim 1 : vector<2x256xf32>, i32 -> vector<2x256xf32>
    %986 = arith.mulf %985, %15 : vector<2x256xf32>
    %c10_133 = arith.constant 10 : index
    %987 = memref.load %arg4[%c10_133] : memref<144xf32, #tpu.memory_space<smem>>
    %988 = vector.broadcast %987 : f32 to vector<2x256xf32>
    %989 = arith.mulf %988, %986 : vector<2x256xf32>
    %990 = arith.addf %972, %989 : vector<2x256xf32>
    %c46_134 = arith.constant 46 : index
    %991 = memref.load %arg4[%c46_134] : memref<144xf32, #tpu.memory_space<smem>>
    %992 = vector.broadcast %991 : f32 to vector<2x256xf32>
    %993 = arith.mulf %992, %986 : vector<2x256xf32>
    %994 = arith.addf %976, %993 : vector<2x256xf32>
    %c82_135 = arith.constant 82 : index
    %995 = memref.load %arg4[%c82_135] : memref<144xf32, #tpu.memory_space<smem>>
    %996 = vector.broadcast %995 : f32 to vector<2x256xf32>
    %997 = arith.mulf %996, %986 : vector<2x256xf32>
    %998 = arith.addf %980, %997 : vector<2x256xf32>
    %c118_136 = arith.constant 118 : index
    %999 = memref.load %arg4[%c118_136] : memref<144xf32, #tpu.memory_space<smem>>
    %1000 = vector.broadcast %999 : f32 to vector<2x256xf32>
    %1001 = arith.mulf %1000, %986 : vector<2x256xf32>
    %1002 = arith.addf %984, %1001 : vector<2x256xf32>
    %c15_i32_137 = arith.constant 15 : i32
    %1003 = tpu.dynamic_rotate %740 by %c15_i32_137 dim 1 : vector<2x256xf32>, i32 -> vector<2x256xf32>
    %1004 = arith.mulf %1003, %18 : vector<2x256xf32>
    %c11_138 = arith.constant 11 : index
    %1005 = memref.load %arg4[%c11_138] : memref<144xf32, #tpu.memory_space<smem>>
    %1006 = vector.broadcast %1005 : f32 to vector<2x256xf32>
    %1007 = arith.mulf %1006, %1004 : vector<2x256xf32>
    %1008 = arith.addf %990, %1007 : vector<2x256xf32>
    %c47_139 = arith.constant 47 : index
    %1009 = memref.load %arg4[%c47_139] : memref<144xf32, #tpu.memory_space<smem>>
    %1010 = vector.broadcast %1009 : f32 to vector<2x256xf32>
    %1011 = arith.mulf %1010, %1004 : vector<2x256xf32>
    %1012 = arith.addf %994, %1011 : vector<2x256xf32>
    %c83_140 = arith.constant 83 : index
    %1013 = memref.load %arg4[%c83_140] : memref<144xf32, #tpu.memory_space<smem>>
    %1014 = vector.broadcast %1013 : f32 to vector<2x256xf32>
    %1015 = arith.mulf %1014, %1004 : vector<2x256xf32>
    %1016 = arith.addf %998, %1015 : vector<2x256xf32>
    %c119_141 = arith.constant 119 : index
    %1017 = memref.load %arg4[%c119_141] : memref<144xf32, #tpu.memory_space<smem>>
    %1018 = vector.broadcast %1017 : f32 to vector<2x256xf32>
    %1019 = arith.mulf %1018, %1004 : vector<2x256xf32>
    %1020 = arith.addf %1002, %1019 : vector<2x256xf32>
    %c1_i32_142 = arith.constant 1 : i32
    %1021 = tpu.dynamic_rotate %740 by %c1_i32_142 dim 1 : vector<2x256xf32>, i32 -> vector<2x256xf32>
    %1022 = arith.mulf %1021, %20 : vector<2x256xf32>
    %c12_143 = arith.constant 12 : index
    %1023 = memref.load %arg4[%c12_143] : memref<144xf32, #tpu.memory_space<smem>>
    %1024 = vector.broadcast %1023 : f32 to vector<2x256xf32>
    %1025 = arith.mulf %1024, %1022 : vector<2x256xf32>
    %1026 = arith.addf %1008, %1025 : vector<2x256xf32>
    %c48_144 = arith.constant 48 : index
    %1027 = memref.load %arg4[%c48_144] : memref<144xf32, #tpu.memory_space<smem>>
    %1028 = vector.broadcast %1027 : f32 to vector<2x256xf32>
    %1029 = arith.mulf %1028, %1022 : vector<2x256xf32>
    %1030 = arith.addf %1012, %1029 : vector<2x256xf32>
    %c84_145 = arith.constant 84 : index
    %1031 = memref.load %arg4[%c84_145] : memref<144xf32, #tpu.memory_space<smem>>
    %1032 = vector.broadcast %1031 : f32 to vector<2x256xf32>
    %1033 = arith.mulf %1032, %1022 : vector<2x256xf32>
    %1034 = arith.addf %1016, %1033 : vector<2x256xf32>
    %c120_146 = arith.constant 120 : index
    %1035 = memref.load %arg4[%c120_146] : memref<144xf32, #tpu.memory_space<smem>>
    %1036 = vector.broadcast %1035 : f32 to vector<2x256xf32>
    %1037 = arith.mulf %1036, %1022 : vector<2x256xf32>
    %1038 = arith.addf %1020, %1037 : vector<2x256xf32>
    %c13_147 = arith.constant 13 : index
    %1039 = memref.load %arg4[%c13_147] : memref<144xf32, #tpu.memory_space<smem>>
    %1040 = vector.broadcast %1039 : f32 to vector<2x256xf32>
    %1041 = arith.mulf %1040, %740 : vector<2x256xf32>
    %1042 = arith.addf %1026, %1041 : vector<2x256xf32>
    %c49_148 = arith.constant 49 : index
    %1043 = memref.load %arg4[%c49_148] : memref<144xf32, #tpu.memory_space<smem>>
    %1044 = vector.broadcast %1043 : f32 to vector<2x256xf32>
    %1045 = arith.mulf %1044, %740 : vector<2x256xf32>
    %1046 = arith.addf %1030, %1045 : vector<2x256xf32>
    %c85_149 = arith.constant 85 : index
    %1047 = memref.load %arg4[%c85_149] : memref<144xf32, #tpu.memory_space<smem>>
    %1048 = vector.broadcast %1047 : f32 to vector<2x256xf32>
    %1049 = arith.mulf %1048, %740 : vector<2x256xf32>
    %1050 = arith.addf %1034, %1049 : vector<2x256xf32>
    %c121_150 = arith.constant 121 : index
    %1051 = memref.load %arg4[%c121_150] : memref<144xf32, #tpu.memory_space<smem>>
    %1052 = vector.broadcast %1051 : f32 to vector<2x256xf32>
    %1053 = arith.mulf %1052, %740 : vector<2x256xf32>
    %1054 = arith.addf %1038, %1053 : vector<2x256xf32>
    %c255_i32_151 = arith.constant 255 : i32
    %1055 = tpu.dynamic_rotate %740 by %c255_i32_151 dim 1 : vector<2x256xf32>, i32 -> vector<2x256xf32>
    %1056 = arith.mulf %1055, %22 : vector<2x256xf32>
    %c14_152 = arith.constant 14 : index
    %1057 = memref.load %arg4[%c14_152] : memref<144xf32, #tpu.memory_space<smem>>
    %1058 = vector.broadcast %1057 : f32 to vector<2x256xf32>
    %1059 = arith.mulf %1058, %1056 : vector<2x256xf32>
    %1060 = arith.addf %1042, %1059 : vector<2x256xf32>
    %c50_153 = arith.constant 50 : index
    %1061 = memref.load %arg4[%c50_153] : memref<144xf32, #tpu.memory_space<smem>>
    %1062 = vector.broadcast %1061 : f32 to vector<2x256xf32>
    %1063 = arith.mulf %1062, %1056 : vector<2x256xf32>
    %1064 = arith.addf %1046, %1063 : vector<2x256xf32>
    %c86_154 = arith.constant 86 : index
    %1065 = memref.load %arg4[%c86_154] : memref<144xf32, #tpu.memory_space<smem>>
    %1066 = vector.broadcast %1065 : f32 to vector<2x256xf32>
    %1067 = arith.mulf %1066, %1056 : vector<2x256xf32>
    %1068 = arith.addf %1050, %1067 : vector<2x256xf32>
    %c122_155 = arith.constant 122 : index
    %1069 = memref.load %arg4[%c122_155] : memref<144xf32, #tpu.memory_space<smem>>
    %1070 = vector.broadcast %1069 : f32 to vector<2x256xf32>
    %1071 = arith.mulf %1070, %1056 : vector<2x256xf32>
    %1072 = arith.addf %1054, %1071 : vector<2x256xf32>
    %c241_i32_156 = arith.constant 241 : i32
    %1073 = tpu.dynamic_rotate %740 by %c241_i32_156 dim 1 : vector<2x256xf32>, i32 -> vector<2x256xf32>
    %1074 = arith.mulf %1073, %25 : vector<2x256xf32>
    %c15_157 = arith.constant 15 : index
    %1075 = memref.load %arg4[%c15_157] : memref<144xf32, #tpu.memory_space<smem>>
    %1076 = vector.broadcast %1075 : f32 to vector<2x256xf32>
    %1077 = arith.mulf %1076, %1074 : vector<2x256xf32>
    %1078 = arith.addf %1060, %1077 : vector<2x256xf32>
    %c51_158 = arith.constant 51 : index
    %1079 = memref.load %arg4[%c51_158] : memref<144xf32, #tpu.memory_space<smem>>
    %1080 = vector.broadcast %1079 : f32 to vector<2x256xf32>
    %1081 = arith.mulf %1080, %1074 : vector<2x256xf32>
    %1082 = arith.addf %1064, %1081 : vector<2x256xf32>
    %c87_159 = arith.constant 87 : index
    %1083 = memref.load %arg4[%c87_159] : memref<144xf32, #tpu.memory_space<smem>>
    %1084 = vector.broadcast %1083 : f32 to vector<2x256xf32>
    %1085 = arith.mulf %1084, %1074 : vector<2x256xf32>
    %1086 = arith.addf %1068, %1085 : vector<2x256xf32>
    %c123_160 = arith.constant 123 : index
    %1087 = memref.load %arg4[%c123_160] : memref<144xf32, #tpu.memory_space<smem>>
    %1088 = vector.broadcast %1087 : f32 to vector<2x256xf32>
    %1089 = arith.mulf %1088, %1074 : vector<2x256xf32>
    %1090 = arith.addf %1072, %1089 : vector<2x256xf32>
    %c240_i32_161 = arith.constant 240 : i32
    %1091 = tpu.dynamic_rotate %740 by %c240_i32_161 dim 1 : vector<2x256xf32>, i32 -> vector<2x256xf32>
    %1092 = arith.mulf %1091, %27 : vector<2x256xf32>
    %c16_162 = arith.constant 16 : index
    %1093 = memref.load %arg4[%c16_162] : memref<144xf32, #tpu.memory_space<smem>>
    %1094 = vector.broadcast %1093 : f32 to vector<2x256xf32>
    %1095 = arith.mulf %1094, %1092 : vector<2x256xf32>
    %1096 = arith.addf %1078, %1095 : vector<2x256xf32>
    %c52_163 = arith.constant 52 : index
    %1097 = memref.load %arg4[%c52_163] : memref<144xf32, #tpu.memory_space<smem>>
    %1098 = vector.broadcast %1097 : f32 to vector<2x256xf32>
    %1099 = arith.mulf %1098, %1092 : vector<2x256xf32>
    %1100 = arith.addf %1082, %1099 : vector<2x256xf32>
    %c88_164 = arith.constant 88 : index
    %1101 = memref.load %arg4[%c88_164] : memref<144xf32, #tpu.memory_space<smem>>
    %1102 = vector.broadcast %1101 : f32 to vector<2x256xf32>
    %1103 = arith.mulf %1102, %1092 : vector<2x256xf32>
    %1104 = arith.addf %1086, %1103 : vector<2x256xf32>
    %c124_165 = arith.constant 124 : index
    %1105 = memref.load %arg4[%c124_165] : memref<144xf32, #tpu.memory_space<smem>>
    %1106 = vector.broadcast %1105 : f32 to vector<2x256xf32>
    %1107 = arith.mulf %1106, %1092 : vector<2x256xf32>
    %1108 = arith.addf %1090, %1107 : vector<2x256xf32>
    %c239_i32_166 = arith.constant 239 : i32
    %1109 = tpu.dynamic_rotate %740 by %c239_i32_166 dim 1 : vector<2x256xf32>, i32 -> vector<2x256xf32>
    %1110 = arith.mulf %1109, %30 : vector<2x256xf32>
    %c17_167 = arith.constant 17 : index
    %1111 = memref.load %arg4[%c17_167] : memref<144xf32, #tpu.memory_space<smem>>
    %1112 = vector.broadcast %1111 : f32 to vector<2x256xf32>
    %1113 = arith.mulf %1112, %1110 : vector<2x256xf32>
    %1114 = arith.addf %1096, %1113 : vector<2x256xf32>
    %c53_168 = arith.constant 53 : index
    %1115 = memref.load %arg4[%c53_168] : memref<144xf32, #tpu.memory_space<smem>>
    %1116 = vector.broadcast %1115 : f32 to vector<2x256xf32>
    %1117 = arith.mulf %1116, %1110 : vector<2x256xf32>
    %1118 = arith.addf %1100, %1117 : vector<2x256xf32>
    %c89_169 = arith.constant 89 : index
    %1119 = memref.load %arg4[%c89_169] : memref<144xf32, #tpu.memory_space<smem>>
    %1120 = vector.broadcast %1119 : f32 to vector<2x256xf32>
    %1121 = arith.mulf %1120, %1110 : vector<2x256xf32>
    %1122 = arith.addf %1104, %1121 : vector<2x256xf32>
    %c125_170 = arith.constant 125 : index
    %1123 = memref.load %arg4[%c125_170] : memref<144xf32, #tpu.memory_space<smem>>
    %1124 = vector.broadcast %1123 : f32 to vector<2x256xf32>
    %1125 = arith.mulf %1124, %1110 : vector<2x256xf32>
    %1126 = arith.addf %1108, %1125 : vector<2x256xf32>
    %c17_i32_171 = arith.constant 17 : i32
    %1127 = tpu.dynamic_rotate %771 by %c17_i32_171 dim 1 : vector<2x256xf32>, i32 -> vector<2x256xf32>
    %1128 = arith.mulf %1127, %13 : vector<2x256xf32>
    %c18_172 = arith.constant 18 : index
    %1129 = memref.load %arg4[%c18_172] : memref<144xf32, #tpu.memory_space<smem>>
    %1130 = vector.broadcast %1129 : f32 to vector<2x256xf32>
    %1131 = arith.mulf %1130, %1128 : vector<2x256xf32>
    %1132 = arith.addf %1114, %1131 : vector<2x256xf32>
    %c54_173 = arith.constant 54 : index
    %1133 = memref.load %arg4[%c54_173] : memref<144xf32, #tpu.memory_space<smem>>
    %1134 = vector.broadcast %1133 : f32 to vector<2x256xf32>
    %1135 = arith.mulf %1134, %1128 : vector<2x256xf32>
    %1136 = arith.addf %1118, %1135 : vector<2x256xf32>
    %c90_174 = arith.constant 90 : index
    %1137 = memref.load %arg4[%c90_174] : memref<144xf32, #tpu.memory_space<smem>>
    %1138 = vector.broadcast %1137 : f32 to vector<2x256xf32>
    %1139 = arith.mulf %1138, %1128 : vector<2x256xf32>
    %1140 = arith.addf %1122, %1139 : vector<2x256xf32>
    %c126_175 = arith.constant 126 : index
    %1141 = memref.load %arg4[%c126_175] : memref<144xf32, #tpu.memory_space<smem>>
    %1142 = vector.broadcast %1141 : f32 to vector<2x256xf32>
    %1143 = arith.mulf %1142, %1128 : vector<2x256xf32>
    %1144 = arith.addf %1126, %1143 : vector<2x256xf32>
    %c16_i32_176 = arith.constant 16 : i32
    %1145 = tpu.dynamic_rotate %771 by %c16_i32_176 dim 1 : vector<2x256xf32>, i32 -> vector<2x256xf32>
    %1146 = arith.mulf %1145, %15 : vector<2x256xf32>
    %c19_177 = arith.constant 19 : index
    %1147 = memref.load %arg4[%c19_177] : memref<144xf32, #tpu.memory_space<smem>>
    %1148 = vector.broadcast %1147 : f32 to vector<2x256xf32>
    %1149 = arith.mulf %1148, %1146 : vector<2x256xf32>
    %1150 = arith.addf %1132, %1149 : vector<2x256xf32>
    %c55_178 = arith.constant 55 : index
    %1151 = memref.load %arg4[%c55_178] : memref<144xf32, #tpu.memory_space<smem>>
    %1152 = vector.broadcast %1151 : f32 to vector<2x256xf32>
    %1153 = arith.mulf %1152, %1146 : vector<2x256xf32>
    %1154 = arith.addf %1136, %1153 : vector<2x256xf32>
    %c91_179 = arith.constant 91 : index
    %1155 = memref.load %arg4[%c91_179] : memref<144xf32, #tpu.memory_space<smem>>
    %1156 = vector.broadcast %1155 : f32 to vector<2x256xf32>
    %1157 = arith.mulf %1156, %1146 : vector<2x256xf32>
    %1158 = arith.addf %1140, %1157 : vector<2x256xf32>
    %c127_180 = arith.constant 127 : index
    %1159 = memref.load %arg4[%c127_180] : memref<144xf32, #tpu.memory_space<smem>>
    %1160 = vector.broadcast %1159 : f32 to vector<2x256xf32>
    %1161 = arith.mulf %1160, %1146 : vector<2x256xf32>
    %1162 = arith.addf %1144, %1161 : vector<2x256xf32>
    %c15_i32_181 = arith.constant 15 : i32
    %1163 = tpu.dynamic_rotate %771 by %c15_i32_181 dim 1 : vector<2x256xf32>, i32 -> vector<2x256xf32>
    %1164 = arith.mulf %1163, %18 : vector<2x256xf32>
    %c20_182 = arith.constant 20 : index
    %1165 = memref.load %arg4[%c20_182] : memref<144xf32, #tpu.memory_space<smem>>
    %1166 = vector.broadcast %1165 : f32 to vector<2x256xf32>
    %1167 = arith.mulf %1166, %1164 : vector<2x256xf32>
    %1168 = arith.addf %1150, %1167 : vector<2x256xf32>
    %c56_183 = arith.constant 56 : index
    %1169 = memref.load %arg4[%c56_183] : memref<144xf32, #tpu.memory_space<smem>>
    %1170 = vector.broadcast %1169 : f32 to vector<2x256xf32>
    %1171 = arith.mulf %1170, %1164 : vector<2x256xf32>
    %1172 = arith.addf %1154, %1171 : vector<2x256xf32>
    %c92_184 = arith.constant 92 : index
    %1173 = memref.load %arg4[%c92_184] : memref<144xf32, #tpu.memory_space<smem>>
    %1174 = vector.broadcast %1173 : f32 to vector<2x256xf32>
    %1175 = arith.mulf %1174, %1164 : vector<2x256xf32>
    %1176 = arith.addf %1158, %1175 : vector<2x256xf32>
    %c128_185 = arith.constant 128 : index
    %1177 = memref.load %arg4[%c128_185] : memref<144xf32, #tpu.memory_space<smem>>
    %1178 = vector.broadcast %1177 : f32 to vector<2x256xf32>
    %1179 = arith.mulf %1178, %1164 : vector<2x256xf32>
    %1180 = arith.addf %1162, %1179 : vector<2x256xf32>
    %c1_i32_186 = arith.constant 1 : i32
    %1181 = tpu.dynamic_rotate %771 by %c1_i32_186 dim 1 : vector<2x256xf32>, i32 -> vector<2x256xf32>
    %1182 = arith.mulf %1181, %20 : vector<2x256xf32>
    %c21_187 = arith.constant 21 : index
    %1183 = memref.load %arg4[%c21_187] : memref<144xf32, #tpu.memory_space<smem>>
    %1184 = vector.broadcast %1183 : f32 to vector<2x256xf32>
    %1185 = arith.mulf %1184, %1182 : vector<2x256xf32>
    %1186 = arith.addf %1168, %1185 : vector<2x256xf32>
    %c57_188 = arith.constant 57 : index
    %1187 = memref.load %arg4[%c57_188] : memref<144xf32, #tpu.memory_space<smem>>
    %1188 = vector.broadcast %1187 : f32 to vector<2x256xf32>
    %1189 = arith.mulf %1188, %1182 : vector<2x256xf32>
    %1190 = arith.addf %1172, %1189 : vector<2x256xf32>
    %c93_189 = arith.constant 93 : index
    %1191 = memref.load %arg4[%c93_189] : memref<144xf32, #tpu.memory_space<smem>>
    %1192 = vector.broadcast %1191 : f32 to vector<2x256xf32>
    %1193 = arith.mulf %1192, %1182 : vector<2x256xf32>
    %1194 = arith.addf %1176, %1193 : vector<2x256xf32>
    %c129_190 = arith.constant 129 : index
    %1195 = memref.load %arg4[%c129_190] : memref<144xf32, #tpu.memory_space<smem>>
    %1196 = vector.broadcast %1195 : f32 to vector<2x256xf32>
    %1197 = arith.mulf %1196, %1182 : vector<2x256xf32>
    %1198 = arith.addf %1180, %1197 : vector<2x256xf32>
    %c22_191 = arith.constant 22 : index
    %1199 = memref.load %arg4[%c22_191] : memref<144xf32, #tpu.memory_space<smem>>
    %1200 = vector.broadcast %1199 : f32 to vector<2x256xf32>
    %1201 = arith.mulf %1200, %771 : vector<2x256xf32>
    %1202 = arith.addf %1186, %1201 : vector<2x256xf32>
    %c58_192 = arith.constant 58 : index
    %1203 = memref.load %arg4[%c58_192] : memref<144xf32, #tpu.memory_space<smem>>
    %1204 = vector.broadcast %1203 : f32 to vector<2x256xf32>
    %1205 = arith.mulf %1204, %771 : vector<2x256xf32>
    %1206 = arith.addf %1190, %1205 : vector<2x256xf32>
    %c94_193 = arith.constant 94 : index
    %1207 = memref.load %arg4[%c94_193] : memref<144xf32, #tpu.memory_space<smem>>
    %1208 = vector.broadcast %1207 : f32 to vector<2x256xf32>
    %1209 = arith.mulf %1208, %771 : vector<2x256xf32>
    %1210 = arith.addf %1194, %1209 : vector<2x256xf32>
    %c130_194 = arith.constant 130 : index
    %1211 = memref.load %arg4[%c130_194] : memref<144xf32, #tpu.memory_space<smem>>
    %1212 = vector.broadcast %1211 : f32 to vector<2x256xf32>
    %1213 = arith.mulf %1212, %771 : vector<2x256xf32>
    %1214 = arith.addf %1198, %1213 : vector<2x256xf32>
    %c255_i32_195 = arith.constant 255 : i32
    %1215 = tpu.dynamic_rotate %771 by %c255_i32_195 dim 1 : vector<2x256xf32>, i32 -> vector<2x256xf32>
    %1216 = arith.mulf %1215, %22 : vector<2x256xf32>
    %c23_196 = arith.constant 23 : index
    %1217 = memref.load %arg4[%c23_196] : memref<144xf32, #tpu.memory_space<smem>>
    %1218 = vector.broadcast %1217 : f32 to vector<2x256xf32>
    %1219 = arith.mulf %1218, %1216 : vector<2x256xf32>
    %1220 = arith.addf %1202, %1219 : vector<2x256xf32>
    %c59_197 = arith.constant 59 : index
    %1221 = memref.load %arg4[%c59_197] : memref<144xf32, #tpu.memory_space<smem>>
    %1222 = vector.broadcast %1221 : f32 to vector<2x256xf32>
    %1223 = arith.mulf %1222, %1216 : vector<2x256xf32>
    %1224 = arith.addf %1206, %1223 : vector<2x256xf32>
    %c95_198 = arith.constant 95 : index
    %1225 = memref.load %arg4[%c95_198] : memref<144xf32, #tpu.memory_space<smem>>
    %1226 = vector.broadcast %1225 : f32 to vector<2x256xf32>
    %1227 = arith.mulf %1226, %1216 : vector<2x256xf32>
    %1228 = arith.addf %1210, %1227 : vector<2x256xf32>
    %c131_199 = arith.constant 131 : index
    %1229 = memref.load %arg4[%c131_199] : memref<144xf32, #tpu.memory_space<smem>>
    %1230 = vector.broadcast %1229 : f32 to vector<2x256xf32>
    %1231 = arith.mulf %1230, %1216 : vector<2x256xf32>
    %1232 = arith.addf %1214, %1231 : vector<2x256xf32>
    %c241_i32_200 = arith.constant 241 : i32
    %1233 = tpu.dynamic_rotate %771 by %c241_i32_200 dim 1 : vector<2x256xf32>, i32 -> vector<2x256xf32>
    %1234 = arith.mulf %1233, %25 : vector<2x256xf32>
    %c24_201 = arith.constant 24 : index
    %1235 = memref.load %arg4[%c24_201] : memref<144xf32, #tpu.memory_space<smem>>
    %1236 = vector.broadcast %1235 : f32 to vector<2x256xf32>
    %1237 = arith.mulf %1236, %1234 : vector<2x256xf32>
    %1238 = arith.addf %1220, %1237 : vector<2x256xf32>
    %c60_202 = arith.constant 60 : index
    %1239 = memref.load %arg4[%c60_202] : memref<144xf32, #tpu.memory_space<smem>>
    %1240 = vector.broadcast %1239 : f32 to vector<2x256xf32>
    %1241 = arith.mulf %1240, %1234 : vector<2x256xf32>
    %1242 = arith.addf %1224, %1241 : vector<2x256xf32>
    %c96_203 = arith.constant 96 : index
    %1243 = memref.load %arg4[%c96_203] : memref<144xf32, #tpu.memory_space<smem>>
    %1244 = vector.broadcast %1243 : f32 to vector<2x256xf32>
    %1245 = arith.mulf %1244, %1234 : vector<2x256xf32>
    %1246 = arith.addf %1228, %1245 : vector<2x256xf32>
    %c132_204 = arith.constant 132 : index
    %1247 = memref.load %arg4[%c132_204] : memref<144xf32, #tpu.memory_space<smem>>
    %1248 = vector.broadcast %1247 : f32 to vector<2x256xf32>
    %1249 = arith.mulf %1248, %1234 : vector<2x256xf32>
    %1250 = arith.addf %1232, %1249 : vector<2x256xf32>
    %c240_i32_205 = arith.constant 240 : i32
    %1251 = tpu.dynamic_rotate %771 by %c240_i32_205 dim 1 : vector<2x256xf32>, i32 -> vector<2x256xf32>
    %1252 = arith.mulf %1251, %27 : vector<2x256xf32>
    %c25_206 = arith.constant 25 : index
    %1253 = memref.load %arg4[%c25_206] : memref<144xf32, #tpu.memory_space<smem>>
    %1254 = vector.broadcast %1253 : f32 to vector<2x256xf32>
    %1255 = arith.mulf %1254, %1252 : vector<2x256xf32>
    %1256 = arith.addf %1238, %1255 : vector<2x256xf32>
    %c61_207 = arith.constant 61 : index
    %1257 = memref.load %arg4[%c61_207] : memref<144xf32, #tpu.memory_space<smem>>
    %1258 = vector.broadcast %1257 : f32 to vector<2x256xf32>
    %1259 = arith.mulf %1258, %1252 : vector<2x256xf32>
    %1260 = arith.addf %1242, %1259 : vector<2x256xf32>
    %c97_208 = arith.constant 97 : index
    %1261 = memref.load %arg4[%c97_208] : memref<144xf32, #tpu.memory_space<smem>>
    %1262 = vector.broadcast %1261 : f32 to vector<2x256xf32>
    %1263 = arith.mulf %1262, %1252 : vector<2x256xf32>
    %1264 = arith.addf %1246, %1263 : vector<2x256xf32>
    %c133_209 = arith.constant 133 : index
    %1265 = memref.load %arg4[%c133_209] : memref<144xf32, #tpu.memory_space<smem>>
    %1266 = vector.broadcast %1265 : f32 to vector<2x256xf32>
    %1267 = arith.mulf %1266, %1252 : vector<2x256xf32>
    %1268 = arith.addf %1250, %1267 : vector<2x256xf32>
    %c239_i32_210 = arith.constant 239 : i32
    %1269 = tpu.dynamic_rotate %771 by %c239_i32_210 dim 1 : vector<2x256xf32>, i32 -> vector<2x256xf32>
    %1270 = arith.mulf %1269, %30 : vector<2x256xf32>
    %c26_211 = arith.constant 26 : index
    %1271 = memref.load %arg4[%c26_211] : memref<144xf32, #tpu.memory_space<smem>>
    %1272 = vector.broadcast %1271 : f32 to vector<2x256xf32>
    %1273 = arith.mulf %1272, %1270 : vector<2x256xf32>
    %1274 = arith.addf %1256, %1273 : vector<2x256xf32>
    %c62_212 = arith.constant 62 : index
    %1275 = memref.load %arg4[%c62_212] : memref<144xf32, #tpu.memory_space<smem>>
    %1276 = vector.broadcast %1275 : f32 to vector<2x256xf32>
    %1277 = arith.mulf %1276, %1270 : vector<2x256xf32>
    %1278 = arith.addf %1260, %1277 : vector<2x256xf32>
    %c98_213 = arith.constant 98 : index
    %1279 = memref.load %arg4[%c98_213] : memref<144xf32, #tpu.memory_space<smem>>
    %1280 = vector.broadcast %1279 : f32 to vector<2x256xf32>
    %1281 = arith.mulf %1280, %1270 : vector<2x256xf32>
    %1282 = arith.addf %1264, %1281 : vector<2x256xf32>
    %c134_214 = arith.constant 134 : index
    %1283 = memref.load %arg4[%c134_214] : memref<144xf32, #tpu.memory_space<smem>>
    %1284 = vector.broadcast %1283 : f32 to vector<2x256xf32>
    %1285 = arith.mulf %1284, %1270 : vector<2x256xf32>
    %1286 = arith.addf %1268, %1285 : vector<2x256xf32>
    %c17_i32_215 = arith.constant 17 : i32
    %1287 = tpu.dynamic_rotate %802 by %c17_i32_215 dim 1 : vector<2x256xf32>, i32 -> vector<2x256xf32>
    %1288 = arith.mulf %1287, %13 : vector<2x256xf32>
    %c27_216 = arith.constant 27 : index
    %1289 = memref.load %arg4[%c27_216] : memref<144xf32, #tpu.memory_space<smem>>
    %1290 = vector.broadcast %1289 : f32 to vector<2x256xf32>
    %1291 = arith.mulf %1290, %1288 : vector<2x256xf32>
    %1292 = arith.addf %1274, %1291 : vector<2x256xf32>
    %c63_217 = arith.constant 63 : index
    %1293 = memref.load %arg4[%c63_217] : memref<144xf32, #tpu.memory_space<smem>>
    %1294 = vector.broadcast %1293 : f32 to vector<2x256xf32>
    %1295 = arith.mulf %1294, %1288 : vector<2x256xf32>
    %1296 = arith.addf %1278, %1295 : vector<2x256xf32>
    %c99_218 = arith.constant 99 : index
    %1297 = memref.load %arg4[%c99_218] : memref<144xf32, #tpu.memory_space<smem>>
    %1298 = vector.broadcast %1297 : f32 to vector<2x256xf32>
    %1299 = arith.mulf %1298, %1288 : vector<2x256xf32>
    %1300 = arith.addf %1282, %1299 : vector<2x256xf32>
    %c135_219 = arith.constant 135 : index
    %1301 = memref.load %arg4[%c135_219] : memref<144xf32, #tpu.memory_space<smem>>
    %1302 = vector.broadcast %1301 : f32 to vector<2x256xf32>
    %1303 = arith.mulf %1302, %1288 : vector<2x256xf32>
    %1304 = arith.addf %1286, %1303 : vector<2x256xf32>
    %c16_i32_220 = arith.constant 16 : i32
    %1305 = tpu.dynamic_rotate %802 by %c16_i32_220 dim 1 : vector<2x256xf32>, i32 -> vector<2x256xf32>
    %1306 = arith.mulf %1305, %15 : vector<2x256xf32>
    %c28_221 = arith.constant 28 : index
    %1307 = memref.load %arg4[%c28_221] : memref<144xf32, #tpu.memory_space<smem>>
    %1308 = vector.broadcast %1307 : f32 to vector<2x256xf32>
    %1309 = arith.mulf %1308, %1306 : vector<2x256xf32>
    %1310 = arith.addf %1292, %1309 : vector<2x256xf32>
    %c64_222 = arith.constant 64 : index
    %1311 = memref.load %arg4[%c64_222] : memref<144xf32, #tpu.memory_space<smem>>
    %1312 = vector.broadcast %1311 : f32 to vector<2x256xf32>
    %1313 = arith.mulf %1312, %1306 : vector<2x256xf32>
    %1314 = arith.addf %1296, %1313 : vector<2x256xf32>
    %c100_223 = arith.constant 100 : index
    %1315 = memref.load %arg4[%c100_223] : memref<144xf32, #tpu.memory_space<smem>>
    %1316 = vector.broadcast %1315 : f32 to vector<2x256xf32>
    %1317 = arith.mulf %1316, %1306 : vector<2x256xf32>
    %1318 = arith.addf %1300, %1317 : vector<2x256xf32>
    %c136_224 = arith.constant 136 : index
    %1319 = memref.load %arg4[%c136_224] : memref<144xf32, #tpu.memory_space<smem>>
    %1320 = vector.broadcast %1319 : f32 to vector<2x256xf32>
    %1321 = arith.mulf %1320, %1306 : vector<2x256xf32>
    %1322 = arith.addf %1304, %1321 : vector<2x256xf32>
    %c15_i32_225 = arith.constant 15 : i32
    %1323 = tpu.dynamic_rotate %802 by %c15_i32_225 dim 1 : vector<2x256xf32>, i32 -> vector<2x256xf32>
    %1324 = arith.mulf %1323, %18 : vector<2x256xf32>
    %c29_226 = arith.constant 29 : index
    %1325 = memref.load %arg4[%c29_226] : memref<144xf32, #tpu.memory_space<smem>>
    %1326 = vector.broadcast %1325 : f32 to vector<2x256xf32>
    %1327 = arith.mulf %1326, %1324 : vector<2x256xf32>
    %1328 = arith.addf %1310, %1327 : vector<2x256xf32>
    %c65_227 = arith.constant 65 : index
    %1329 = memref.load %arg4[%c65_227] : memref<144xf32, #tpu.memory_space<smem>>
    %1330 = vector.broadcast %1329 : f32 to vector<2x256xf32>
    %1331 = arith.mulf %1330, %1324 : vector<2x256xf32>
    %1332 = arith.addf %1314, %1331 : vector<2x256xf32>
    %c101_228 = arith.constant 101 : index
    %1333 = memref.load %arg4[%c101_228] : memref<144xf32, #tpu.memory_space<smem>>
    %1334 = vector.broadcast %1333 : f32 to vector<2x256xf32>
    %1335 = arith.mulf %1334, %1324 : vector<2x256xf32>
    %1336 = arith.addf %1318, %1335 : vector<2x256xf32>
    %c137_229 = arith.constant 137 : index
    %1337 = memref.load %arg4[%c137_229] : memref<144xf32, #tpu.memory_space<smem>>
    %1338 = vector.broadcast %1337 : f32 to vector<2x256xf32>
    %1339 = arith.mulf %1338, %1324 : vector<2x256xf32>
    %1340 = arith.addf %1322, %1339 : vector<2x256xf32>
    %c1_i32_230 = arith.constant 1 : i32
    %1341 = tpu.dynamic_rotate %802 by %c1_i32_230 dim 1 : vector<2x256xf32>, i32 -> vector<2x256xf32>
    %1342 = arith.mulf %1341, %20 : vector<2x256xf32>
    %c30_231 = arith.constant 30 : index
    %1343 = memref.load %arg4[%c30_231] : memref<144xf32, #tpu.memory_space<smem>>
    %1344 = vector.broadcast %1343 : f32 to vector<2x256xf32>
    %1345 = arith.mulf %1344, %1342 : vector<2x256xf32>
    %1346 = arith.addf %1328, %1345 : vector<2x256xf32>
    %c66_232 = arith.constant 66 : index
    %1347 = memref.load %arg4[%c66_232] : memref<144xf32, #tpu.memory_space<smem>>
    %1348 = vector.broadcast %1347 : f32 to vector<2x256xf32>
    %1349 = arith.mulf %1348, %1342 : vector<2x256xf32>
    %1350 = arith.addf %1332, %1349 : vector<2x256xf32>
    %c102_233 = arith.constant 102 : index
    %1351 = memref.load %arg4[%c102_233] : memref<144xf32, #tpu.memory_space<smem>>
    %1352 = vector.broadcast %1351 : f32 to vector<2x256xf32>
    %1353 = arith.mulf %1352, %1342 : vector<2x256xf32>
    %1354 = arith.addf %1336, %1353 : vector<2x256xf32>
    %c138_234 = arith.constant 138 : index
    %1355 = memref.load %arg4[%c138_234] : memref<144xf32, #tpu.memory_space<smem>>
    %1356 = vector.broadcast %1355 : f32 to vector<2x256xf32>
    %1357 = arith.mulf %1356, %1342 : vector<2x256xf32>
    %1358 = arith.addf %1340, %1357 : vector<2x256xf32>
    %c31_235 = arith.constant 31 : index
    %1359 = memref.load %arg4[%c31_235] : memref<144xf32, #tpu.memory_space<smem>>
    %1360 = vector.broadcast %1359 : f32 to vector<2x256xf32>
    %1361 = arith.mulf %1360, %802 : vector<2x256xf32>
    %1362 = arith.addf %1346, %1361 : vector<2x256xf32>
    %c67_236 = arith.constant 67 : index
    %1363 = memref.load %arg4[%c67_236] : memref<144xf32, #tpu.memory_space<smem>>
    %1364 = vector.broadcast %1363 : f32 to vector<2x256xf32>
    %1365 = arith.mulf %1364, %802 : vector<2x256xf32>
    %1366 = arith.addf %1350, %1365 : vector<2x256xf32>
    %c103_237 = arith.constant 103 : index
    %1367 = memref.load %arg4[%c103_237] : memref<144xf32, #tpu.memory_space<smem>>
    %1368 = vector.broadcast %1367 : f32 to vector<2x256xf32>
    %1369 = arith.mulf %1368, %802 : vector<2x256xf32>
    %1370 = arith.addf %1354, %1369 : vector<2x256xf32>
    %c139_238 = arith.constant 139 : index
    %1371 = memref.load %arg4[%c139_238] : memref<144xf32, #tpu.memory_space<smem>>
    %1372 = vector.broadcast %1371 : f32 to vector<2x256xf32>
    %1373 = arith.mulf %1372, %802 : vector<2x256xf32>
    %1374 = arith.addf %1358, %1373 : vector<2x256xf32>
    %c255_i32_239 = arith.constant 255 : i32
    %1375 = tpu.dynamic_rotate %802 by %c255_i32_239 dim 1 : vector<2x256xf32>, i32 -> vector<2x256xf32>
    %1376 = arith.mulf %1375, %22 : vector<2x256xf32>
    %c32_240 = arith.constant 32 : index
    %1377 = memref.load %arg4[%c32_240] : memref<144xf32, #tpu.memory_space<smem>>
    %1378 = vector.broadcast %1377 : f32 to vector<2x256xf32>
    %1379 = arith.mulf %1378, %1376 : vector<2x256xf32>
    %1380 = arith.addf %1362, %1379 : vector<2x256xf32>
    %c68_241 = arith.constant 68 : index
    %1381 = memref.load %arg4[%c68_241] : memref<144xf32, #tpu.memory_space<smem>>
    %1382 = vector.broadcast %1381 : f32 to vector<2x256xf32>
    %1383 = arith.mulf %1382, %1376 : vector<2x256xf32>
    %1384 = arith.addf %1366, %1383 : vector<2x256xf32>
    %c104_242 = arith.constant 104 : index
    %1385 = memref.load %arg4[%c104_242] : memref<144xf32, #tpu.memory_space<smem>>
    %1386 = vector.broadcast %1385 : f32 to vector<2x256xf32>
    %1387 = arith.mulf %1386, %1376 : vector<2x256xf32>
    %1388 = arith.addf %1370, %1387 : vector<2x256xf32>
    %c140_243 = arith.constant 140 : index
    %1389 = memref.load %arg4[%c140_243] : memref<144xf32, #tpu.memory_space<smem>>
    %1390 = vector.broadcast %1389 : f32 to vector<2x256xf32>
    %1391 = arith.mulf %1390, %1376 : vector<2x256xf32>
    %1392 = arith.addf %1374, %1391 : vector<2x256xf32>
    %c241_i32_244 = arith.constant 241 : i32
    %1393 = tpu.dynamic_rotate %802 by %c241_i32_244 dim 1 : vector<2x256xf32>, i32 -> vector<2x256xf32>
    %1394 = arith.mulf %1393, %25 : vector<2x256xf32>
    %c33_245 = arith.constant 33 : index
    %1395 = memref.load %arg4[%c33_245] : memref<144xf32, #tpu.memory_space<smem>>
    %1396 = vector.broadcast %1395 : f32 to vector<2x256xf32>
    %1397 = arith.mulf %1396, %1394 : vector<2x256xf32>
    %1398 = arith.addf %1380, %1397 : vector<2x256xf32>
    %c69_246 = arith.constant 69 : index
    %1399 = memref.load %arg4[%c69_246] : memref<144xf32, #tpu.memory_space<smem>>
    %1400 = vector.broadcast %1399 : f32 to vector<2x256xf32>
    %1401 = arith.mulf %1400, %1394 : vector<2x256xf32>
    %1402 = arith.addf %1384, %1401 : vector<2x256xf32>
    %c105_247 = arith.constant 105 : index
    %1403 = memref.load %arg4[%c105_247] : memref<144xf32, #tpu.memory_space<smem>>
    %1404 = vector.broadcast %1403 : f32 to vector<2x256xf32>
    %1405 = arith.mulf %1404, %1394 : vector<2x256xf32>
    %1406 = arith.addf %1388, %1405 : vector<2x256xf32>
    %c141_248 = arith.constant 141 : index
    %1407 = memref.load %arg4[%c141_248] : memref<144xf32, #tpu.memory_space<smem>>
    %1408 = vector.broadcast %1407 : f32 to vector<2x256xf32>
    %1409 = arith.mulf %1408, %1394 : vector<2x256xf32>
    %1410 = arith.addf %1392, %1409 : vector<2x256xf32>
    %c240_i32_249 = arith.constant 240 : i32
    %1411 = tpu.dynamic_rotate %802 by %c240_i32_249 dim 1 : vector<2x256xf32>, i32 -> vector<2x256xf32>
    %1412 = arith.mulf %1411, %27 : vector<2x256xf32>
    %c34_250 = arith.constant 34 : index
    %1413 = memref.load %arg4[%c34_250] : memref<144xf32, #tpu.memory_space<smem>>
    %1414 = vector.broadcast %1413 : f32 to vector<2x256xf32>
    %1415 = arith.mulf %1414, %1412 : vector<2x256xf32>
    %1416 = arith.addf %1398, %1415 : vector<2x256xf32>
    %c70_251 = arith.constant 70 : index
    %1417 = memref.load %arg4[%c70_251] : memref<144xf32, #tpu.memory_space<smem>>
    %1418 = vector.broadcast %1417 : f32 to vector<2x256xf32>
    %1419 = arith.mulf %1418, %1412 : vector<2x256xf32>
    %1420 = arith.addf %1402, %1419 : vector<2x256xf32>
    %c106_252 = arith.constant 106 : index
    %1421 = memref.load %arg4[%c106_252] : memref<144xf32, #tpu.memory_space<smem>>
    %1422 = vector.broadcast %1421 : f32 to vector<2x256xf32>
    %1423 = arith.mulf %1422, %1412 : vector<2x256xf32>
    %1424 = arith.addf %1406, %1423 : vector<2x256xf32>
    %c142_253 = arith.constant 142 : index
    %1425 = memref.load %arg4[%c142_253] : memref<144xf32, #tpu.memory_space<smem>>
    %1426 = vector.broadcast %1425 : f32 to vector<2x256xf32>
    %1427 = arith.mulf %1426, %1412 : vector<2x256xf32>
    %1428 = arith.addf %1410, %1427 : vector<2x256xf32>
    %c239_i32_254 = arith.constant 239 : i32
    %1429 = tpu.dynamic_rotate %802 by %c239_i32_254 dim 1 : vector<2x256xf32>, i32 -> vector<2x256xf32>
    %1430 = arith.mulf %1429, %30 : vector<2x256xf32>
    %c35_255 = arith.constant 35 : index
    %1431 = memref.load %arg4[%c35_255] : memref<144xf32, #tpu.memory_space<smem>>
    %1432 = vector.broadcast %1431 : f32 to vector<2x256xf32>
    %1433 = arith.mulf %1432, %1430 : vector<2x256xf32>
    %1434 = arith.addf %1416, %1433 : vector<2x256xf32>
    %c71_256 = arith.constant 71 : index
    %1435 = memref.load %arg4[%c71_256] : memref<144xf32, #tpu.memory_space<smem>>
    %1436 = vector.broadcast %1435 : f32 to vector<2x256xf32>
    %1437 = arith.mulf %1436, %1430 : vector<2x256xf32>
    %1438 = arith.addf %1420, %1437 : vector<2x256xf32>
    %c107_257 = arith.constant 107 : index
    %1439 = memref.load %arg4[%c107_257] : memref<144xf32, #tpu.memory_space<smem>>
    %1440 = vector.broadcast %1439 : f32 to vector<2x256xf32>
    %1441 = arith.mulf %1440, %1430 : vector<2x256xf32>
    %1442 = arith.addf %1424, %1441 : vector<2x256xf32>
    %c143_258 = arith.constant 143 : index
    %1443 = memref.load %arg4[%c143_258] : memref<144xf32, #tpu.memory_space<smem>>
    %1444 = vector.broadcast %1443 : f32 to vector<2x256xf32>
    %1445 = arith.mulf %1444, %1430 : vector<2x256xf32>
    %1446 = arith.addf %1428, %1445 : vector<2x256xf32>
    %cst_259 = arith.constant dense<0.000000e+00> : vector<2xf32>
    %1447 = vector.multi_reduction <add>, %1434, %cst_259 [1] : vector<2x256xf32> to vector<2xf32>
    %1448 = vector.shape_cast %1447 : vector<2xf32> to vector<2x1xf32>
    %cst_260 = arith.constant dense<0.000000e+00> : vector<1xf32>
    %1449 = vector.multi_reduction <add>, %1448, %cst_260 [0] : vector<2x1xf32> to vector<1xf32>
    %1450 = vector.shape_cast %1449 : vector<1xf32> to vector<1x1xf32>
    %1451 = arith.mulf %1434, %1434 : vector<2x256xf32>
    %cst_261 = arith.constant dense<0.000000e+00> : vector<2xf32>
    %1452 = vector.multi_reduction <add>, %1451, %cst_261 [1] : vector<2x256xf32> to vector<2xf32>
    %1453 = vector.shape_cast %1452 : vector<2xf32> to vector<2x1xf32>
    %cst_262 = arith.constant dense<0.000000e+00> : vector<1xf32>
    %1454 = vector.multi_reduction <add>, %1453, %cst_262 [0] : vector<2x1xf32> to vector<1xf32>
    %1455 = vector.shape_cast %1454 : vector<1xf32> to vector<1x1xf32>
    %cst_263 = arith.constant 0.001953125 : f32
    %1456 = vector.broadcast %cst_263 : f32 to vector<1x1xf32>
    %1457 = arith.mulf %1450, %1456 : vector<1x1xf32>
    %cst_264 = arith.constant 0.001953125 : f32
    %1458 = vector.broadcast %cst_264 : f32 to vector<1x1xf32>
    %1459 = arith.mulf %1455, %1458 : vector<1x1xf32>
    %1460 = arith.mulf %1457, %1457 : vector<1x1xf32>
    %1461 = arith.subf %1459, %1460 : vector<1x1xf32>
    %c0_265 = arith.constant 0 : index
    %1462 = memref.load %arg5[%c0_265] : memref<4xf32, #tpu.memory_space<smem>>
    %cst_266 = arith.constant 9.99999974E-6 : f32
    %1463 = vector.broadcast %cst_266 : f32 to vector<1x1xf32>
    %1464 = arith.addf %1461, %1463 : vector<1x1xf32>
    %1465 = math.rsqrt %1464 : vector<1x1xf32>
    %1466 = vector.broadcast %1462 : f32 to vector<1x1xf32>
    %1467 = arith.mulf %1466, %1465 : vector<1x1xf32>
    %c0_267 = arith.constant 0 : index
    %1468 = memref.load %arg6[%c0_267] : memref<4xf32, #tpu.memory_space<smem>>
    %1469 = arith.mulf %1457, %1467 : vector<1x1xf32>
    %1470 = vector.broadcast %1468 : f32 to vector<1x1xf32>
    %1471 = arith.subf %1470, %1469 : vector<1x1xf32>
    %1472 = vector.broadcast %1467 : vector<1x1xf32> to vector<2x256xf32>
    %1473 = arith.mulf %1434, %1472 : vector<2x256xf32>
    %1474 = vector.broadcast %1471 : vector<1x1xf32> to vector<2x256xf32>
    %1475 = arith.addf %1473, %1474 : vector<2x256xf32>
    %cst_268 = arith.constant dense<0.000000e+00> : vector<2xf32>
    %1476 = vector.multi_reduction <add>, %1438, %cst_268 [1] : vector<2x256xf32> to vector<2xf32>
    %1477 = vector.shape_cast %1476 : vector<2xf32> to vector<2x1xf32>
    %cst_269 = arith.constant dense<0.000000e+00> : vector<1xf32>
    %1478 = vector.multi_reduction <add>, %1477, %cst_269 [0] : vector<2x1xf32> to vector<1xf32>
    %1479 = vector.shape_cast %1478 : vector<1xf32> to vector<1x1xf32>
    %1480 = arith.mulf %1438, %1438 : vector<2x256xf32>
    %cst_270 = arith.constant dense<0.000000e+00> : vector<2xf32>
    %1481 = vector.multi_reduction <add>, %1480, %cst_270 [1] : vector<2x256xf32> to vector<2xf32>
    %1482 = vector.shape_cast %1481 : vector<2xf32> to vector<2x1xf32>
    %cst_271 = arith.constant dense<0.000000e+00> : vector<1xf32>
    %1483 = vector.multi_reduction <add>, %1482, %cst_271 [0] : vector<2x1xf32> to vector<1xf32>
    %1484 = vector.shape_cast %1483 : vector<1xf32> to vector<1x1xf32>
    %cst_272 = arith.constant 0.001953125 : f32
    %1485 = vector.broadcast %cst_272 : f32 to vector<1x1xf32>
    %1486 = arith.mulf %1479, %1485 : vector<1x1xf32>
    %cst_273 = arith.constant 0.001953125 : f32
    %1487 = vector.broadcast %cst_273 : f32 to vector<1x1xf32>
    %1488 = arith.mulf %1484, %1487 : vector<1x1xf32>
    %1489 = arith.mulf %1486, %1486 : vector<1x1xf32>
    %1490 = arith.subf %1488, %1489 : vector<1x1xf32>
    %c1_274 = arith.constant 1 : index
    %1491 = memref.load %arg5[%c1_274] : memref<4xf32, #tpu.memory_space<smem>>
    %cst_275 = arith.constant 9.99999974E-6 : f32
    %1492 = vector.broadcast %cst_275 : f32 to vector<1x1xf32>
    %1493 = arith.addf %1490, %1492 : vector<1x1xf32>
    %1494 = math.rsqrt %1493 : vector<1x1xf32>
    %1495 = vector.broadcast %1491 : f32 to vector<1x1xf32>
    %1496 = arith.mulf %1495, %1494 : vector<1x1xf32>
    %c1_276 = arith.constant 1 : index
    %1497 = memref.load %arg6[%c1_276] : memref<4xf32, #tpu.memory_space<smem>>
    %1498 = arith.mulf %1486, %1496 : vector<1x1xf32>
    %1499 = vector.broadcast %1497 : f32 to vector<1x1xf32>
    %1500 = arith.subf %1499, %1498 : vector<1x1xf32>
    %1501 = vector.broadcast %1496 : vector<1x1xf32> to vector<2x256xf32>
    %1502 = arith.mulf %1438, %1501 : vector<2x256xf32>
    %1503 = vector.broadcast %1500 : vector<1x1xf32> to vector<2x256xf32>
    %1504 = arith.addf %1502, %1503 : vector<2x256xf32>
    %cst_277 = arith.constant dense<0.000000e+00> : vector<2xf32>
    %1505 = vector.multi_reduction <add>, %1442, %cst_277 [1] : vector<2x256xf32> to vector<2xf32>
    %1506 = vector.shape_cast %1505 : vector<2xf32> to vector<2x1xf32>
    %cst_278 = arith.constant dense<0.000000e+00> : vector<1xf32>
    %1507 = vector.multi_reduction <add>, %1506, %cst_278 [0] : vector<2x1xf32> to vector<1xf32>
    %1508 = vector.shape_cast %1507 : vector<1xf32> to vector<1x1xf32>
    %1509 = arith.mulf %1442, %1442 : vector<2x256xf32>
    %cst_279 = arith.constant dense<0.000000e+00> : vector<2xf32>
    %1510 = vector.multi_reduction <add>, %1509, %cst_279 [1] : vector<2x256xf32> to vector<2xf32>
    %1511 = vector.shape_cast %1510 : vector<2xf32> to vector<2x1xf32>
    %cst_280 = arith.constant dense<0.000000e+00> : vector<1xf32>
    %1512 = vector.multi_reduction <add>, %1511, %cst_280 [0] : vector<2x1xf32> to vector<1xf32>
    %1513 = vector.shape_cast %1512 : vector<1xf32> to vector<1x1xf32>
    %cst_281 = arith.constant 0.001953125 : f32
    %1514 = vector.broadcast %cst_281 : f32 to vector<1x1xf32>
    %1515 = arith.mulf %1508, %1514 : vector<1x1xf32>
    %cst_282 = arith.constant 0.001953125 : f32
    %1516 = vector.broadcast %cst_282 : f32 to vector<1x1xf32>
    %1517 = arith.mulf %1513, %1516 : vector<1x1xf32>
    %1518 = arith.mulf %1515, %1515 : vector<1x1xf32>
    %1519 = arith.subf %1517, %1518 : vector<1x1xf32>
    %c2_283 = arith.constant 2 : index
    %1520 = memref.load %arg5[%c2_283] : memref<4xf32, #tpu.memory_space<smem>>
    %cst_284 = arith.constant 9.99999974E-6 : f32
    %1521 = vector.broadcast %cst_284 : f32 to vector<1x1xf32>
    %1522 = arith.addf %1519, %1521 : vector<1x1xf32>
    %1523 = math.rsqrt %1522 : vector<1x1xf32>
    %1524 = vector.broadcast %1520 : f32 to vector<1x1xf32>
    %1525 = arith.mulf %1524, %1523 : vector<1x1xf32>
    %c2_285 = arith.constant 2 : index
    %1526 = memref.load %arg6[%c2_285] : memref<4xf32, #tpu.memory_space<smem>>
    %1527 = arith.mulf %1515, %1525 : vector<1x1xf32>
    %1528 = vector.broadcast %1526 : f32 to vector<1x1xf32>
    %1529 = arith.subf %1528, %1527 : vector<1x1xf32>
    %1530 = vector.broadcast %1525 : vector<1x1xf32> to vector<2x256xf32>
    %1531 = arith.mulf %1442, %1530 : vector<2x256xf32>
    %1532 = vector.broadcast %1529 : vector<1x1xf32> to vector<2x256xf32>
    %1533 = arith.addf %1531, %1532 : vector<2x256xf32>
    %cst_286 = arith.constant dense<0.000000e+00> : vector<2xf32>
    %1534 = vector.multi_reduction <add>, %1446, %cst_286 [1] : vector<2x256xf32> to vector<2xf32>
    %1535 = vector.shape_cast %1534 : vector<2xf32> to vector<2x1xf32>
    %cst_287 = arith.constant dense<0.000000e+00> : vector<1xf32>
    %1536 = vector.multi_reduction <add>, %1535, %cst_287 [0] : vector<2x1xf32> to vector<1xf32>
    %1537 = vector.shape_cast %1536 : vector<1xf32> to vector<1x1xf32>
    %1538 = arith.mulf %1446, %1446 : vector<2x256xf32>
    %cst_288 = arith.constant dense<0.000000e+00> : vector<2xf32>
    %1539 = vector.multi_reduction <add>, %1538, %cst_288 [1] : vector<2x256xf32> to vector<2xf32>
    %1540 = vector.shape_cast %1539 : vector<2xf32> to vector<2x1xf32>
    %cst_289 = arith.constant dense<0.000000e+00> : vector<1xf32>
    %1541 = vector.multi_reduction <add>, %1540, %cst_289 [0] : vector<2x1xf32> to vector<1xf32>
    %1542 = vector.shape_cast %1541 : vector<1xf32> to vector<1x1xf32>
    %cst_290 = arith.constant 0.001953125 : f32
    %1543 = vector.broadcast %cst_290 : f32 to vector<1x1xf32>
    %1544 = arith.mulf %1537, %1543 : vector<1x1xf32>
    %cst_291 = arith.constant 0.001953125 : f32
    %1545 = vector.broadcast %cst_291 : f32 to vector<1x1xf32>
    %1546 = arith.mulf %1542, %1545 : vector<1x1xf32>
    %1547 = arith.mulf %1544, %1544 : vector<1x1xf32>
    %1548 = arith.subf %1546, %1547 : vector<1x1xf32>
    %c3_292 = arith.constant 3 : index
    %1549 = memref.load %arg5[%c3_292] : memref<4xf32, #tpu.memory_space<smem>>
    %cst_293 = arith.constant 9.99999974E-6 : f32
    %1550 = vector.broadcast %cst_293 : f32 to vector<1x1xf32>
    %1551 = arith.addf %1548, %1550 : vector<1x1xf32>
    %1552 = math.rsqrt %1551 : vector<1x1xf32>
    %1553 = vector.broadcast %1549 : f32 to vector<1x1xf32>
    %1554 = arith.mulf %1553, %1552 : vector<1x1xf32>
    %c3_294 = arith.constant 3 : index
    %1555 = memref.load %arg6[%c3_294] : memref<4xf32, #tpu.memory_space<smem>>
    %1556 = arith.mulf %1544, %1554 : vector<1x1xf32>
    %1557 = vector.broadcast %1555 : f32 to vector<1x1xf32>
    %1558 = arith.subf %1557, %1556 : vector<1x1xf32>
    %1559 = vector.broadcast %1554 : vector<1x1xf32> to vector<2x256xf32>
    %1560 = arith.mulf %1446, %1559 : vector<2x256xf32>
    %1561 = vector.broadcast %1558 : vector<1x1xf32> to vector<2x256xf32>
    %1562 = arith.addf %1560, %1561 : vector<2x256xf32>
    %1563 = arith.addf %1475, %31 : vector<2x256xf32>
    %cst_295 = arith.constant 0.000000e+00 : f32
    %1564 = vector.broadcast %cst_295 : f32 to vector<2x256xf32>
    %1565 = arith.maximumf %1563, %1564 : vector<2x256xf32>
    %c0_296 = arith.constant 0 : index
    %c0_297 = arith.constant 0 : index
    %1566 = vector.load %arg7[%c0_296, %c0_297] : memref<8x256xf32, #tpu.memory_space<vmem>>, vector<2x256xf32>
    tpu.vector_store %arg7[%c0_296, %c0_297], %1565 {strides = array<i32>} : memref<8x256xf32, #tpu.memory_space<vmem>>, vector<2x256xf32>,
    %1567 = arith.addf %1504, %32 : vector<2x256xf32>
    %cst_298 = arith.constant 0.000000e+00 : f32
    %1568 = vector.broadcast %cst_298 : f32 to vector<2x256xf32>
    %1569 = arith.maximumf %1567, %1568 : vector<2x256xf32>
    %c2_299 = arith.constant 2 : index
    %c0_300 = arith.constant 0 : index
    %1570 = vector.load %arg7[%c2_299, %c0_300] : memref<8x256xf32, #tpu.memory_space<vmem>>, vector<2x256xf32>
    tpu.vector_store %arg7[%c2_299, %c0_300], %1569 {strides = array<i32>} : memref<8x256xf32, #tpu.memory_space<vmem>>, vector<2x256xf32>,
    %1571 = arith.addf %1533, %33 : vector<2x256xf32>
    %cst_301 = arith.constant 0.000000e+00 : f32
    %1572 = vector.broadcast %cst_301 : f32 to vector<2x256xf32>
    %1573 = arith.maximumf %1571, %1572 : vector<2x256xf32>
    %c4_302 = arith.constant 4 : index
    %c0_303 = arith.constant 0 : index
    %1574 = vector.load %arg7[%c4_302, %c0_303] : memref<8x256xf32, #tpu.memory_space<vmem>>, vector<2x256xf32>
    tpu.vector_store %arg7[%c4_302, %c0_303], %1573 {strides = array<i32>} : memref<8x256xf32, #tpu.memory_space<vmem>>, vector<2x256xf32>,
    %1575 = arith.addf %1562, %34 : vector<2x256xf32>
    %cst_304 = arith.constant 0.000000e+00 : f32
    %1576 = vector.broadcast %cst_304 : f32 to vector<2x256xf32>
    %1577 = arith.maximumf %1575, %1576 : vector<2x256xf32>
    %c6_305 = arith.constant 6 : index
    %c0_306 = arith.constant 0 : index
    %1578 = vector.load %arg7[%c6_305, %c0_306] : memref<8x256xf32, #tpu.memory_space<vmem>>, vector<2x256xf32>
    tpu.vector_store %arg7[%c6_305, %c0_306], %1577 {strides = array<i32>} : memref<8x256xf32, #tpu.memory_space<vmem>>, vector<2x256xf32>,
    return
  }
}

</mosaic_0001>

<llo_original>
// kernel: basic_block_forward.1
$region0: #{basic_block_forward.1}
  #allocation0 [shape = 'u32[]', space=smem, size = 0x4, offset = 0x4, fixed_abs, tag = 'smem constant byte address 0x4 - core index']
  #allocation1 [shape = 'u32[144,128]{1,0:T(1,128)}', space=vmem, size = 0x12000, scoped, tag = 'internal scratch']
  %s0 = inlined_call_operand.vmem [shape: f32[8,256], index: 0, kind: input, shape index: {}]
  %s1 = inlined_call_operand.vmem [shape: f32[144], index: 1, kind: input, shape index: {}]
  %s2 = inlined_call_operand.vmem [shape: f32[4], index: 2, kind: input, shape index: {}]
  %s3 = inlined_call_operand.vmem [shape: f32[4], index: 3, kind: input, shape index: {}]
  %s4 = inlined_call_operand.vmem [shape: f32[144], index: 4, kind: input, shape index: {}]
  %s5 = inlined_call_operand.vmem [shape: f32[4], index: 5, kind: input, shape index: {}]
  %s6 = inlined_call_operand.vmem [shape: f32[4], index: 6, kind: input, shape index: {}]
  %s7 = inlined_call_operand.vmem [shape: f32[8,256], index: 7, kind: output, shape index: {}]
  %s8 = sld [smem:[#allocation0]]
  $region62: #{basic_block_forward.1} parent=0
    _
  %s10 = ssub.s32 1, %s8
  %s11 = scalar_select 0, %s10, %s8
  $region1: #{basic_block_forward.1} parent=0
    #allocation2 [shape = 'u8[1024]{0}', space=smem, size = 0x400, scoped, tag = 'input window, operand 1, single buffered']
    #allocation3 [shape = 's32[1]{0}', space=sflag, size = 0x4, scoped, tag = 'scoped memory for basic_block_forward.1']
    #allocation4 [shape = 'u8[512]{0}', space=smem, size = 0x200, scoped, tag = 'input window, operand 2, single buffered']
    #allocation5 [shape = 's32[1]{0}', space=sflag, size = 0x4, scoped, tag = 'scoped memory for basic_block_forward.1']
    #allocation6 [shape = 'u8[512]{0}', space=smem, size = 0x200, scoped, tag = 'input window, operand 3, single buffered']
    #allocation7 [shape = 'u8[1024]{0}', space=smem, size = 0x400, scoped, tag = 'input window, operand 4, single buffered']
    #allocation8 [shape = 's32[1]{0}', space=sflag, size = 0x4, scoped, tag = 'scoped memory for basic_block_forward.1']
    #allocation9 [shape = 'u8[512]{0}', space=smem, size = 0x200, scoped, tag = 'input window, operand 5, single buffered']
    #allocation10 [shape = 'u8[512]{0}', space=smem, size = 0x200, scoped, tag = 'input window, operand 6, single buffered']
    #allocation11 [shape = 's32[1]{0}', space=sflag, size = 0x4, scoped, tag = 'scoped memory for basic_block_forward.1']
    %12 = vsyncpa [#allocation3], 0
    %13 = vsyncpa [#allocation5], 0
    %14 = vsyncpa [#allocation8], 0
    %15 = vsyncpa [#allocation11], 0
    // Predicated region
    $region2: #{basic_block_forward.1} parent=1 // pred_check
      _
    $region3: #{basic_block_forward.1} parent=1 // pred_check_branch
      %17 = sbr.rel (0) target = $region5
    $region4: #{basic_block_forward.1} parent=1 // pred_region
      _
    $region5: #{basic_block_forward.1} parent=1 // pred_fallthru
      _
    // Predicated region
    $region6: #{basic_block_forward.1} parent=1 // pred_check
      _
    $region7: #{basic_block_forward.1} parent=1 // pred_check_branch
      %19 = sbr.rel (0) target = $region9
    $region8: #{basic_block_forward.1} parent=1 // pred_region
      %s21 = ssub.s32 32, 32
      %22 = vsyncadd [#allocation3], %s21
      %s24 = sshll.u32 %s1, 4
      %s25 = int_to_ptr.vmem [resolvable:$true] %s24
      %27 = dma.vmem_to_smem %s25, 32, [#allocation2], [#allocation3]
    $region9: #{basic_block_forward.1} parent=1 // pred_fallthru
      _
    // Predicated region
    $region10: #{basic_block_forward.1} parent=1 // pred_check
      _
    $region11: #{basic_block_forward.1} parent=1 // pred_check_branch
      %29 = sbr.rel (0) target = $region13
    $region12: #{basic_block_forward.1} parent=1 // pred_region
      %s31 = ssub.s32 16, 16
      %32 = vsyncadd [#allocation5], %s31
      %s34 = sshll.u32 %s2, 4
      %s35 = int_to_ptr.vmem [resolvable:$true] %s34
      %37 = dma.vmem_to_smem %s35, 16, [#allocation4], [#allocation5]
    $region13: #{basic_block_forward.1} parent=1 // pred_fallthru
      _
    // Predicated region
    $region14: #{basic_block_forward.1} parent=1 // pred_check
      _
    $region15: #{basic_block_forward.1} parent=1 // pred_check_branch
      %39 = sbr.rel (0) target = $region17
    $region16: #{basic_block_forward.1} parent=1 // pred_region
      %s41 = ssub.s32 16, 16
      %42 = vsyncadd [#allocation5], %s41
      %s44 = sshll.u32 %s3, 4
      %s45 = int_to_ptr.vmem [resolvable:$true] %s44
      %47 = dma.vmem_to_smem %s45, 16, [#allocation6], [#allocation5]
    $region17: #{basic_block_forward.1} parent=1 // pred_fallthru
      _
    // Predicated region
    $region18: #{basic_block_forward.1} parent=1 // pred_check
      _
    $region19: #{basic_block_forward.1} parent=1 // pred_check_branch
      %49 = sbr.rel (0) target = $region21
    $region20: #{basic_block_forward.1} parent=1 // pred_region
      %s51 = ssub.s32 32, 32
      %52 = vsyncadd [#allocation8], %s51
      %s54 = sshll.u32 %s4, 4
      %s55 = int_to_ptr.vmem [resolvable:$true] %s54
      %57 = dma.vmem_to_smem %s55, 32, [#allocation7], [#allocation8]
    $region21: #{basic_block_forward.1} parent=1 // pred_fallthru
      _
    // Predicated region
    $region22: #{basic_block_forward.1} parent=1 // pred_check
      _
    $region23: #{basic_block_forward.1} parent=1 // pred_check_branch
      %59 = sbr.rel (0) target = $region25
    $region24: #{basic_block_forward.1} parent=1 // pred_region
      %s61 = ssub.s32 16, 16
      %62 = vsyncadd [#allocation8], %s61
      %s64 = sshll.u32 %s5, 4
      %s65 = int_to_ptr.vmem [resolvable:$true] %s64
      %67 = dma.vmem_to_smem %s65, 16, [#allocation9], [#allocation8]
    $region25: #{basic_block_forward.1} parent=1 // pred_fallthru
      _
    // Predicated region
    $region26: #{basic_block_forward.1} parent=1 // pred_check
      _
    $region27: #{basic_block_forward.1} parent=1 // pred_check_branch
      %69 = sbr.rel (0) target = $region29
    $region28: #{basic_block_forward.1} parent=1 // pred_region
      %s71 = ssub.s32 16, 16
      %72 = vsyncadd [#allocation11], %s71
      %s74 = sshll.u32 %s6, 4
      %s75 = int_to_ptr.vmem [resolvable:$true] %s74
      %77 = dma.vmem_to_smem %s75, 16, [#allocation10], [#allocation11]
    $region29: #{basic_block_forward.1} parent=1 // pred_fallthru
      _
    // Predicated region
    $region30: #{basic_block_forward.1} parent=1 // pred_check
      _
    $region31: #{basic_block_forward.1} parent=1 // pred_check_branch
      %79 = sbr.rel (0) target = $region33
    $region32: #{basic_block_forward.1} parent=1 // pred_region
      %80 = dma.done [#allocation3], 32
    $region33: #{basic_block_forward.1} parent=1 // pred_fallthru
      _
    // Predicated region
    $region34: #{basic_block_forward.1} parent=1 // pred_check
      _
    $region35: #{basic_block_forward.1} parent=1 // pred_check_branch
      %82 = sbr.rel (0) target = $region37
    $region36: #{basic_block_forward.1} parent=1 // pred_region
      %83 = dma.done [#allocation5], 16
    $region37: #{basic_block_forward.1} parent=1 // pred_fallthru
      _
    // Predicated region
    $region38: #{basic_block_forward.1} parent=1 // pred_check
      _
    $region39: #{basic_block_forward.1} parent=1 // pred_check_branch
      %85 = sbr.rel (0) target = $region41
    $region40: #{basic_block_forward.1} parent=1 // pred_region
      %86 = dma.done [#allocation5], 16
    $region41: #{basic_block_forward.1} parent=1 // pred_fallthru
      _
    // Predicated region
    $region42: #{basic_block_forward.1} parent=1 // pred_check
      _
    $region43: #{basic_block_forward.1} parent=1 // pred_check_branch
      %88 = sbr.rel (0) target = $region45
    $region44: #{basic_block_forward.1} parent=1 // pred_region
      %89 = dma.done [#allocation8], 32
    $region45: #{basic_block_forward.1} parent=1 // pred_fallthru
      _
    // Predicated region
    $region46: #{basic_block_forward.1} parent=1 // pred_check
      _
    $region47: #{basic_block_forward.1} parent=1 // pred_check_branch
      %91 = sbr.rel (0) target = $region49
    $region48: #{basic_block_forward.1} parent=1 // pred_region
      %92 = dma.done [#allocation8], 16
    $region49: #{basic_block_forward.1} parent=1 // pred_fallthru
      _
    // Predicated region
    $region50: #{basic_block_forward.1} parent=1 // pred_check
      _
    $region51: #{basic_block_forward.1} parent=1 // pred_check_branch
      %94 = sbr.rel (0) target = $region53
    $region52: #{basic_block_forward.1} parent=1 // pred_region
      %95 = dma.done [#allocation11], 16
    $region53: #{basic_block_forward.1} parent=1 // pred_fallthru
      _
    %96 = sfence
    %v97 = vlaneseq
    %v98 = vand.u32 %v97, 127
    %v99 = vadd.s32 %v98, 128
    %v100 = vand.u32 %v98, 15
    %v101 = vand.u32 %v99, 15
    %vm102 = vcmp.ge.s32.totalorder %v98, 16
    %vm103 = vcmp.ge.s32.totalorder %v99, 16
    %vm104 = vcmp.lt.s32.totalorder %v98, 240
    %vm105 = vcmp.lt.s32.totalorder %v99, 240
    %vm106 = vcmp.ge.s32.totalorder %v100, 1
    %vm107 = vcmp.ge.s32.totalorder %v101, 1
    %vm108 = vcmp.le.s32.totalorder %v100, 14
    %vm109 = vcmp.le.s32.totalorder %v101, 14
    %vm110 = vmand %vm102, %vm106
    %vm111 = vmand %vm103, %vm107
    %v112 = vsel %vm110, 1, 0
    %v113 = vsel %vm111, 1, 0
    %v114 = vcvt.s32.f32 %v112
    %v115 = vcvt.s32.f32 %v113
    %v116 = vsel %vm102, 1, 0
    %v117 = vsel %vm103, 1, 0
    %v118 = vcvt.s32.f32 %v116
    %v119 = vcvt.s32.f32 %v117
    %vm120 = vmand %vm102, %vm108
    %vm121 = vmand %vm103, %vm109
    %v122 = vsel %vm120, 1, 0
    %v123 = vsel %vm121, 1, 0
    %v124 = vcvt.s32.f32 %v122
    %v125 = vcvt.s32.f32 %v123
    %v126 = vsel %vm106, 1, 0
    %v127 = vsel %vm107, 1, 0
    %v128 = vcvt.s32.f32 %v126
    %v129 = vcvt.s32.f32 %v127
    %v130 = vsel %vm108, 1, 0
    %v131 = vsel %vm109, 1, 0
    %v132 = vcvt.s32.f32 %v130
    %v133 = vcvt.s32.f32 %v131
    %vm134 = vmand %vm104, %vm106
    %vm135 = vmand %vm105, %vm107
    %v136 = vsel %vm134, 1, 0
    %v137 = vsel %vm135, 1, 0
    %v138 = vcvt.s32.f32 %v136
    %v139 = vcvt.s32.f32 %v137
    %v140 = vsel %vm104, 1, 0
    %v141 = vsel %vm105, 1, 0
    %v142 = vcvt.s32.f32 %v140
    %v143 = vcvt.s32.f32 %v141
    %vm144 = vmand %vm104, %vm108
    %vm145 = vmand %vm105, %vm109
    %v146 = vsel %vm144, 1, 0
    %v147 = vsel %vm145, 1, 0
    %v148 = vcvt.s32.f32 %v146
    %v149 = vcvt.s32.f32 %v147
    %v150 = vld [vmem:[%s0] sm:$0x3]
    %v151 = vld [vmem:[%s0 + $0x8] sm:$0x3]
    %v152 = vld [vmem:[%s0] sm:$0xc]
    %v153 = vld [vmem:[%s0 + $0x8] sm:$0xc]
    %v154 = vld [vmem:[%s0] sm:$0x30]
    %v155 = vld [vmem:[%s0 + $0x8] sm:$0x30]
    %v156 = vld [vmem:[%s0] sm:$0xc0]
    %v157 = vld [vmem:[%s0 + $0x8] sm:$0xc0]
    %158 = vrot.lane.b32.xlu0 %v150, 17
    %v159 = vpop.permute.xlu0 %158
    %160 = vrot.lane.b32.xlu0 %v151, 17
    %v161 = vpop.permute.xlu0 %160
    %vm162 = vcmp.lt.s32.totalorder %v98, 17
    %v163 = vsel %vm162, %v159, %v161
    %v164 = vsel %vm162, %v161, %v159
    %v165 = vmul.f32 %v164, %v114
    %v166 = vmul.f32 %v163, %v115
    %s167 = sld [smem:[#allocation2]]
    %v168 = vstv %s167
    %v169 = vmul.f32 %v168, %v165
    %v170 = vmul.f32 %v168, %v166
    %v171 = vadd.f32 %v169, 0.0
    %v172 = vadd.f32 %v170, 0.0
    %s173 = sld [smem:[#allocation2 + $0x24]]
    %v174 = vstv %s173
    %v175 = vmul.f32 %v174, %v165
    %v176 = vmul.f32 %v174, %v166
    %v177 = vadd.f32 %v175, 0.0
    %v178 = vadd.f32 %v176, 0.0
    %s179 = sld [smem:[#allocation2 + $0x48]]
    %v180 = vstv %s179
    %v181 = vmul.f32 %v180, %v165
    %v182 = vmul.f32 %v180, %v166
    %v183 = vadd.f32 %v181, 0.0
    %v184 = vadd.f32 %v182, 0.0
    %s185 = sld [smem:[#allocation2 + $0x6c]]
    %v186 = vstv %s185
    %v187 = vmul.f32 %v186, %v165
    %v188 = vmul.f32 %v186, %v166
    %v189 = vadd.f32 %v187, 0.0
    %v190 = vadd.f32 %v188, 0.0
    %191 = vrot.lane.b32.xlu0 %v150, 16
    %v192 = vpop.permute.xlu0 %191
    %193 = vrot.lane.b32.xlu0 %v151, 16
    %v194 = vpop.permute.xlu0 %193
    %vm195 = vcmp.lt.s32.totalorder %v98, 16
    %v196 = vsel %vm195, %v192, %v194
    %v197 = vsel %vm195, %v194, %v192
    %v198 = vmul.f32 %v197, %v118
    %v199 = vmul.f32 %v196, %v119
    %s200 = sld [smem:[#allocation2 + $0x1]]
    %v201 = vstv %s200
    %v202 = vmul.f32 %v201, %v198
    %v203 = vmul.f32 %v201, %v199
    %v204 = vadd.f32 %v171, %v202
    %v205 = vadd.f32 %v172, %v203
    %s206 = sld [smem:[#allocation2 + $0x25]]
    %v207 = vstv %s206
    %v208 = vmul.f32 %v207, %v198
    %v209 = vmul.f32 %v207, %v199
    %v210 = vadd.f32 %v177, %v208
    %v211 = vadd.f32 %v178, %v209
    %s212 = sld [smem:[#allocation2 + $0x49]]
    %v213 = vstv %s212
    %v214 = vmul.f32 %v213, %v198
    %v215 = vmul.f32 %v213, %v199
    %v216 = vadd.f32 %v183, %v214
    %v217 = vadd.f32 %v184, %v215
    %s218 = sld [smem:[#allocation2 + $0x6d]]
    %v219 = vstv %s218
    %v220 = vmul.f32 %v219, %v198
    %v221 = vmul.f32 %v219, %v199
    %v222 = vadd.f32 %v189, %v220
    %v223 = vadd.f32 %v190, %v221
    %224 = vrot.lane.b32.xlu0 %v150, 15
    %v225 = vpop.permute.xlu0 %224
    %226 = vrot.lane.b32.xlu0 %v151, 15
    %v227 = vpop.permute.xlu0 %226
    %vm228 = vcmp.lt.s32.totalorder %v98, 15
    %v229 = vsel %vm228, %v225, %v227
    %v230 = vsel %vm228, %v227, %v225
    %v231 = vmul.f32 %v230, %v124
    %v232 = vmul.f32 %v229, %v125
    %s233 = sld [smem:[#allocation2 + $0x2]]
    %v234 = vstv %s233
    %v235 = vmul.f32 %v234, %v231
    %v236 = vmul.f32 %v234, %v232
    %v237 = vadd.f32 %v204, %v235
    %v238 = vadd.f32 %v205, %v236
    %s239 = sld [smem:[#allocation2 + $0x26]]
    %v240 = vstv %s239
    %v241 = vmul.f32 %v240, %v231
    %v242 = vmul.f32 %v240, %v232
    %v243 = vadd.f32 %v210, %v241
    %v244 = vadd.f32 %v211, %v242
    %s245 = sld [smem:[#allocation2 + $0x4a]]
    %v246 = vstv %s245
    %v247 = vmul.f32 %v246, %v231
    %v248 = vmul.f32 %v246, %v232
    %v249 = vadd.f32 %v216, %v247
    %v250 = vadd.f32 %v217, %v248
    %s251 = sld [smem:[#allocation2 + $0x6e]]
    %v252 = vstv %s251
    %v253 = vmul.f32 %v252, %v231
    %v254 = vmul.f32 %v252, %v232
    %v255 = vadd.f32 %v222, %v253
    %v256 = vadd.f32 %v223, %v254
    %257 = vrot.lane.b32.xlu0 %v150, 1
    %v258 = vpop.permute.xlu0 %257
    %259 = vrot.lane.b32.xlu0 %v151, 1
    %v260 = vpop.permute.xlu0 %259
    %vm261 = vcmp.lt.s32.totalorder %v98, 1
    %v262 = vsel %vm261, %v258, %v260
    %v263 = vsel %vm261, %v260, %v258
    %v264 = vmul.f32 %v263, %v128
    %v265 = vmul.f32 %v262, %v129
    %s266 = sld [smem:[#allocation2 + $0x3]]
    %v267 = vstv %s266
    %v268 = vmul.f32 %v267, %v264
    %v269 = vmul.f32 %v267, %v265
    %v270 = vadd.f32 %v237, %v268
    %v271 = vadd.f32 %v238, %v269
    %s272 = sld [smem:[#allocation2 + $0x27]]
    %v273 = vstv %s272
    %v274 = vmul.f32 %v273, %v264
    %v275 = vmul.f32 %v273, %v265
    %v276 = vadd.f32 %v243, %v274
    %v277 = vadd.f32 %v244, %v275
    %s278 = sld [smem:[#allocation2 + $0x4b]]
    %v279 = vstv %s278
    %v280 = vmul.f32 %v279, %v264
    %v281 = vmul.f32 %v279, %v265
    %v282 = vadd.f32 %v249, %v280
    %v283 = vadd.f32 %v250, %v281
    %s284 = sld [smem:[#allocation2 + $0x6f]]
    %v285 = vstv %s284
    %v286 = vmul.f32 %v285, %v264
    %v287 = vmul.f32 %v285, %v265
    %v288 = vadd.f32 %v255, %v286
    %v289 = vadd.f32 %v256, %v287
    %s290 = sld [smem:[#allocation2 + $0x4]]
    %v291 = vstv %s290
    %v292 = vmul.f32 %v291, %v150
    %v293 = vmul.f32 %v291, %v151
    %v294 = vadd.f32 %v270, %v292
    %v295 = vadd.f32 %v271, %v293
    %s296 = sld [smem:[#allocation2 + $0x28]]
    %v297 = vstv %s296
    %v298 = vmul.f32 %v297, %v150
    %v299 = vmul.f32 %v297, %v151
    %v300 = vadd.f32 %v276, %v298
    %v301 = vadd.f32 %v277, %v299
    %s302 = sld [smem:[#allocation2 + $0x4c]]
    %v303 = vstv %s302
    %v304 = vmul.f32 %v303, %v150
    %v305 = vmul.f32 %v303, %v151
    %v306 = vadd.f32 %v282, %v304
    %v307 = vadd.f32 %v283, %v305
    %s308 = sld [smem:[#allocation2 + $0x70]]
    %v309 = vstv %s308
    %v310 = vmul.f32 %v309, %v150
    %v311 = vmul.f32 %v309, %v151
    %v312 = vadd.f32 %v288, %v310
    %v313 = vadd.f32 %v289, %v311
    %314 = vrot.lane.b32.xlu0 %v150, 127
    %v315 = vpop.permute.xlu0 %314
    %316 = vrot.lane.b32.xlu0 %v151, 127
    %v317 = vpop.permute.xlu0 %316
    %vm318 = vcmp.lt.s32.totalorder %v98, 127
    %v319 = vsel %vm318, %v315, %v317
    %v320 = vsel %vm318, %v317, %v315
    %v321 = vmul.f32 %v319, %v132
    %v322 = vmul.f32 %v320, %v133
    %s323 = sld [smem:[#allocation2 + $0x5]]
    %v324 = vstv %s323
    %v325 = vmul.f32 %v324, %v321
    %v326 = vmul.f32 %v324, %v322
    %v327 = vadd.f32 %v294, %v325
    %v328 = vadd.f32 %v295, %v326
    %s329 = sld [smem:[#allocation2 + $0x29]]
    %v330 = vstv %s329
    %v331 = vmul.f32 %v330, %v321
    %v332 = vmul.f32 %v330, %v322
    %v333 = vadd.f32 %v300, %v331
    %v334 = vadd.f32 %v301, %v332
    %s335 = sld [smem:[#allocation2 + $0x4d]]
    %v336 = vstv %s335
    %v337 = vmul.f32 %v336, %v321
    %v338 = vmul.f32 %v336, %v322
    %v339 = vadd.f32 %v306, %v337
    %v340 = vadd.f32 %v307, %v338
    %s341 = sld [smem:[#allocation2 + $0x71]]
    %v342 = vstv %s341
    %v343 = vmul.f32 %v342, %v321
    %v344 = vmul.f32 %v342, %v322
    %v345 = vadd.f32 %v312, %v343
    %v346 = vadd.f32 %v313, %v344
    %347 = vrot.lane.b32.xlu0 %v150, 113
    %v348 = vpop.permute.xlu0 %347
    %349 = vrot.lane.b32.xlu0 %v151, 113
    %v350 = vpop.permute.xlu0 %349
    %vm351 = vcmp.lt.s32.totalorder %v98, 113
    %v352 = vsel %vm351, %v348, %v350
    %v353 = vsel %vm351, %v350, %v348
    %v354 = vmul.f32 %v352, %v138
    %v355 = vmul.f32 %v353, %v139
    %s356 = sld [smem:[#allocation2 + $0x6]]
    %v357 = vstv %s356
    %v358 = vmul.f32 %v357, %v354
    %v359 = vmul.f32 %v357, %v355
    %v360 = vadd.f32 %v327, %v358
    %v361 = vadd.f32 %v328, %v359
    %s362 = sld [smem:[#allocation2 + $0x2a]]
    %v363 = vstv %s362
    %v364 = vmul.f32 %v363, %v354
    %v365 = vmul.f32 %v363, %v355
    %v366 = vadd.f32 %v333, %v364
    %v367 = vadd.f32 %v334, %v365
    %s368 = sld [smem:[#allocation2 + $0x4e]]
    %v369 = vstv %s368
    %v370 = vmul.f32 %v369, %v354
    %v371 = vmul.f32 %v369, %v355
    %v372 = vadd.f32 %v339, %v370
    %v373 = vadd.f32 %v340, %v371
    %s374 = sld [smem:[#allocation2 + $0x72]]
    %v375 = vstv %s374
    %v376 = vmul.f32 %v375, %v354
    %v377 = vmul.f32 %v375, %v355
    %v378 = vadd.f32 %v345, %v376
    %v379 = vadd.f32 %v346, %v377
    %380 = vrot.lane.b32.xlu0 %v150, 112
    %v381 = vpop.permute.xlu0 %380
    %382 = vrot.lane.b32.xlu0 %v151, 112
    %v383 = vpop.permute.xlu0 %382
    %vm384 = vcmp.lt.s32.totalorder %v98, 112
    %v385 = vsel %vm384, %v381, %v383
    %v386 = vsel %vm384, %v383, %v381
    %v387 = vmul.f32 %v385, %v142
    %v388 = vmul.f32 %v386, %v143
    %s389 = sld [smem:[#allocation2 + $0x7]]
    %v390 = vstv %s389
    %v391 = vmul.f32 %v390, %v387
    %v392 = vmul.f32 %v390, %v388
    %v393 = vadd.f32 %v360, %v391
    %v394 = vadd.f32 %v361, %v392
    %s395 = sld [smem:[#allocation2 + $0x2b]]
    %v396 = vstv %s395
    %v397 = vmul.f32 %v396, %v387
    %v398 = vmul.f32 %v396, %v388
    %v399 = vadd.f32 %v366, %v397
    %v400 = vadd.f32 %v367, %v398
    %s401 = sld [smem:[#allocation2 + $0x4f]]
    %v402 = vstv %s401
    %v403 = vmul.f32 %v402, %v387
    %v404 = vmul.f32 %v402, %v388
    %v405 = vadd.f32 %v372, %v403
    %v406 = vadd.f32 %v373, %v404
    %s407 = sld [smem:[#allocation2 + $0x73]]
    %v408 = vstv %s407
    %v409 = vmul.f32 %v408, %v387
    %v410 = vmul.f32 %v408, %v388
    %v411 = vadd.f32 %v378, %v409
    %v412 = vadd.f32 %v379, %v410
    %413 = vrot.lane.b32.xlu0 %v150, 111
    %v414 = vpop.permute.xlu0 %413
    %415 = vrot.lane.b32.xlu0 %v151, 111
    %v416 = vpop.permute.xlu0 %415
    %vm417 = vcmp.lt.s32.totalorder %v98, 111
    %v418 = vsel %vm417, %v414, %v416
    %v419 = vsel %vm417, %v416, %v414
    %v420 = vmul.f32 %v418, %v148
    %v421 = vmul.f32 %v419, %v149
    %s422 = sld [smem:[#allocation2 + $0x8]]
    %v423 = vstv %s422
    %v424 = vmul.f32 %v423, %v420
    %v425 = vmul.f32 %v423, %v421
    %v426 = vadd.f32 %v393, %v424
    %v427 = vadd.f32 %v394, %v425
    %s428 = sld [smem:[#allocation2 + $0x2c]]
    %v429 = vstv %s428
    %v430 = vmul.f32 %v429, %v420
    %v431 = vmul.f32 %v429, %v421
    %v432 = vadd.f32 %v399, %v430
    %v433 = vadd.f32 %v400, %v431
    %s434 = sld [smem:[#allocation2 + $0x50]]
    %v435 = vstv %s434
    %v436 = vmul.f32 %v435, %v420
    %v437 = vmul.f32 %v435, %v421
    %v438 = vadd.f32 %v405, %v436
    %v439 = vadd.f32 %v406, %v437
    %s440 = sld [smem:[#allocation2 + $0x74]]
    %v441 = vstv %s440
    %v442 = vmul.f32 %v441, %v420
    %v443 = vmul.f32 %v441, %v421
    %v444 = vadd.f32 %v411, %v442
    %v445 = vadd.f32 %v412, %v443
    %v448 = vrot.slane %v152, 2
    %v449 = vrot.slane %v153, 2
    %452 = vrot.lane.b32.xlu0 %v448, 17
    %v453 = vpop.permute.xlu0 %452
    %454 = vrot.lane.b32.xlu0 %v449, 17
    %v455 = vpop.permute.xlu0 %454
    %v456 = vsel %vm162, %v453, %v455
    %v457 = vsel %vm162, %v455, %v453
    %v458 = vmul.f32 %v457, %v114
    %v459 = vmul.f32 %v456, %v115
    %s460 = sld [smem:[#allocation2 + $0x9]]
    %v461 = vstv %s460
    %v462 = vmul.f32 %v461, %v458
    %v463 = vmul.f32 %v461, %v459
    %v464 = vadd.f32 %v426, %v462
    %v465 = vadd.f32 %v427, %v463
    %s466 = sld [smem:[#allocation2 + $0x2d]]
    %v467 = vstv %s466
    %v468 = vmul.f32 %v467, %v458
    %v469 = vmul.f32 %v467, %v459
    %v470 = vadd.f32 %v432, %v468
    %v471 = vadd.f32 %v433, %v469
    %s472 = sld [smem:[#allocation2 + $0x51]]
    %v473 = vstv %s472
    %v474 = vmul.f32 %v473, %v458
    %v475 = vmul.f32 %v473, %v459
    %v476 = vadd.f32 %v438, %v474
    %v477 = vadd.f32 %v439, %v475
    %s478 = sld [smem:[#allocation2 + $0x75]]
    %v479 = vstv %s478
    %v480 = vmul.f32 %v479, %v458
    %v481 = vmul.f32 %v479, %v459
    %v482 = vadd.f32 %v444, %v480
    %v483 = vadd.f32 %v445, %v481
    %484 = vrot.lane.b32.xlu0 %v448, 16
    %v485 = vpop.permute.xlu0 %484
    %486 = vrot.lane.b32.xlu0 %v449, 16
    %v487 = vpop.permute.xlu0 %486
    %v488 = vsel %vm195, %v485, %v487
    %v489 = vsel %vm195, %v487, %v485
    %v490 = vmul.f32 %v489, %v118
    %v491 = vmul.f32 %v488, %v119
    %s492 = sld [smem:[#allocation2 + $0xa]]
    %v493 = vstv %s492
    %v494 = vmul.f32 %v493, %v490
    %v495 = vmul.f32 %v493, %v491
    %v496 = vadd.f32 %v464, %v494
    %v497 = vadd.f32 %v465, %v495
    %s498 = sld [smem:[#allocation2 + $0x2e]]
    %v499 = vstv %s498
    %v500 = vmul.f32 %v499, %v490
    %v501 = vmul.f32 %v499, %v491
    %v502 = vadd.f32 %v470, %v500
    %v503 = vadd.f32 %v471, %v501
    %s504 = sld [smem:[#allocation2 + $0x52]]
    %v505 = vstv %s504
    %v506 = vmul.f32 %v505, %v490
    %v507 = vmul.f32 %v505, %v491
    %v508 = vadd.f32 %v476, %v506
    %v509 = vadd.f32 %v477, %v507
    %s510 = sld [smem:[#allocation2 + $0x76]]
    %v511 = vstv %s510
    %v512 = vmul.f32 %v511, %v490
    %v513 = vmul.f32 %v511, %v491
    %v514 = vadd.f32 %v482, %v512
    %v515 = vadd.f32 %v483, %v513
    %516 = vrot.lane.b32.xlu0 %v448, 15
    %v517 = vpop.permute.xlu0 %516
    %518 = vrot.lane.b32.xlu0 %v449, 15
    %v519 = vpop.permute.xlu0 %518
    %v520 = vsel %vm228, %v517, %v519
    %v521 = vsel %vm228, %v519, %v517
    %v522 = vmul.f32 %v521, %v124
    %v523 = vmul.f32 %v520, %v125
    %s524 = sld [smem:[#allocation2 + $0xb]]
    %v525 = vstv %s524
    %v526 = vmul.f32 %v525, %v522
    %v527 = vmul.f32 %v525, %v523
    %v528 = vadd.f32 %v496, %v526
    %v529 = vadd.f32 %v497, %v527
    %s530 = sld [smem:[#allocation2 + $0x2f]]
    %v531 = vstv %s530
    %v532 = vmul.f32 %v531, %v522
    %v533 = vmul.f32 %v531, %v523
    %v534 = vadd.f32 %v502, %v532
    %v535 = vadd.f32 %v503, %v533
    %s536 = sld [smem:[#allocation2 + $0x53]]
    %v537 = vstv %s536
    %v538 = vmul.f32 %v537, %v522
    %v539 = vmul.f32 %v537, %v523
    %v540 = vadd.f32 %v508, %v538
    %v541 = vadd.f32 %v509, %v539
    %s542 = sld [smem:[#allocation2 + $0x77]]
    %v543 = vstv %s542
    %v544 = vmul.f32 %v543, %v522
    %v545 = vmul.f32 %v543, %v523
    %v546 = vadd.f32 %v514, %v544
    %v547 = vadd.f32 %v515, %v545
    %548 = vrot.lane.b32.xlu0 %v448, 1
    %v549 = vpop.permute.xlu0 %548
    %550 = vrot.lane.b32.xlu0 %v449, 1
    %v551 = vpop.permute.xlu0 %550
    %v552 = vsel %vm261, %v549, %v551
    %v553 = vsel %vm261, %v551, %v549
    %v554 = vmul.f32 %v553, %v128
    %v555 = vmul.f32 %v552, %v129
    %s556 = sld [smem:[#allocation2 + $0xc]]
    %v557 = vstv %s556
    %v558 = vmul.f32 %v557, %v554
    %v559 = vmul.f32 %v557, %v555
    %v560 = vadd.f32 %v528, %v558
    %v561 = vadd.f32 %v529, %v559
    %s562 = sld [smem:[#allocation2 + $0x30]]
    %v563 = vstv %s562
    %v564 = vmul.f32 %v563, %v554
    %v565 = vmul.f32 %v563, %v555
    %v566 = vadd.f32 %v534, %v564
    %v567 = vadd.f32 %v535, %v565
    %s568 = sld [smem:[#allocation2 + $0x54]]
    %v569 = vstv %s568
    %v570 = vmul.f32 %v569, %v554
    %v571 = vmul.f32 %v569, %v555
    %v572 = vadd.f32 %v540, %v570
    %v573 = vadd.f32 %v541, %v571
    %s574 = sld [smem:[#allocation2 + $0x78]]
    %v575 = vstv %s574
    %v576 = vmul.f32 %v575, %v554
    %v577 = vmul.f32 %v575, %v555
    %v578 = vadd.f32 %v546, %v576
    %v579 = vadd.f32 %v547, %v577
    %s580 = sld [smem:[#allocation2 + $0xd]]
    %v581 = vstv %s580
    %v582 = vmul.f32 %v581, %v152
    %v583 = vmul.f32 %v581, %v153
    %v586 = vrot.slane %v582, 2
    %v587 = vrot.slane %v583, 2
    %v590 = vadd.f32 %v560, %v586
    %v591 = vadd.f32 %v561, %v587
    %s592 = sld [smem:[#allocation2 + $0x31]]
    %v593 = vstv %s592
    %v594 = vmul.f32 %v593, %v152
    %v595 = vmul.f32 %v593, %v153
    %v598 = vrot.slane %v594, 2
    %v599 = vrot.slane %v595, 2
    %v602 = vadd.f32 %v566, %v598
    %v603 = vadd.f32 %v567, %v599
    %s604 = sld [smem:[#allocation2 + $0x55]]
    %v605 = vstv %s604
    %v606 = vmul.f32 %v605, %v152
    %v607 = vmul.f32 %v605, %v153
    %v610 = vrot.slane %v606, 2
    %v611 = vrot.slane %v607, 2
    %v614 = vadd.f32 %v572, %v610
    %v615 = vadd.f32 %v573, %v611
    %s616 = sld [smem:[#allocation2 + $0x79]]
    %v617 = vstv %s616
    %v618 = vmul.f32 %v617, %v152
    %v619 = vmul.f32 %v617, %v153
    %v622 = vrot.slane %v618, 2
    %v623 = vrot.slane %v619, 2
    %v626 = vadd.f32 %v578, %v622
    %v627 = vadd.f32 %v579, %v623
    %628 = vrot.lane.b32.xlu0 %v448, 127
    %v629 = vpop.permute.xlu0 %628
    %630 = vrot.lane.b32.xlu0 %v449, 127
    %v631 = vpop.permute.xlu0 %630
    %v632 = vsel %vm318, %v629, %v631
    %v633 = vsel %vm318, %v631, %v629
    %v634 = vmul.f32 %v632, %v132
    %v635 = vmul.f32 %v633, %v133
    %s636 = sld [smem:[#allocation2 + $0xe]]
    %v637 = vstv %s636
    %v638 = vmul.f32 %v637, %v634
    %v639 = vmul.f32 %v637, %v635
    %v640 = vadd.f32 %v590, %v638
    %v641 = vadd.f32 %v591, %v639
    %s642 = sld [smem:[#allocation2 + $0x32]]
    %v643 = vstv %s642
    %v644 = vmul.f32 %v643, %v634
    %v645 = vmul.f32 %v643, %v635
    %v646 = vadd.f32 %v602, %v644
    %v647 = vadd.f32 %v603, %v645
    %s648 = sld [smem:[#allocation2 + $0x56]]
    %v649 = vstv %s648
    %v650 = vmul.f32 %v649, %v634
    %v651 = vmul.f32 %v649, %v635
    %v652 = vadd.f32 %v614, %v650
    %v653 = vadd.f32 %v615, %v651
    %s654 = sld [smem:[#allocation2 + $0x7a]]
    %v655 = vstv %s654
    %v656 = vmul.f32 %v655, %v634
    %v657 = vmul.f32 %v655, %v635
    %v658 = vadd.f32 %v626, %v656
    %v659 = vadd.f32 %v627, %v657
    %660 = vrot.lane.b32.xlu0 %v448, 113
    %v661 = vpop.permute.xlu0 %660
    %662 = vrot.lane.b32.xlu0 %v449, 113
    %v663 = vpop.permute.xlu0 %662
    %v664 = vsel %vm351, %v661, %v663
    %v665 = vsel %vm351, %v663, %v661
    %v666 = vmul.f32 %v664, %v138
    %v667 = vmul.f32 %v665, %v139
    %s668 = sld [smem:[#allocation2 + $0xf]]
    %v669 = vstv %s668
    %v670 = vmul.f32 %v669, %v666
    %v671 = vmul.f32 %v669, %v667
    %v672 = vadd.f32 %v640, %v670
    %v673 = vadd.f32 %v641, %v671
    %s674 = sld [smem:[#allocation2 + $0x33]]
    %v675 = vstv %s674
    %v676 = vmul.f32 %v675, %v666
    %v677 = vmul.f32 %v675, %v667
    %v678 = vadd.f32 %v646, %v676
    %v679 = vadd.f32 %v647, %v677
    %s680 = sld [smem:[#allocation2 + $0x57]]
    %v681 = vstv %s680
    %v682 = vmul.f32 %v681, %v666
    %v683 = vmul.f32 %v681, %v667
    %v684 = vadd.f32 %v652, %v682
    %v685 = vadd.f32 %v653, %v683
    %s686 = sld [smem:[#allocation2 + $0x7b]]
    %v687 = vstv %s686
    %v688 = vmul.f32 %v687, %v666
    %v689 = vmul.f32 %v687, %v667
    %v690 = vadd.f32 %v658, %v688
    %v691 = vadd.f32 %v659, %v689
    %692 = vrot.lane.b32.xlu0 %v448, 112
    %v693 = vpop.permute.xlu0 %692
    %694 = vrot.lane.b32.xlu0 %v449, 112
    %v695 = vpop.permute.xlu0 %694
    %v696 = vsel %vm384, %v693, %v695
    %v697 = vsel %vm384, %v695, %v693
    %v698 = vmul.f32 %v696, %v142
    %v699 = vmul.f32 %v697, %v143
    %s700 = sld [smem:[#allocation2 + $0x10]]
    %v701 = vstv %s700
    %v702 = vmul.f32 %v701, %v698
    %v703 = vmul.f32 %v701, %v699
    %v704 = vadd.f32 %v672, %v702
    %v705 = vadd.f32 %v673, %v703
    %s706 = sld [smem:[#allocation2 + $0x34]]
    %v707 = vstv %s706
    %v708 = vmul.f32 %v707, %v698
    %v709 = vmul.f32 %v707, %v699
    %v710 = vadd.f32 %v678, %v708
    %v711 = vadd.f32 %v679, %v709
    %s712 = sld [smem:[#allocation2 + $0x58]]
    %v713 = vstv %s712
    %v714 = vmul.f32 %v713, %v698
    %v715 = vmul.f32 %v713, %v699
    %v716 = vadd.f32 %v684, %v714
    %v717 = vadd.f32 %v685, %v715
    %s718 = sld [smem:[#allocation2 + $0x7c]]
    %v719 = vstv %s718
    %v720 = vmul.f32 %v719, %v698
    %v721 = vmul.f32 %v719, %v699
    %v722 = vadd.f32 %v690, %v720
    %v723 = vadd.f32 %v691, %v721
    %724 = vrot.lane.b32.xlu0 %v448, 111
    %v725 = vpop.permute.xlu0 %724
    %726 = vrot.lane.b32.xlu0 %v449, 111
    %v727 = vpop.permute.xlu0 %726
    %v728 = vsel %vm417, %v725, %v727
    %v729 = vsel %vm417, %v727, %v725
    %v730 = vmul.f32 %v728, %v148
    %v731 = vmul.f32 %v729, %v149
    %s732 = sld [smem:[#allocation2 + $0x11]]
    %v733 = vstv %s732
    %v734 = vmul.f32 %v733, %v730
    %v735 = vmul.f32 %v733, %v731
    %v736 = vadd.f32 %v704, %v734
    %v737 = vadd.f32 %v705, %v735
    %s738 = sld [smem:[#allocation2 + $0x35]]
    %v739 = vstv %s738
    %v740 = vmul.f32 %v739, %v730
    %v741 = vmul.f32 %v739, %v731
    %v742 = vadd.f32 %v710, %v740
    %v743 = vadd.f32 %v711, %v741
    %s744 = sld [smem:[#allocation2 + $0x59]]
    %v745 = vstv %s744
    %v746 = vmul.f32 %v745, %v730
    %v747 = vmul.f32 %v745, %v731
    %v748 = vadd.f32 %v716, %v746
    %v749 = vadd.f32 %v717, %v747
    %s750 = sld [smem:[#allocation2 + $0x7d]]
    %v751 = vstv %s750
    %v752 = vmul.f32 %v751, %v730
    %v753 = vmul.f32 %v751, %v731
    %v754 = vadd.f32 %v722, %v752
    %v755 = vadd.f32 %v723, %v753
    %v758 = vrot.slane %v154, 4
    %v759 = vrot.slane %v155, 4
    %762 = vrot.lane.b32.xlu0 %v758, 17
    %v763 = vpop.permute.xlu0 %762
    %764 = vrot.lane.b32.xlu0 %v759, 17
    %v765 = vpop.permute.xlu0 %764
    %v766 = vsel %vm162, %v763, %v765
    %v767 = vsel %vm162, %v765, %v763
    %v768 = vmul.f32 %v767, %v114
    %v769 = vmul.f32 %v766, %v115
    %s770 = sld [smem:[#allocation2 + $0x12]]
    %v771 = vstv %s770
    %v772 = vmul.f32 %v771, %v768
    %v773 = vmul.f32 %v771, %v769
    %v774 = vadd.f32 %v736, %v772
    %v775 = vadd.f32 %v737, %v773
    %s776 = sld [smem:[#allocation2 + $0x36]]
    %v777 = vstv %s776
    %v778 = vmul.f32 %v777, %v768
    %v779 = vmul.f32 %v777, %v769
    %v780 = vadd.f32 %v742, %v778
    %v781 = vadd.f32 %v743, %v779
    %s782 = sld [smem:[#allocation2 + $0x5a]]
    %v783 = vstv %s782
    %v784 = vmul.f32 %v783, %v768
    %v785 = vmul.f32 %v783, %v769
    %v786 = vadd.f32 %v748, %v784
    %v787 = vadd.f32 %v749, %v785
    %s788 = sld [smem:[#allocation2 + $0x7e]]
    %v789 = vstv %s788
    %v790 = vmul.f32 %v789, %v768
    %v791 = vmul.f32 %v789, %v769
    %v792 = vadd.f32 %v754, %v790
    %v793 = vadd.f32 %v755, %v791
    %794 = vrot.lane.b32.xlu0 %v758, 16
    %v795 = vpop.permute.xlu0 %794
    %796 = vrot.lane.b32.xlu0 %v759, 16
    %v797 = vpop.permute.xlu0 %796
    %v798 = vsel %vm195, %v795, %v797
    %v799 = vsel %vm195, %v797, %v795
    %v800 = vmul.f32 %v799, %v118
    %v801 = vmul.f32 %v798, %v119
    %s802 = sld [smem:[#allocation2 + $0x13]]
    %v803 = vstv %s802
    %v804 = vmul.f32 %v803, %v800
    %v805 = vmul.f32 %v803, %v801
    %v806 = vadd.f32 %v774, %v804
    %v807 = vadd.f32 %v775, %v805
    %s808 = sld [smem:[#allocation2 + $0x37]]
    %v809 = vstv %s808
    %v810 = vmul.f32 %v809, %v800
    %v811 = vmul.f32 %v809, %v801
    %v812 = vadd.f32 %v780, %v810
    %v813 = vadd.f32 %v781, %v811
    %s814 = sld [smem:[#allocation2 + $0x5b]]
    %v815 = vstv %s814
    %v816 = vmul.f32 %v815, %v800
    %v817 = vmul.f32 %v815, %v801
    %v818 = vadd.f32 %v786, %v816
    %v819 = vadd.f32 %v787, %v817
    %s820 = sld [smem:[#allocation2 + $0x7f]]
    %v821 = vstv %s820
    %v822 = vmul.f32 %v821, %v800
    %v823 = vmul.f32 %v821, %v801
    %v824 = vadd.f32 %v792, %v822
    %v825 = vadd.f32 %v793, %v823
    %826 = vrot.lane.b32.xlu0 %v758, 15
    %v827 = vpop.permute.xlu0 %826
    %828 = vrot.lane.b32.xlu0 %v759, 15
    %v829 = vpop.permute.xlu0 %828
    %v830 = vsel %vm228, %v827, %v829
    %v831 = vsel %vm228, %v829, %v827
    %v832 = vmul.f32 %v831, %v124
    %v833 = vmul.f32 %v830, %v125
    %s834 = sld [smem:[#allocation2 + $0x14]]
    %v835 = vstv %s834
    %v836 = vmul.f32 %v835, %v832
    %v837 = vmul.f32 %v835, %v833
    %v838 = vadd.f32 %v806, %v836
    %v839 = vadd.f32 %v807, %v837
    %s840 = sld [smem:[#allocation2 + $0x38]]
    %v841 = vstv %s840
    %v842 = vmul.f32 %v841, %v832
    %v843 = vmul.f32 %v841, %v833
    %v844 = vadd.f32 %v812, %v842
    %v845 = vadd.f32 %v813, %v843
    %s846 = sld [smem:[#allocation2 + $0x5c]]
    %v847 = vstv %s846
    %v848 = vmul.f32 %v847, %v832
    %v849 = vmul.f32 %v847, %v833
    %v850 = vadd.f32 %v818, %v848
    %v851 = vadd.f32 %v819, %v849
    %s852 = sld [smem:[#allocation2 + $0x80]]
    %v853 = vstv %s852
    %v854 = vmul.f32 %v853, %v832
    %v855 = vmul.f32 %v853, %v833
    %v856 = vadd.f32 %v824, %v854
    %v857 = vadd.f32 %v825, %v855
    %858 = vrot.lane.b32.xlu0 %v758, 1
    %v859 = vpop.permute.xlu0 %858
    %860 = vrot.lane.b32.xlu0 %v759, 1
    %v861 = vpop.permute.xlu0 %860
    %v862 = vsel %vm261, %v859, %v861
    %v863 = vsel %vm261, %v861, %v859
    %v864 = vmul.f32 %v863, %v128
    %v865 = vmul.f32 %v862, %v129
    %s866 = sld [smem:[#allocation2 + $0x15]]
    %v867 = vstv %s866
    %v868 = vmul.f32 %v867, %v864
    %v869 = vmul.f32 %v867, %v865
    %v870 = vadd.f32 %v838, %v868
    %v871 = vadd.f32 %v839, %v869
    %s872 = sld [smem:[#allocation2 + $0x39]]
    %v873 = vstv %s872
    %v874 = vmul.f32 %v873, %v864
    %v875 = vmul.f32 %v873, %v865
    %v876 = vadd.f32 %v844, %v874
    %v877 = vadd.f32 %v845, %v875
    %s878 = sld [smem:[#allocation2 + $0x5d]]
    %v879 = vstv %s878
    %v880 = vmul.f32 %v879, %v864
    %v881 = vmul.f32 %v879, %v865
    %v882 = vadd.f32 %v850, %v880
    %v883 = vadd.f32 %v851, %v881
    %s884 = sld [smem:[#allocation2 + $0x81]]
    %v885 = vstv %s884
    %v886 = vmul.f32 %v885, %v864
    %v887 = vmul.f32 %v885, %v865
    %v888 = vadd.f32 %v856, %v886
    %v889 = vadd.f32 %v857, %v887
    %s890 = sld [smem:[#allocation2 + $0x16]]
    %v891 = vstv %s890
    %v892 = vmul.f32 %v891, %v154
    %v893 = vmul.f32 %v891, %v155
    %v896 = vrot.slane %v892, 4
    %v897 = vrot.slane %v893, 4
    %v900 = vadd.f32 %v870, %v896
    %v901 = vadd.f32 %v871, %v897
    %s902 = sld [smem:[#allocation2 + $0x3a]]
    %v903 = vstv %s902
    %v904 = vmul.f32 %v903, %v154
    %v905 = vmul.f32 %v903, %v155
    %v908 = vrot.slane %v904, 4
    %v909 = vrot.slane %v905, 4
    %v912 = vadd.f32 %v876, %v908
    %v913 = vadd.f32 %v877, %v909
    %s914 = sld [smem:[#allocation2 + $0x5e]]
    %v915 = vstv %s914
    %v916 = vmul.f32 %v915, %v154
    %v917 = vmul.f32 %v915, %v155
    %v920 = vrot.slane %v916, 4
    %v921 = vrot.slane %v917, 4
    %v924 = vadd.f32 %v882, %v920
    %v925 = vadd.f32 %v883, %v921
    %s926 = sld [smem:[#allocation2 + $0x82]]
    %v927 = vstv %s926
    %v928 = vmul.f32 %v927, %v154
    %v929 = vmul.f32 %v927, %v155
    %v932 = vrot.slane %v928, 4
    %v933 = vrot.slane %v929, 4
    %v936 = vadd.f32 %v888, %v932
    %v937 = vadd.f32 %v889, %v933
    %938 = vrot.lane.b32.xlu0 %v758, 127
    %v939 = vpop.permute.xlu0 %938
    %940 = vrot.lane.b32.xlu0 %v759, 127
    %v941 = vpop.permute.xlu0 %940
    %v942 = vsel %vm318, %v939, %v941
    %v943 = vsel %vm318, %v941, %v939
    %v944 = vmul.f32 %v942, %v132
    %v945 = vmul.f32 %v943, %v133
    %s946 = sld [smem:[#allocation2 + $0x17]]
    %v947 = vstv %s946
    %v948 = vmul.f32 %v947, %v944
    %v949 = vmul.f32 %v947, %v945
    %v950 = vadd.f32 %v900, %v948
    %v951 = vadd.f32 %v901, %v949
    %s952 = sld [smem:[#allocation2 + $0x3b]]
    %v953 = vstv %s952
    %v954 = vmul.f32 %v953, %v944
    %v955 = vmul.f32 %v953, %v945
    %v956 = vadd.f32 %v912, %v954
    %v957 = vadd.f32 %v913, %v955
    %s958 = sld [smem:[#allocation2 + $0x5f]]
    %v959 = vstv %s958
    %v960 = vmul.f32 %v959, %v944
    %v961 = vmul.f32 %v959, %v945
    %v962 = vadd.f32 %v924, %v960
    %v963 = vadd.f32 %v925, %v961
    %s964 = sld [smem:[#allocation2 + $0x83]]
    %v965 = vstv %s964
    %v966 = vmul.f32 %v965, %v944
    %v967 = vmul.f32 %v965, %v945
    %v968 = vadd.f32 %v936, %v966
    %v969 = vadd.f32 %v937, %v967
    %970 = vrot.lane.b32.xlu0 %v758, 113
    %v971 = vpop.permute.xlu0 %970
    %972 = vrot.lane.b32.xlu0 %v759, 113
    %v973 = vpop.permute.xlu0 %972
    %v974 = vsel %vm351, %v971, %v973
    %v975 = vsel %vm351, %v973, %v971
    %v976 = vmul.f32 %v974, %v138
    %v977 = vmul.f32 %v975, %v139
    %s978 = sld [smem:[#allocation2 + $0x18]]
    %v979 = vstv %s978
    %v980 = vmul.f32 %v979, %v976
    %v981 = vmul.f32 %v979, %v977
    %v982 = vadd.f32 %v950, %v980
    %v983 = vadd.f32 %v951, %v981
    %s984 = sld [smem:[#allocation2 + $0x3c]]
    %v985 = vstv %s984
    %v986 = vmul.f32 %v985, %v976
    %v987 = vmul.f32 %v985, %v977
    %v988 = vadd.f32 %v956, %v986
    %v989 = vadd.f32 %v957, %v987
    %s990 = sld [smem:[#allocation2 + $0x60]]
    %v991 = vstv %s990
    %v992 = vmul.f32 %v991, %v976
    %v993 = vmul.f32 %v991, %v977
    %v994 = vadd.f32 %v962, %v992
    %v995 = vadd.f32 %v963, %v993
    %s996 = sld [smem:[#allocation2 + $0x84]]
    %v997 = vstv %s996
    %v998 = vmul.f32 %v997, %v976
    %v999 = vmul.f32 %v997, %v977
    %v1000 = vadd.f32 %v968, %v998
    %v1001 = vadd.f32 %v969, %v999
    %1002 = vrot.lane.b32.xlu0 %v758, 112
    %v1003 = vpop.permute.xlu0 %1002
    %1004 = vrot.lane.b32.xlu0 %v759, 112
    %v1005 = vpop.permute.xlu0 %1004
    %v1006 = vsel %vm384, %v1003, %v1005
    %v1007 = vsel %vm384, %v1005, %v1003
    %v1008 = vmul.f32 %v1006, %v142
    %v1009 = vmul.f32 %v1007, %v143
    %s1010 = sld [smem:[#allocation2 + $0x19]]
    %v1011 = vstv %s1010
    %v1012 = vmul.f32 %v1011, %v1008
    %v1013 = vmul.f32 %v1011, %v1009
    %v1014 = vadd.f32 %v982, %v1012
    %v1015 = vadd.f32 %v983, %v1013
    %s1016 = sld [smem:[#allocation2 + $0x3d]]
    %v1017 = vstv %s1016
    %v1018 = vmul.f32 %v1017, %v1008
    %v1019 = vmul.f32 %v1017, %v1009
    %v1020 = vadd.f32 %v988, %v1018
    %v1021 = vadd.f32 %v989, %v1019
    %s1022 = sld [smem:[#allocation2 + $0x61]]
    %v1023 = vstv %s1022
    %v1024 = vmul.f32 %v1023, %v1008
    %v1025 = vmul.f32 %v1023, %v1009
    %v1026 = vadd.f32 %v994, %v1024
    %v1027 = vadd.f32 %v995, %v1025
    %s1028 = sld [smem:[#allocation2 + $0x85]]
    %v1029 = vstv %s1028
    %v1030 = vmul.f32 %v1029, %v1008
    %v1031 = vmul.f32 %v1029, %v1009
    %v1032 = vadd.f32 %v1000, %v1030
    %v1033 = vadd.f32 %v1001, %v1031
    %1034 = vrot.lane.b32.xlu0 %v758, 111
    %v1035 = vpop.permute.xlu0 %1034
    %1036 = vrot.lane.b32.xlu0 %v759, 111
    %v1037 = vpop.permute.xlu0 %1036
    %v1038 = vsel %vm417, %v1035, %v1037
    %v1039 = vsel %vm417, %v1037, %v1035
    %v1040 = vmul.f32 %v1038, %v148
    %v1041 = vmul.f32 %v1039, %v149
    %s1042 = sld [smem:[#allocation2 + $0x1a]]
    %v1043 = vstv %s1042
    %v1044 = vmul.f32 %v1043, %v1040
    %v1045 = vmul.f32 %v1043, %v1041
    %v1046 = vadd.f32 %v1014, %v1044
    %v1047 = vadd.f32 %v1015, %v1045
    %s1048 = sld [smem:[#allocation2 + $0x3e]]
    %v1049 = vstv %s1048
    %v1050 = vmul.f32 %v1049, %v1040
    %v1051 = vmul.f32 %v1049, %v1041
    %v1052 = vadd.f32 %v1020, %v1050
    %v1053 = vadd.f32 %v1021, %v1051
    %s1054 = sld [smem:[#allocation2 + $0x62]]
    %v1055 = vstv %s1054
    %v1056 = vmul.f32 %v1055, %v1040
    %v1057 = vmul.f32 %v1055, %v1041
    %v1058 = vadd.f32 %v1026, %v1056
    %v1059 = vadd.f32 %v1027, %v1057
    %s1060 = sld [smem:[#allocation2 + $0x86]]
    %v1061 = vstv %s1060
    %v1062 = vmul.f32 %v1061, %v1040
    %v1063 = vmul.f32 %v1061, %v1041
    %v1064 = vadd.f32 %v1032, %v1062
    %v1065 = vadd.f32 %v1033, %v1063
    %v1068 = vrot.slane %v156, 6
    %v1069 = vrot.slane %v157, 6
    %1072 = vrot.lane.b32.xlu0 %v1068, 17
    %v1073 = vpop.permute.xlu0 %1072
    %1074 = vrot.lane.b32.xlu0 %v1069, 17
    %v1075 = vpop.permute.xlu0 %1074
    %v1076 = vsel %vm162, %v1073, %v1075
    %v1077 = vsel %vm162, %v1075, %v1073
    %v1078 = vmul.f32 %v1077, %v114
    %v1079 = vmul.f32 %v1076, %v115
    %s1080 = sld [smem:[#allocation2 + $0x1b]]
    %v1081 = vstv %s1080
    %v1082 = vmul.f32 %v1081, %v1078
    %v1083 = vmul.f32 %v1081, %v1079
    %v1084 = vadd.f32 %v1046, %v1082
    %v1085 = vadd.f32 %v1047, %v1083
    %s1086 = sld [smem:[#allocation2 + $0x3f]]
    %v1087 = vstv %s1086
    %v1088 = vmul.f32 %v1087, %v1078
    %v1089 = vmul.f32 %v1087, %v1079
    %v1090 = vadd.f32 %v1052, %v1088
    %v1091 = vadd.f32 %v1053, %v1089
    %s1092 = sld [smem:[#allocation2 + $0x63]]
    %v1093 = vstv %s1092
    %v1094 = vmul.f32 %v1093, %v1078
    %v1095 = vmul.f32 %v1093, %v1079
    %v1096 = vadd.f32 %v1058, %v1094
    %v1097 = vadd.f32 %v1059, %v1095
    %s1098 = sld [smem:[#allocation2 + $0x87]]
    %v1099 = vstv %s1098
    %v1100 = vmul.f32 %v1099, %v1078
    %v1101 = vmul.f32 %v1099, %v1079
    %v1102 = vadd.f32 %v1064, %v1100
    %v1103 = vadd.f32 %v1065, %v1101
    %1104 = vrot.lane.b32.xlu0 %v1068, 16
    %v1105 = vpop.permute.xlu0 %1104
    %1106 = vrot.lane.b32.xlu0 %v1069, 16
    %v1107 = vpop.permute.xlu0 %1106
    %v1108 = vsel %vm195, %v1105, %v1107
    %v1109 = vsel %vm195, %v1107, %v1105
    %v1110 = vmul.f32 %v1109, %v118
    %v1111 = vmul.f32 %v1108, %v119
    %s1112 = sld [smem:[#allocation2 + $0x1c]]
    %v1113 = vstv %s1112
    %v1114 = vmul.f32 %v1113, %v1110
    %v1115 = vmul.f32 %v1113, %v1111
    %v1116 = vadd.f32 %v1084, %v1114
    %v1117 = vadd.f32 %v1085, %v1115
    %s1118 = sld [smem:[#allocation2 + $0x40]]
    %v1119 = vstv %s1118
    %v1120 = vmul.f32 %v1119, %v1110
    %v1121 = vmul.f32 %v1119, %v1111
    %v1122 = vadd.f32 %v1090, %v1120
    %v1123 = vadd.f32 %v1091, %v1121
    %s1124 = sld [smem:[#allocation2 + $0x64]]
    %v1125 = vstv %s1124
    %v1126 = vmul.f32 %v1125, %v1110
    %v1127 = vmul.f32 %v1125, %v1111
    %v1128 = vadd.f32 %v1096, %v1126
    %v1129 = vadd.f32 %v1097, %v1127
    %s1130 = sld [smem:[#allocation2 + $0x88]]
    %v1131 = vstv %s1130
    %v1132 = vmul.f32 %v1131, %v1110
    %v1133 = vmul.f32 %v1131, %v1111
    %v1134 = vadd.f32 %v1102, %v1132
    %v1135 = vadd.f32 %v1103, %v1133
    %1136 = vrot.lane.b32.xlu0 %v1068, 15
    %v1137 = vpop.permute.xlu0 %1136
    %1138 = vrot.lane.b32.xlu0 %v1069, 15
    %v1139 = vpop.permute.xlu0 %1138
    %v1140 = vsel %vm228, %v1137, %v1139
    %v1141 = vsel %vm228, %v1139, %v1137
    %v1142 = vmul.f32 %v1141, %v124
    %v1143 = vmul.f32 %v1140, %v125
    %s1144 = sld [smem:[#allocation2 + $0x1d]]
    %v1145 = vstv %s1144
    %v1146 = vmul.f32 %v1145, %v1142
    %v1147 = vmul.f32 %v1145, %v1143
    %v1148 = vadd.f32 %v1116, %v1146
    %v1149 = vadd.f32 %v1117, %v1147
    %s1150 = sld [smem:[#allocation2 + $0x41]]
    %v1151 = vstv %s1150
    %v1152 = vmul.f32 %v1151, %v1142
    %v1153 = vmul.f32 %v1151, %v1143
    %v1154 = vadd.f32 %v1122, %v1152
    %v1155 = vadd.f32 %v1123, %v1153
    %s1156 = sld [smem:[#allocation2 + $0x65]]
    %v1157 = vstv %s1156
    %v1158 = vmul.f32 %v1157, %v1142
    %v1159 = vmul.f32 %v1157, %v1143
    %v1160 = vadd.f32 %v1128, %v1158
    %v1161 = vadd.f32 %v1129, %v1159
    %s1162 = sld [smem:[#allocation2 + $0x89]]
    %v1163 = vstv %s1162
    %v1164 = vmul.f32 %v1163, %v1142
    %v1165 = vmul.f32 %v1163, %v1143
    %v1166 = vadd.f32 %v1134, %v1164
    %v1167 = vadd.f32 %v1135, %v1165
    %1168 = vrot.lane.b32.xlu0 %v1068, 1
    %v1169 = vpop.permute.xlu0 %1168
    %1170 = vrot.lane.b32.xlu0 %v1069, 1
    %v1171 = vpop.permute.xlu0 %1170
    %v1172 = vsel %vm261, %v1169, %v1171
    %v1173 = vsel %vm261, %v1171, %v1169
    %v1174 = vmul.f32 %v1173, %v128
    %v1175 = vmul.f32 %v1172, %v129
    %s1176 = sld [smem:[#allocation2 + $0x1e]]
    %v1177 = vstv %s1176
    %v1178 = vmul.f32 %v1177, %v1174
    %v1179 = vmul.f32 %v1177, %v1175
    %v1180 = vadd.f32 %v1148, %v1178
    %v1181 = vadd.f32 %v1149, %v1179
    %s1182 = sld [smem:[#allocation2 + $0x42]]
    %v1183 = vstv %s1182
    %v1184 = vmul.f32 %v1183, %v1174
    %v1185 = vmul.f32 %v1183, %v1175
    %v1186 = vadd.f32 %v1154, %v1184
    %v1187 = vadd.f32 %v1155, %v1185
    %s1188 = sld [smem:[#allocation2 + $0x66]]
    %v1189 = vstv %s1188
    %v1190 = vmul.f32 %v1189, %v1174
    %v1191 = vmul.f32 %v1189, %v1175
    %v1192 = vadd.f32 %v1160, %v1190
    %v1193 = vadd.f32 %v1161, %v1191
    %s1194 = sld [smem:[#allocation2 + $0x8a]]
    %v1195 = vstv %s1194
    %v1196 = vmul.f32 %v1195, %v1174
    %v1197 = vmul.f32 %v1195, %v1175
    %v1198 = vadd.f32 %v1166, %v1196
    %v1199 = vadd.f32 %v1167, %v1197
    %s1200 = sld [smem:[#allocation2 + $0x1f]]
    %v1201 = vstv %s1200
    %v1202 = vmul.f32 %v1201, %v156
    %v1203 = vmul.f32 %v1201, %v157
    %v1206 = vrot.slane %v1202, 6
    %v1207 = vrot.slane %v1203, 6
    %v1210 = vadd.f32 %v1180, %v1206
    %v1211 = vadd.f32 %v1181, %v1207
    %s1212 = sld [smem:[#allocation2 + $0x43]]
    %v1213 = vstv %s1212
    %v1214 = vmul.f32 %v1213, %v156
    %v1215 = vmul.f32 %v1213, %v157
    %v1218 = vrot.slane %v1214, 6
    %v1219 = vrot.slane %v1215, 6
    %v1222 = vadd.f32 %v1186, %v1218
    %v1223 = vadd.f32 %v1187, %v1219
    %s1224 = sld [smem:[#allocation2 + $0x67]]
    %v1225 = vstv %s1224
    %v1226 = vmul.f32 %v1225, %v156
    %v1227 = vmul.f32 %v1225, %v157
    %v1230 = vrot.slane %v1226, 6
    %v1231 = vrot.slane %v1227, 6
    %v1234 = vadd.f32 %v1192, %v1230
    %v1235 = vadd.f32 %v1193, %v1231
    %s1236 = sld [smem:[#allocation2 + $0x8b]]
    %v1237 = vstv %s1236
    %v1238 = vmul.f32 %v1237, %v156
    %v1239 = vmul.f32 %v1237, %v157
    %v1242 = vrot.slane %v1238, 6
    %v1243 = vrot.slane %v1239, 6
    %v1246 = vadd.f32 %v1198, %v1242
    %v1247 = vadd.f32 %v1199, %v1243
    %1248 = vrot.lane.b32.xlu0 %v1068, 127
    %v1249 = vpop.permute.xlu0 %1248
    %1250 = vrot.lane.b32.xlu0 %v1069, 127
    %v1251 = vpop.permute.xlu0 %1250
    %v1252 = vsel %vm318, %v1249, %v1251
    %v1253 = vsel %vm318, %v1251, %v1249
    %v1254 = vmul.f32 %v1252, %v132
    %v1255 = vmul.f32 %v1253, %v133
    %s1256 = sld [smem:[#allocation2 + $0x20]]
    %v1257 = vstv %s1256
    %v1258 = vmul.f32 %v1257, %v1254
    %v1259 = vmul.f32 %v1257, %v1255
    %v1260 = vadd.f32 %v1210, %v1258
    %v1261 = vadd.f32 %v1211, %v1259
    %s1262 = sld [smem:[#allocation2 + $0x44]]
    %v1263 = vstv %s1262
    %v1264 = vmul.f32 %v1263, %v1254
    %v1265 = vmul.f32 %v1263, %v1255
    %v1266 = vadd.f32 %v1222, %v1264
    %v1267 = vadd.f32 %v1223, %v1265
    %s1268 = sld [smem:[#allocation2 + $0x68]]
    %v1269 = vstv %s1268
    %v1270 = vmul.f32 %v1269, %v1254
    %v1271 = vmul.f32 %v1269, %v1255
    %v1272 = vadd.f32 %v1234, %v1270
    %v1273 = vadd.f32 %v1235, %v1271
    %s1274 = sld [smem:[#allocation2 + $0x8c]]
    %v1275 = vstv %s1274
    %v1276 = vmul.f32 %v1275, %v1254
    %v1277 = vmul.f32 %v1275, %v1255
    %v1278 = vadd.f32 %v1246, %v1276
    %v1279 = vadd.f32 %v1247, %v1277
    %1280 = vrot.lane.b32.xlu0 %v1068, 113
    %v1281 = vpop.permute.xlu0 %1280
    %1282 = vrot.lane.b32.xlu0 %v1069, 113
    %v1283 = vpop.permute.xlu0 %1282
    %v1284 = vsel %vm351, %v1281, %v1283
    %v1285 = vsel %vm351, %v1283, %v1281
    %v1286 = vmul.f32 %v1284, %v138
    %v1287 = vmul.f32 %v1285, %v139
    %s1288 = sld [smem:[#allocation2 + $0x21]]
    %v1289 = vstv %s1288
    %v1290 = vmul.f32 %v1289, %v1286
    %v1291 = vmul.f32 %v1289, %v1287
    %v1292 = vadd.f32 %v1260, %v1290
    %v1293 = vadd.f32 %v1261, %v1291
    %s1294 = sld [smem:[#allocation2 + $0x45]]
    %v1295 = vstv %s1294
    %v1296 = vmul.f32 %v1295, %v1286
    %v1297 = vmul.f32 %v1295, %v1287
    %v1298 = vadd.f32 %v1266, %v1296
    %v1299 = vadd.f32 %v1267, %v1297
    %s1300 = sld [smem:[#allocation2 + $0x69]]
    %v1301 = vstv %s1300
    %v1302 = vmul.f32 %v1301, %v1286
    %v1303 = vmul.f32 %v1301, %v1287
    %v1304 = vadd.f32 %v1272, %v1302
    %v1305 = vadd.f32 %v1273, %v1303
    %s1306 = sld [smem:[#allocation2 + $0x8d]]
    %v1307 = vstv %s1306
    %v1308 = vmul.f32 %v1307, %v1286
    %v1309 = vmul.f32 %v1307, %v1287
    %v1310 = vadd.f32 %v1278, %v1308
    %v1311 = vadd.f32 %v1279, %v1309
    %1312 = vrot.lane.b32.xlu0 %v1068, 112
    %v1313 = vpop.permute.xlu0 %1312
    %1314 = vrot.lane.b32.xlu0 %v1069, 112
    %v1315 = vpop.permute.xlu0 %1314
    %v1316 = vsel %vm384, %v1313, %v1315
    %v1317 = vsel %vm384, %v1315, %v1313
    %v1318 = vmul.f32 %v1316, %v142
    %v1319 = vmul.f32 %v1317, %v143
    %s1320 = sld [smem:[#allocation2 + $0x22]]
    %v1321 = vstv %s1320
    %v1322 = vmul.f32 %v1321, %v1318
    %v1323 = vmul.f32 %v1321, %v1319
    %v1324 = vadd.f32 %v1292, %v1322
    %v1325 = vadd.f32 %v1293, %v1323
    %s1326 = sld [smem:[#allocation2 + $0x46]]
    %v1327 = vstv %s1326
    %v1328 = vmul.f32 %v1327, %v1318
    %v1329 = vmul.f32 %v1327, %v1319
    %v1330 = vadd.f32 %v1298, %v1328
    %v1331 = vadd.f32 %v1299, %v1329
    %s1332 = sld [smem:[#allocation2 + $0x6a]]
    %v1333 = vstv %s1332
    %v1334 = vmul.f32 %v1333, %v1318
    %v1335 = vmul.f32 %v1333, %v1319
    %v1336 = vadd.f32 %v1304, %v1334
    %v1337 = vadd.f32 %v1305, %v1335
    %s1338 = sld [smem:[#allocation2 + $0x8e]]
    %v1339 = vstv %s1338
    %v1340 = vmul.f32 %v1339, %v1318
    %v1341 = vmul.f32 %v1339, %v1319
    %v1342 = vadd.f32 %v1310, %v1340
    %v1343 = vadd.f32 %v1311, %v1341
    %1344 = vrot.lane.b32.xlu0 %v1068, 111
    %v1345 = vpop.permute.xlu0 %1344
    %1346 = vrot.lane.b32.xlu0 %v1069, 111
    %v1347 = vpop.permute.xlu0 %1346
    %v1348 = vsel %vm417, %v1345, %v1347
    %v1349 = vsel %vm417, %v1347, %v1345
    %v1350 = vmul.f32 %v1348, %v148
    %v1351 = vmul.f32 %v1349, %v149
    %s1352 = sld [smem:[#allocation2 + $0x23]]
    %v1353 = vstv %s1352
    %v1354 = vmul.f32 %v1353, %v1350
    %v1355 = vmul.f32 %v1353, %v1351
    %v1356 = vadd.f32 %v1324, %v1354
    %v1357 = vadd.f32 %v1325, %v1355
    %s1358 = sld [smem:[#allocation2 + $0x47]]
    %v1359 = vstv %s1358
    %v1360 = vmul.f32 %v1359, %v1350
    %v1361 = vmul.f32 %v1359, %v1351
    %v1362 = vadd.f32 %v1330, %v1360
    %v1363 = vadd.f32 %v1331, %v1361
    %s1364 = sld [smem:[#allocation2 + $0x6b]]
    %v1365 = vstv %s1364
    %v1366 = vmul.f32 %v1365, %v1350
    %v1367 = vmul.f32 %v1365, %v1351
    %v1368 = vadd.f32 %v1336, %v1366
    %v1369 = vadd.f32 %v1337, %v1367
    %s1370 = sld [smem:[#allocation2 + $0x8f]]
    %v1371 = vstv %s1370
    %v1372 = vmul.f32 %v1371, %v1350
    %v1373 = vmul.f32 %v1371, %v1351
    %v1374 = vadd.f32 %v1342, %v1372
    %v1375 = vadd.f32 %v1343, %v1373
    %vm1376 = vcmask 1041408
    %v1377 = vsel %vm1376, %v1356, 0.0
    %v1378 = vsel %vm1376, %v1357, 0.0
    %v1379 = vadd.f32 %v1377, %v1378
    %1380 = vadd.xlane.f32.xlu0 %v1379
    %v1381 = vpop.xlane.xlu0 %1380
    %v1382 = vsel %vm1376, %v1381, 0.0
    %v1383 = vrot.slane %v1382, 4
    %v1384 = vadd.f32 %v1382, %v1383
    %v1385 = vrot.slane %v1384, 2
    %v1386 = vadd.f32 %v1384, %v1385
    %v1387 = vrot.slane %v1386, 1
    %v1388 = vadd.f32 %v1386, %v1387
    %v1389 = vmul.f32 %v1356, %v1356
    %v1390 = vmul.f32 %v1357, %v1357
    %v1391 = vsel %vm1376, %v1389, 0.0
    %v1392 = vsel %vm1376, %v1390, 0.0
    %v1393 = vadd.f32 %v1391, %v1392
    %1394 = vadd.xlane.f32.xlu0 %v1393
    %v1395 = vpop.xlane.xlu0 %1394
    %v1396 = vsel %vm1376, %v1395, 0.0
    %v1397 = vrot.slane %v1396, 4
    %v1398 = vadd.f32 %v1396, %v1397
    %v1399 = vrot.slane %v1398, 2
    %v1400 = vadd.f32 %v1398, %v1399
    %v1401 = vrot.slane %v1400, 1
    %v1402 = vadd.f32 %v1400, %v1401
    %v1403 = vmul.f32 %v1388, 0.001953125
    %v1404 = vmul.f32 %v1402, 0.001953125
    %v1405 = vmul.f32 %v1403, %v1403
    %v1406 = vsub.f32 %v1404, %v1405
    %s1407 = sld [smem:[#allocation4]]
    %v1408 = vadd.f32 %v1406, 1e-05
    %v1409 = vrsqrt.pop %v1408
    %v1410 = vstv %s1407
    %v1411 = vmul.f32 %v1410, %v1409
    %s1412 = sld [smem:[#allocation6]]
    %v1413 = vmul.f32 %v1403, %v1411
    %v1414 = vstv %s1412
    %v1415 = vsub.f32 %v1414, %v1413
    %v1416 = vmul.f32 %v1356, %v1411
    %v1417 = vmul.f32 %v1357, %v1411
    %v1418 = vadd.f32 %v1416, %v1415
    %v1419 = vadd.f32 %v1417, %v1415
    %v1420 = vmax.f32 %v1418, 0.0
    %v1421 = vmax.f32 %v1419, 0.0
    %v1422 = vsel %vm1376, %v1362, 0.0
    %v1423 = vsel %vm1376, %v1363, 0.0
    %v1424 = vadd.f32 %v1422, %v1423
    %1425 = vadd.xlane.f32.xlu0 %v1424
    %v1426 = vpop.xlane.xlu0 %1425
    %v1427 = vsel %vm1376, %v1426, 0.0
    %v1428 = vrot.slane %v1427, 4
    %v1429 = vadd.f32 %v1427, %v1428
    %v1430 = vrot.slane %v1429, 2
    %v1431 = vadd.f32 %v1429, %v1430
    %v1432 = vrot.slane %v1431, 1
    %v1433 = vadd.f32 %v1431, %v1432
    %v1434 = vmul.f32 %v1362, %v1362
    %v1435 = vmul.f32 %v1363, %v1363
    %v1436 = vsel %vm1376, %v1434, 0.0
    %v1437 = vsel %vm1376, %v1435, 0.0
    %v1438 = vadd.f32 %v1436, %v1437
    %1439 = vadd.xlane.f32.xlu0 %v1438
    %v1440 = vpop.xlane.xlu0 %1439
    %v1441 = vsel %vm1376, %v1440, 0.0
    %v1442 = vrot.slane %v1441, 4
    %v1443 = vadd.f32 %v1441, %v1442
    %v1444 = vrot.slane %v1443, 2
    %v1445 = vadd.f32 %v1443, %v1444
    %v1446 = vrot.slane %v1445, 1
    %v1447 = vadd.f32 %v1445, %v1446
    %v1448 = vmul.f32 %v1433, 0.001953125
    %v1449 = vmul.f32 %v1447, 0.001953125
    %v1450 = vmul.f32 %v1448, %v1448
    %v1451 = vsub.f32 %v1449, %v1450
    %s1452 = sld [smem:[#allocation4 + $0x1]]
    %v1453 = vadd.f32 %v1451, 1e-05
    %v1454 = vrsqrt.pop %v1453
    %v1455 = vstv %s1452
    %v1456 = vmul.f32 %v1455, %v1454
    %s1457 = sld [smem:[#allocation6 + $0x1]]
    %v1458 = vmul.f32 %v1448, %v1456
    %v1459 = vstv %s1457
    %v1460 = vsub.f32 %v1459, %v1458
    %v1461 = vmul.f32 %v1362, %v1456
    %v1462 = vmul.f32 %v1363, %v1456
    %v1463 = vadd.f32 %v1461, %v1460
    %v1464 = vadd.f32 %v1462, %v1460
    %v1465 = vmax.f32 %v1463, 0.0
    %v1466 = vmax.f32 %v1464, 0.0
    %v1467 = vsel %vm1376, %v1368, 0.0
    %v1468 = vsel %vm1376, %v1369, 0.0
    %v1469 = vadd.f32 %v1467, %v1468
    %1470 = vadd.xlane.f32.xlu0 %v1469
    %v1471 = vpop.xlane.xlu0 %1470
    %v1472 = vsel %vm1376, %v1471, 0.0
    %v1473 = vrot.slane %v1472, 4
    %v1474 = vadd.f32 %v1472, %v1473
    %v1475 = vrot.slane %v1474, 2
    %v1476 = vadd.f32 %v1474, %v1475
    %v1477 = vrot.slane %v1476, 1
    %v1478 = vadd.f32 %v1476, %v1477
    %v1479 = vmul.f32 %v1368, %v1368
    %v1480 = vmul.f32 %v1369, %v1369
    %v1481 = vsel %vm1376, %v1479, 0.0
    %v1482 = vsel %vm1376, %v1480, 0.0
    %v1483 = vadd.f32 %v1481, %v1482
    %1484 = vadd.xlane.f32.xlu0 %v1483
    %v1485 = vpop.xlane.xlu0 %1484
    %v1486 = vsel %vm1376, %v1485, 0.0
    %v1487 = vrot.slane %v1486, 4
    %v1488 = vadd.f32 %v1486, %v1487
    %v1489 = vrot.slane %v1488, 2
    %v1490 = vadd.f32 %v1488, %v1489
    %v1491 = vrot.slane %v1490, 1
    %v1492 = vadd.f32 %v1490, %v1491
    %v1493 = vmul.f32 %v1478, 0.001953125
    %v1494 = vmul.f32 %v1492, 0.001953125
    %v1495 = vmul.f32 %v1493, %v1493
    %v1496 = vsub.f32 %v1494, %v1495
    %s1497 = sld [smem:[#allocation4 + $0x2]]
    %v1498 = vadd.f32 %v1496, 1e-05
    %v1499 = vrsqrt.pop %v1498
    %v1500 = vstv %s1497
    %v1501 = vmul.f32 %v1500, %v1499
    %s1502 = sld [smem:[#allocation6 + $0x2]]
    %v1503 = vmul.f32 %v1493, %v1501
    %v1504 = vstv %s1502
    %v1505 = vsub.f32 %v1504, %v1503
    %v1506 = vmul.f32 %v1368, %v1501
    %v1507 = vmul.f32 %v1369, %v1501
    %v1508 = vadd.f32 %v1506, %v1505
    %v1509 = vadd.f32 %v1507, %v1505
    %v1510 = vmax.f32 %v1508, 0.0
    %v1511 = vmax.f32 %v1509, 0.0
    %v1512 = vsel %vm1376, %v1374, 0.0
    %v1513 = vsel %vm1376, %v1375, 0.0
    %v1514 = vadd.f32 %v1512, %v1513
    %1515 = vadd.xlane.f32.xlu0 %v1514
    %v1516 = vpop.xlane.xlu0 %1515
    %v1517 = vsel %vm1376, %v1516, 0.0
    %v1518 = vrot.slane %v1517, 4
    %v1519 = vadd.f32 %v1517, %v1518
    %v1520 = vrot.slane %v1519, 2
    %v1521 = vadd.f32 %v1519, %v1520
    %v1522 = vrot.slane %v1521, 1
    %v1523 = vadd.f32 %v1521, %v1522
    %v1524 = vmul.f32 %v1374, %v1374
    %v1525 = vmul.f32 %v1375, %v1375
    %v1526 = vsel %vm1376, %v1524, 0.0
    %v1527 = vsel %vm1376, %v1525, 0.0
    %v1528 = vadd.f32 %v1526, %v1527
    %1529 = vadd.xlane.f32.xlu0 %v1528
    %v1530 = vpop.xlane.xlu0 %1529
    %v1531 = vsel %vm1376, %v1530, 0.0
    %v1532 = vrot.slane %v1531, 4
    %v1533 = vadd.f32 %v1531, %v1532
    %v1534 = vrot.slane %v1533, 2
    %v1535 = vadd.f32 %v1533, %v1534
    %v1536 = vrot.slane %v1535, 1
    %v1537 = vadd.f32 %v1535, %v1536
    %v1538 = vmul.f32 %v1523, 0.001953125
    %v1539 = vmul.f32 %v1537, 0.001953125
    %v1540 = vmul.f32 %v1538, %v1538
    %v1541 = vsub.f32 %v1539, %v1540
    %s1542 = sld [smem:[#allocation4 + $0x3]]
    %v1543 = vadd.f32 %v1541, 1e-05
    %v1544 = vrsqrt.pop %v1543
    %v1545 = vstv %s1542
    %v1546 = vmul.f32 %v1545, %v1544
    %s1547 = sld [smem:[#allocation6 + $0x3]]
    %v1548 = vmul.f32 %v1538, %v1546
    %v1549 = vstv %s1547
    %v1550 = vsub.f32 %v1549, %v1548
    %v1551 = vmul.f32 %v1374, %v1546
    %v1552 = vmul.f32 %v1375, %v1546
    %v1553 = vadd.f32 %v1551, %v1550
    %v1554 = vadd.f32 %v1552, %v1550
    %v1555 = vmax.f32 %v1553, 0.0
    %v1556 = vmax.f32 %v1554, 0.0
    %1557 = vrot.lane.b32.xlu0 %v1420, 17
    %v1558 = vpop.permute.xlu0 %1557
    %1559 = vrot.lane.b32.xlu0 %v1421, 17
    %v1560 = vpop.permute.xlu0 %1559
    %v1561 = vsel %vm162, %v1558, %v1560
    %v1562 = vsel %vm162, %v1560, %v1558
    %v1563 = vmul.f32 %v1562, %v114
    %v1564 = vmul.f32 %v1561, %v115
    %s1565 = sld [smem:[#allocation7]]
    %v1566 = vstv %s1565
    %v1567 = vmul.f32 %v1566, %v1563
    %v1568 = vmul.f32 %v1566, %v1564
    %v1569 = vadd.f32 %v1567, 0.0
    %v1570 = vadd.f32 %v1568, 0.0
    %s1571 = sld [smem:[#allocation7 + $0x24]]
    %v1572 = vstv %s1571
    %v1573 = vmul.f32 %v1572, %v1563
    %v1574 = vmul.f32 %v1572, %v1564
    %v1575 = vadd.f32 %v1573, 0.0
    %v1576 = vadd.f32 %v1574, 0.0
    %s1577 = sld [smem:[#allocation7 + $0x48]]
    %v1578 = vstv %s1577
    %v1579 = vmul.f32 %v1578, %v1563
    %v1580 = vmul.f32 %v1578, %v1564
    %v1581 = vadd.f32 %v1579, 0.0
    %v1582 = vadd.f32 %v1580, 0.0
    %s1583 = sld [smem:[#allocation7 + $0x6c]]
    %v1584 = vstv %s1583
    %v1585 = vmul.f32 %v1584, %v1563
    %v1586 = vmul.f32 %v1584, %v1564
    %v1587 = vadd.f32 %v1585, 0.0
    %v1588 = vadd.f32 %v1586, 0.0
    %1589 = vrot.lane.b32.xlu0 %v1420, 16
    %v1590 = vpop.permute.xlu0 %1589
    %1591 = vrot.lane.b32.xlu0 %v1421, 16
    %v1592 = vpop.permute.xlu0 %1591
    %v1593 = vsel %vm195, %v1590, %v1592
    %v1594 = vsel %vm195, %v1592, %v1590
    %v1595 = vmul.f32 %v1594, %v118
    %v1596 = vmul.f32 %v1593, %v119
    %s1597 = sld [smem:[#allocation7 + $0x1]]
    %v1598 = vstv %s1597
    %v1599 = vmul.f32 %v1598, %v1595
    %v1600 = vmul.f32 %v1598, %v1596
    %v1601 = vadd.f32 %v1569, %v1599
    %v1602 = vadd.f32 %v1570, %v1600
    %s1603 = sld [smem:[#allocation7 + $0x25]]
    %v1604 = vstv %s1603
    %v1605 = vmul.f32 %v1604, %v1595
    %v1606 = vmul.f32 %v1604, %v1596
    %v1607 = vadd.f32 %v1575, %v1605
    %v1608 = vadd.f32 %v1576, %v1606
    %s1609 = sld [smem:[#allocation7 + $0x49]]
    %v1610 = vstv %s1609
    %v1611 = vmul.f32 %v1610, %v1595
    %v1612 = vmul.f32 %v1610, %v1596
    %v1613 = vadd.f32 %v1581, %v1611
    %v1614 = vadd.f32 %v1582, %v1612
    %s1615 = sld [smem:[#allocation7 + $0x6d]]
    %v1616 = vstv %s1615
    %v1617 = vmul.f32 %v1616, %v1595
    %v1618 = vmul.f32 %v1616, %v1596
    %v1619 = vadd.f32 %v1587, %v1617
    %v1620 = vadd.f32 %v1588, %v1618
    %1621 = vrot.lane.b32.xlu0 %v1420, 15
    %v1622 = vpop.permute.xlu0 %1621
    %1623 = vrot.lane.b32.xlu0 %v1421, 15
    %v1624 = vpop.permute.xlu0 %1623
    %v1625 = vsel %vm228, %v1622, %v1624
    %v1626 = vsel %vm228, %v1624, %v1622
    %v1627 = vmul.f32 %v1626, %v124
    %v1628 = vmul.f32 %v1625, %v125
    %s1629 = sld [smem:[#allocation7 + $0x2]]
    %v1630 = vstv %s1629
    %v1631 = vmul.f32 %v1630, %v1627
    %v1632 = vmul.f32 %v1630, %v1628
    %v1633 = vadd.f32 %v1601, %v1631
    %v1634 = vadd.f32 %v1602, %v1632
    %s1635 = sld [smem:[#allocation7 + $0x26]]
    %v1636 = vstv %s1635
    %v1637 = vmul.f32 %v1636, %v1627
    %v1638 = vmul.f32 %v1636, %v1628
    %v1639 = vadd.f32 %v1607, %v1637
    %v1640 = vadd.f32 %v1608, %v1638
    %s1641 = sld [smem:[#allocation7 + $0x4a]]
    %v1642 = vstv %s1641
    %v1643 = vmul.f32 %v1642, %v1627
    %v1644 = vmul.f32 %v1642, %v1628
    %v1645 = vadd.f32 %v1613, %v1643
    %v1646 = vadd.f32 %v1614, %v1644
    %s1647 = sld [smem:[#allocation7 + $0x6e]]
    %v1648 = vstv %s1647
    %v1649 = vmul.f32 %v1648, %v1627
    %v1650 = vmul.f32 %v1648, %v1628
    %v1651 = vadd.f32 %v1619, %v1649
    %v1652 = vadd.f32 %v1620, %v1650
    %1653 = vrot.lane.b32.xlu0 %v1420, 1
    %v1654 = vpop.permute.xlu0 %1653
    %1655 = vrot.lane.b32.xlu0 %v1421, 1
    %v1656 = vpop.permute.xlu0 %1655
    %v1657 = vsel %vm261, %v1654, %v1656
    %v1658 = vsel %vm261, %v1656, %v1654
    %v1659 = vmul.f32 %v1658, %v128
    %v1660 = vmul.f32 %v1657, %v129
    %s1661 = sld [smem:[#allocation7 + $0x3]]
    %v1662 = vstv %s1661
    %v1663 = vmul.f32 %v1662, %v1659
    %v1664 = vmul.f32 %v1662, %v1660
    %v1665 = vadd.f32 %v1633, %v1663
    %v1666 = vadd.f32 %v1634, %v1664
    %s1667 = sld [smem:[#allocation7 + $0x27]]
    %v1668 = vstv %s1667
    %v1669 = vmul.f32 %v1668, %v1659
    %v1670 = vmul.f32 %v1668, %v1660
    %v1671 = vadd.f32 %v1639, %v1669
    %v1672 = vadd.f32 %v1640, %v1670
    %s1673 = sld [smem:[#allocation7 + $0x4b]]
    %v1674 = vstv %s1673
    %v1675 = vmul.f32 %v1674, %v1659
    %v1676 = vmul.f32 %v1674, %v1660
    %v1677 = vadd.f32 %v1645, %v1675
    %v1678 = vadd.f32 %v1646, %v1676
    %s1679 = sld [smem:[#allocation7 + $0x6f]]
    %v1680 = vstv %s1679
    %v1681 = vmul.f32 %v1680, %v1659
    %v1682 = vmul.f32 %v1680, %v1660
    %v1683 = vadd.f32 %v1651, %v1681
    %v1684 = vadd.f32 %v1652, %v1682
    %s1685 = sld [smem:[#allocation7 + $0x4]]
    %v1686 = vstv %s1685
    %v1687 = vmul.f32 %v1686, %v1420
    %v1688 = vmul.f32 %v1686, %v1421
    %v1689 = vadd.f32 %v1665, %v1687
    %v1690 = vadd.f32 %v1666, %v1688
    %s1691 = sld [smem:[#allocation7 + $0x28]]
    %v1692 = vstv %s1691
    %v1693 = vmul.f32 %v1692, %v1420
    %v1694 = vmul.f32 %v1692, %v1421
    %v1695 = vadd.f32 %v1671, %v1693
    %v1696 = vadd.f32 %v1672, %v1694
    %s1697 = sld [smem:[#allocation7 + $0x4c]]
    %v1698 = vstv %s1697
    %v1699 = vmul.f32 %v1698, %v1420
    %v1700 = vmul.f32 %v1698, %v1421
    %v1701 = vadd.f32 %v1677, %v1699
    %v1702 = vadd.f32 %v1678, %v1700
    %s1703 = sld [smem:[#allocation7 + $0x70]]
    %v1704 = vstv %s1703
    %v1705 = vmul.f32 %v1704, %v1420
    %v1706 = vmul.f32 %v1704, %v1421
    %v1707 = vadd.f32 %v1683, %v1705
    %v1708 = vadd.f32 %v1684, %v1706
    %1709 = vrot.lane.b32.xlu0 %v1420, 127
    %v1710 = vpop.permute.xlu0 %1709
    %1711 = vrot.lane.b32.xlu0 %v1421, 127
    %v1712 = vpop.permute.xlu0 %1711
    %v1713 = vsel %vm318, %v1710, %v1712
    %v1714 = vsel %vm318, %v1712, %v1710
    %v1715 = vmul.f32 %v1713, %v132
    %v1716 = vmul.f32 %v1714, %v133
    %s1717 = sld [smem:[#allocation7 + $0x5]]
    %v1718 = vstv %s1717
    %v1719 = vmul.f32 %v1718, %v1715
    %v1720 = vmul.f32 %v1718, %v1716
    %v1721 = vadd.f32 %v1689, %v1719
    %v1722 = vadd.f32 %v1690, %v1720
    %s1723 = sld [smem:[#allocation7 + $0x29]]
    %v1724 = vstv %s1723
    %v1725 = vmul.f32 %v1724, %v1715
    %v1726 = vmul.f32 %v1724, %v1716
    %v1727 = vadd.f32 %v1695, %v1725
    %v1728 = vadd.f32 %v1696, %v1726
    %s1729 = sld [smem:[#allocation7 + $0x4d]]
    %v1730 = vstv %s1729
    %v1731 = vmul.f32 %v1730, %v1715
    %v1732 = vmul.f32 %v1730, %v1716
    %v1733 = vadd.f32 %v1701, %v1731
    %v1734 = vadd.f32 %v1702, %v1732
    %s1735 = sld [smem:[#allocation7 + $0x71]]
    %v1736 = vstv %s1735
    %v1737 = vmul.f32 %v1736, %v1715
    %v1738 = vmul.f32 %v1736, %v1716
    %v1739 = vadd.f32 %v1707, %v1737
    %v1740 = vadd.f32 %v1708, %v1738
    %1741 = vrot.lane.b32.xlu0 %v1420, 113
    %v1742 = vpop.permute.xlu0 %1741
    %1743 = vrot.lane.b32.xlu0 %v1421, 113
    %v1744 = vpop.permute.xlu0 %1743
    %v1745 = vsel %vm351, %v1742, %v1744
    %v1746 = vsel %vm351, %v1744, %v1742
    %v1747 = vmul.f32 %v1745, %v138
    %v1748 = vmul.f32 %v1746, %v139
    %s1749 = sld [smem:[#allocation7 + $0x6]]
    %v1750 = vstv %s1749
    %v1751 = vmul.f32 %v1750, %v1747
    %v1752 = vmul.f32 %v1750, %v1748
    %v1753 = vadd.f32 %v1721, %v1751
    %v1754 = vadd.f32 %v1722, %v1752
    %s1755 = sld [smem:[#allocation7 + $0x2a]]
    %v1756 = vstv %s1755
    %v1757 = vmul.f32 %v1756, %v1747
    %v1758 = vmul.f32 %v1756, %v1748
    %v1759 = vadd.f32 %v1727, %v1757
    %v1760 = vadd.f32 %v1728, %v1758
    %s1761 = sld [smem:[#allocation7 + $0x4e]]
    %v1762 = vstv %s1761
    %v1763 = vmul.f32 %v1762, %v1747
    %v1764 = vmul.f32 %v1762, %v1748
    %v1765 = vadd.f32 %v1733, %v1763
    %v1766 = vadd.f32 %v1734, %v1764
    %s1767 = sld [smem:[#allocation7 + $0x72]]
    %v1768 = vstv %s1767
    %v1769 = vmul.f32 %v1768, %v1747
    %v1770 = vmul.f32 %v1768, %v1748
    %v1771 = vadd.f32 %v1739, %v1769
    %v1772 = vadd.f32 %v1740, %v1770
    %1773 = vrot.lane.b32.xlu0 %v1420, 112
    %v1774 = vpop.permute.xlu0 %1773
    %1775 = vrot.lane.b32.xlu0 %v1421, 112
    %v1776 = vpop.permute.xlu0 %1775
    %v1777 = vsel %vm384, %v1774, %v1776
    %v1778 = vsel %vm384, %v1776, %v1774
    %v1779 = vmul.f32 %v1777, %v142
    %v1780 = vmul.f32 %v1778, %v143
    %s1781 = sld [smem:[#allocation7 + $0x7]]
    %v1782 = vstv %s1781
    %v1783 = vmul.f32 %v1782, %v1779
    %v1784 = vmul.f32 %v1782, %v1780
    %v1785 = vadd.f32 %v1753, %v1783
    %v1786 = vadd.f32 %v1754, %v1784
    %s1787 = sld [smem:[#allocation7 + $0x2b]]
    %v1788 = vstv %s1787
    %v1789 = vmul.f32 %v1788, %v1779
    %v1790 = vmul.f32 %v1788, %v1780
    %v1791 = vadd.f32 %v1759, %v1789
    %v1792 = vadd.f32 %v1760, %v1790
    %s1793 = sld [smem:[#allocation7 + $0x4f]]
    %v1794 = vstv %s1793
    %v1795 = vmul.f32 %v1794, %v1779
    %v1796 = vmul.f32 %v1794, %v1780
    %v1797 = vadd.f32 %v1765, %v1795
    %v1798 = vadd.f32 %v1766, %v1796
    %s1799 = sld [smem:[#allocation7 + $0x73]]
    %v1800 = vstv %s1799
    %v1801 = vmul.f32 %v1800, %v1779
    %v1802 = vmul.f32 %v1800, %v1780
    %v1803 = vadd.f32 %v1771, %v1801
    %v1804 = vadd.f32 %v1772, %v1802
    %1805 = vrot.lane.b32.xlu0 %v1420, 111
    %v1806 = vpop.permute.xlu0 %1805
    %1807 = vrot.lane.b32.xlu0 %v1421, 111
    %v1808 = vpop.permute.xlu0 %1807
    %v1809 = vsel %vm417, %v1806, %v1808
    %v1810 = vsel %vm417, %v1808, %v1806
    %v1811 = vmul.f32 %v1809, %v148
    %v1812 = vmul.f32 %v1810, %v149
    %s1813 = sld [smem:[#allocation7 + $0x8]]
    %v1814 = vstv %s1813
    %v1815 = vmul.f32 %v1814, %v1811
    %v1816 = vmul.f32 %v1814, %v1812
    %v1817 = vadd.f32 %v1785, %v1815
    %v1818 = vadd.f32 %v1786, %v1816
    %s1819 = sld [smem:[#allocation7 + $0x2c]]
    %v1820 = vstv %s1819
    %v1821 = vmul.f32 %v1820, %v1811
    %v1822 = vmul.f32 %v1820, %v1812
    %v1823 = vadd.f32 %v1791, %v1821
    %v1824 = vadd.f32 %v1792, %v1822
    %s1825 = sld [smem:[#allocation7 + $0x50]]
    %v1826 = vstv %s1825
    %v1827 = vmul.f32 %v1826, %v1811
    %v1828 = vmul.f32 %v1826, %v1812
    %v1829 = vadd.f32 %v1797, %v1827
    %v1830 = vadd.f32 %v1798, %v1828
    %s1831 = sld [smem:[#allocation7 + $0x74]]
    %v1832 = vstv %s1831
    %v1833 = vmul.f32 %v1832, %v1811
    %v1834 = vmul.f32 %v1832, %v1812
    %v1835 = vadd.f32 %v1803, %v1833
    %v1836 = vadd.f32 %v1804, %v1834
    %1837 = vrot.lane.b32.xlu0 %v1465, 17
    %v1838 = vpop.permute.xlu0 %1837
    %1839 = vrot.lane.b32.xlu0 %v1466, 17
    %v1840 = vpop.permute.xlu0 %1839
    %v1841 = vsel %vm162, %v1838, %v1840
    %v1842 = vsel %vm162, %v1840, %v1838
    %v1843 = vmul.f32 %v1842, %v114
    %v1844 = vmul.f32 %v1841, %v115
    %s1845 = sld [smem:[#allocation7 + $0x9]]
    %v1846 = vstv %s1845
    %v1847 = vmul.f32 %v1846, %v1843
    %v1848 = vmul.f32 %v1846, %v1844
    %v1849 = vadd.f32 %v1817, %v1847
    %v1850 = vadd.f32 %v1818, %v1848
    %s1851 = sld [smem:[#allocation7 + $0x2d]]
    %v1852 = vstv %s1851
    %v1853 = vmul.f32 %v1852, %v1843
    %v1854 = vmul.f32 %v1852, %v1844
    %v1855 = vadd.f32 %v1823, %v1853
    %v1856 = vadd.f32 %v1824, %v1854
    %s1857 = sld [smem:[#allocation7 + $0x51]]
    %v1858 = vstv %s1857
    %v1859 = vmul.f32 %v1858, %v1843
    %v1860 = vmul.f32 %v1858, %v1844
    %v1861 = vadd.f32 %v1829, %v1859
    %v1862 = vadd.f32 %v1830, %v1860
    %s1863 = sld [smem:[#allocation7 + $0x75]]
    %v1864 = vstv %s1863
    %v1865 = vmul.f32 %v1864, %v1843
    %v1866 = vmul.f32 %v1864, %v1844
    %v1867 = vadd.f32 %v1835, %v1865
    %v1868 = vadd.f32 %v1836, %v1866
    %1869 = vrot.lane.b32.xlu0 %v1465, 16
    %v1870 = vpop.permute.xlu0 %1869
    %1871 = vrot.lane.b32.xlu0 %v1466, 16
    %v1872 = vpop.permute.xlu0 %1871
    %v1873 = vsel %vm195, %v1870, %v1872
    %v1874 = vsel %vm195, %v1872, %v1870
    %v1875 = vmul.f32 %v1874, %v118
    %v1876 = vmul.f32 %v1873, %v119
    %s1877 = sld [smem:[#allocation7 + $0xa]]
    %v1878 = vstv %s1877
    %v1879 = vmul.f32 %v1878, %v1875
    %v1880 = vmul.f32 %v1878, %v1876
    %v1881 = vadd.f32 %v1849, %v1879
    %v1882 = vadd.f32 %v1850, %v1880
    %s1883 = sld [smem:[#allocation7 + $0x2e]]
    %v1884 = vstv %s1883
    %v1885 = vmul.f32 %v1884, %v1875
    %v1886 = vmul.f32 %v1884, %v1876
    %v1887 = vadd.f32 %v1855, %v1885
    %v1888 = vadd.f32 %v1856, %v1886
    %s1889 = sld [smem:[#allocation7 + $0x52]]
    %v1890 = vstv %s1889
    %v1891 = vmul.f32 %v1890, %v1875
    %v1892 = vmul.f32 %v1890, %v1876
    %v1893 = vadd.f32 %v1861, %v1891
    %v1894 = vadd.f32 %v1862, %v1892
    %s1895 = sld [smem:[#allocation7 + $0x76]]
    %v1896 = vstv %s1895
    %v1897 = vmul.f32 %v1896, %v1875
    %v1898 = vmul.f32 %v1896, %v1876
    %v1899 = vadd.f32 %v1867, %v1897
    %v1900 = vadd.f32 %v1868, %v1898
    %1901 = vrot.lane.b32.xlu0 %v1465, 15
    %v1902 = vpop.permute.xlu0 %1901
    %1903 = vrot.lane.b32.xlu0 %v1466, 15
    %v1904 = vpop.permute.xlu0 %1903
    %v1905 = vsel %vm228, %v1902, %v1904
    %v1906 = vsel %vm228, %v1904, %v1902
    %v1907 = vmul.f32 %v1906, %v124
    %v1908 = vmul.f32 %v1905, %v125
    %s1909 = sld [smem:[#allocation7 + $0xb]]
    %v1910 = vstv %s1909
    %v1911 = vmul.f32 %v1910, %v1907
    %v1912 = vmul.f32 %v1910, %v1908
    %v1913 = vadd.f32 %v1881, %v1911
    %v1914 = vadd.f32 %v1882, %v1912
    %s1915 = sld [smem:[#allocation7 + $0x2f]]
    %v1916 = vstv %s1915
    %v1917 = vmul.f32 %v1916, %v1907
    %v1918 = vmul.f32 %v1916, %v1908
    %v1919 = vadd.f32 %v1887, %v1917
    %v1920 = vadd.f32 %v1888, %v1918
    %s1921 = sld [smem:[#allocation7 + $0x53]]
    %v1922 = vstv %s1921
    %v1923 = vmul.f32 %v1922, %v1907
    %v1924 = vmul.f32 %v1922, %v1908
    %v1925 = vadd.f32 %v1893, %v1923
    %v1926 = vadd.f32 %v1894, %v1924
    %s1927 = sld [smem:[#allocation7 + $0x77]]
    %v1928 = vstv %s1927
    %v1929 = vmul.f32 %v1928, %v1907
    %v1930 = vmul.f32 %v1928, %v1908
    %v1931 = vadd.f32 %v1899, %v1929
    %v1932 = vadd.f32 %v1900, %v1930
    %1933 = vrot.lane.b32.xlu0 %v1465, 1
    %v1934 = vpop.permute.xlu0 %1933
    %1935 = vrot.lane.b32.xlu0 %v1466, 1
    %v1936 = vpop.permute.xlu0 %1935
    %v1937 = vsel %vm261, %v1934, %v1936
    %v1938 = vsel %vm261, %v1936, %v1934
    %v1939 = vmul.f32 %v1938, %v128
    %v1940 = vmul.f32 %v1937, %v129
    %s1941 = sld [smem:[#allocation7 + $0xc]]
    %v1942 = vstv %s1941
    %v1943 = vmul.f32 %v1942, %v1939
    %v1944 = vmul.f32 %v1942, %v1940
    %v1945 = vadd.f32 %v1913, %v1943
    %v1946 = vadd.f32 %v1914, %v1944
    %s1947 = sld [smem:[#allocation7 + $0x30]]
    %v1948 = vstv %s1947
    %v1949 = vmul.f32 %v1948, %v1939
    %v1950 = vmul.f32 %v1948, %v1940
    %v1951 = vadd.f32 %v1919, %v1949
    %v1952 = vadd.f32 %v1920, %v1950
    %s1953 = sld [smem:[#allocation7 + $0x54]]
    %v1954 = vstv %s1953
    %v1955 = vmul.f32 %v1954, %v1939
    %v1956 = vmul.f32 %v1954, %v1940
    %v1957 = vadd.f32 %v1925, %v1955
    %v1958 = vadd.f32 %v1926, %v1956
    %s1959 = sld [smem:[#allocation7 + $0x78]]
    %v1960 = vstv %s1959
    %v1961 = vmul.f32 %v1960, %v1939
    %v1962 = vmul.f32 %v1960, %v1940
    %v1963 = vadd.f32 %v1931, %v1961
    %v1964 = vadd.f32 %v1932, %v1962
    %s1965 = sld [smem:[#allocation7 + $0xd]]
    %v1966 = vstv %s1965
    %v1967 = vmul.f32 %v1966, %v1465
    %v1968 = vmul.f32 %v1966, %v1466
    %v1969 = vadd.f32 %v1945, %v1967
    %v1970 = vadd.f32 %v1946, %v1968
    %s1971 = sld [smem:[#allocation7 + $0x31]]
    %v1972 = vstv %s1971
    %v1973 = vmul.f32 %v1972, %v1465
    %v1974 = vmul.f32 %v1972, %v1466
    %v1975 = vadd.f32 %v1951, %v1973
    %v1976 = vadd.f32 %v1952, %v1974
    %s1977 = sld [smem:[#allocation7 + $0x55]]
    %v1978 = vstv %s1977
    %v1979 = vmul.f32 %v1978, %v1465
    %v1980 = vmul.f32 %v1978, %v1466
    %v1981 = vadd.f32 %v1957, %v1979
    %v1982 = vadd.f32 %v1958, %v1980
    %s1983 = sld [smem:[#allocation7 + $0x79]]
    %v1984 = vstv %s1983
    %v1985 = vmul.f32 %v1984, %v1465
    %v1986 = vmul.f32 %v1984, %v1466
    %v1987 = vadd.f32 %v1963, %v1985
    %v1988 = vadd.f32 %v1964, %v1986
    %1989 = vrot.lane.b32.xlu0 %v1465, 127
    %v1990 = vpop.permute.xlu0 %1989
    %1991 = vrot.lane.b32.xlu0 %v1466, 127
    %v1992 = vpop.permute.xlu0 %1991
    %v1993 = vsel %vm318, %v1990, %v1992
    %v1994 = vsel %vm318, %v1992, %v1990
    %v1995 = vmul.f32 %v1993, %v132
    %v1996 = vmul.f32 %v1994, %v133
    %s1997 = sld [smem:[#allocation7 + $0xe]]
    %v1998 = vstv %s1997
    %v1999 = vmul.f32 %v1998, %v1995
    %v2000 = vmul.f32 %v1998, %v1996
    %v2001 = vadd.f32 %v1969, %v1999
    %v2002 = vadd.f32 %v1970, %v2000
    %s2003 = sld [smem:[#allocation7 + $0x32]]
    %v2004 = vstv %s2003
    %v2005 = vmul.f32 %v2004, %v1995
    %v2006 = vmul.f32 %v2004, %v1996
    %v2007 = vadd.f32 %v1975, %v2005
    %v2008 = vadd.f32 %v1976, %v2006
    %s2009 = sld [smem:[#allocation7 + $0x56]]
    %v2010 = vstv %s2009
    %v2011 = vmul.f32 %v2010, %v1995
    %v2012 = vmul.f32 %v2010, %v1996
    %v2013 = vadd.f32 %v1981, %v2011
    %v2014 = vadd.f32 %v1982, %v2012
    %s2015 = sld [smem:[#allocation7 + $0x7a]]
    %v2016 = vstv %s2015
    %v2017 = vmul.f32 %v2016, %v1995
    %v2018 = vmul.f32 %v2016, %v1996
    %v2019 = vadd.f32 %v1987, %v2017
    %v2020 = vadd.f32 %v1988, %v2018
    %2021 = vrot.lane.b32.xlu0 %v1465, 113
    %v2022 = vpop.permute.xlu0 %2021
    %2023 = vrot.lane.b32.xlu0 %v1466, 113
    %v2024 = vpop.permute.xlu0 %2023
    %v2025 = vsel %vm351, %v2022, %v2024
    %v2026 = vsel %vm351, %v2024, %v2022
    %v2027 = vmul.f32 %v2025, %v138
    %v2028 = vmul.f32 %v2026, %v139
    %s2029 = sld [smem:[#allocation7 + $0xf]]
    %v2030 = vstv %s2029
    %v2031 = vmul.f32 %v2030, %v2027
    %v2032 = vmul.f32 %v2030, %v2028
    %v2033 = vadd.f32 %v2001, %v2031
    %v2034 = vadd.f32 %v2002, %v2032
    %s2035 = sld [smem:[#allocation7 + $0x33]]
    %v2036 = vstv %s2035
    %v2037 = vmul.f32 %v2036, %v2027
    %v2038 = vmul.f32 %v2036, %v2028
    %v2039 = vadd.f32 %v2007, %v2037
    %v2040 = vadd.f32 %v2008, %v2038
    %s2041 = sld [smem:[#allocation7 + $0x57]]
    %v2042 = vstv %s2041
    %v2043 = vmul.f32 %v2042, %v2027
    %v2044 = vmul.f32 %v2042, %v2028
    %v2045 = vadd.f32 %v2013, %v2043
    %v2046 = vadd.f32 %v2014, %v2044
    %s2047 = sld [smem:[#allocation7 + $0x7b]]
    %v2048 = vstv %s2047
    %v2049 = vmul.f32 %v2048, %v2027
    %v2050 = vmul.f32 %v2048, %v2028
    %v2051 = vadd.f32 %v2019, %v2049
    %v2052 = vadd.f32 %v2020, %v2050
    %2053 = vrot.lane.b32.xlu0 %v1465, 112
    %v2054 = vpop.permute.xlu0 %2053
    %2055 = vrot.lane.b32.xlu0 %v1466, 112
    %v2056 = vpop.permute.xlu0 %2055
    %v2057 = vsel %vm384, %v2054, %v2056
    %v2058 = vsel %vm384, %v2056, %v2054
    %v2059 = vmul.f32 %v2057, %v142
    %v2060 = vmul.f32 %v2058, %v143
    %s2061 = sld [smem:[#allocation7 + $0x10]]
    %v2062 = vstv %s2061
    %v2063 = vmul.f32 %v2062, %v2059
    %v2064 = vmul.f32 %v2062, %v2060
    %v2065 = vadd.f32 %v2033, %v2063
    %v2066 = vadd.f32 %v2034, %v2064
    %s2067 = sld [smem:[#allocation7 + $0x34]]
    %v2068 = vstv %s2067
    %v2069 = vmul.f32 %v2068, %v2059
    %v2070 = vmul.f32 %v2068, %v2060
    %v2071 = vadd.f32 %v2039, %v2069
    %v2072 = vadd.f32 %v2040, %v2070
    %s2073 = sld [smem:[#allocation7 + $0x58]]
    %v2074 = vstv %s2073
    %v2075 = vmul.f32 %v2074, %v2059
    %v2076 = vmul.f32 %v2074, %v2060
    %v2077 = vadd.f32 %v2045, %v2075
    %v2078 = vadd.f32 %v2046, %v2076
    %s2079 = sld [smem:[#allocation7 + $0x7c]]
    %v2080 = vstv %s2079
    %v2081 = vmul.f32 %v2080, %v2059
    %v2082 = vmul.f32 %v2080, %v2060
    %v2083 = vadd.f32 %v2051, %v2081
    %v2084 = vadd.f32 %v2052, %v2082
    %2085 = vrot.lane.b32.xlu0 %v1465, 111
    %v2086 = vpop.permute.xlu0 %2085
    %2087 = vrot.lane.b32.xlu0 %v1466, 111
    %v2088 = vpop.permute.xlu0 %2087
    %v2089 = vsel %vm417, %v2086, %v2088
    %v2090 = vsel %vm417, %v2088, %v2086
    %v2091 = vmul.f32 %v2089, %v148
    %v2092 = vmul.f32 %v2090, %v149
    %s2093 = sld [smem:[#allocation7 + $0x11]]
    %v2094 = vstv %s2093
    %v2095 = vmul.f32 %v2094, %v2091
    %v2096 = vmul.f32 %v2094, %v2092
    %v2097 = vadd.f32 %v2065, %v2095
    %v2098 = vadd.f32 %v2066, %v2096
    %s2099 = sld [smem:[#allocation7 + $0x35]]
    %v2100 = vstv %s2099
    %v2101 = vmul.f32 %v2100, %v2091
    %v2102 = vmul.f32 %v2100, %v2092
    %v2103 = vadd.f32 %v2071, %v2101
    %v2104 = vadd.f32 %v2072, %v2102
    %s2105 = sld [smem:[#allocation7 + $0x59]]
    %v2106 = vstv %s2105
    %v2107 = vmul.f32 %v2106, %v2091
    %v2108 = vmul.f32 %v2106, %v2092
    %v2109 = vadd.f32 %v2077, %v2107
    %v2110 = vadd.f32 %v2078, %v2108
    %s2111 = sld [smem:[#allocation7 + $0x7d]]
    %v2112 = vstv %s2111
    %v2113 = vmul.f32 %v2112, %v2091
    %v2114 = vmul.f32 %v2112, %v2092
    %v2115 = vadd.f32 %v2083, %v2113
    %v2116 = vadd.f32 %v2084, %v2114
    %2117 = vrot.lane.b32.xlu0 %v1510, 17
    %v2118 = vpop.permute.xlu0 %2117
    %2119 = vrot.lane.b32.xlu0 %v1511, 17
    %v2120 = vpop.permute.xlu0 %2119
    %v2121 = vsel %vm162, %v2118, %v2120
    %v2122 = vsel %vm162, %v2120, %v2118
    %v2123 = vmul.f32 %v2122, %v114
    %v2124 = vmul.f32 %v2121, %v115
    %s2125 = sld [smem:[#allocation7 + $0x12]]
    %v2126 = vstv %s2125
    %v2127 = vmul.f32 %v2126, %v2123
    %v2128 = vmul.f32 %v2126, %v2124
    %v2129 = vadd.f32 %v2097, %v2127
    %v2130 = vadd.f32 %v2098, %v2128
    %s2131 = sld [smem:[#allocation7 + $0x36]]
    %v2132 = vstv %s2131
    %v2133 = vmul.f32 %v2132, %v2123
    %v2134 = vmul.f32 %v2132, %v2124
    %v2135 = vadd.f32 %v2103, %v2133
    %v2136 = vadd.f32 %v2104, %v2134
    %s2137 = sld [smem:[#allocation7 + $0x5a]]
    %v2138 = vstv %s2137
    %v2139 = vmul.f32 %v2138, %v2123
    %v2140 = vmul.f32 %v2138, %v2124
    %v2141 = vadd.f32 %v2109, %v2139
    %v2142 = vadd.f32 %v2110, %v2140
    %s2143 = sld [smem:[#allocation7 + $0x7e]]
    %v2144 = vstv %s2143
    %v2145 = vmul.f32 %v2144, %v2123
    %v2146 = vmul.f32 %v2144, %v2124
    %v2147 = vadd.f32 %v2115, %v2145
    %v2148 = vadd.f32 %v2116, %v2146
    %2149 = vrot.lane.b32.xlu0 %v1510, 16
    %v2150 = vpop.permute.xlu0 %2149
    %2151 = vrot.lane.b32.xlu0 %v1511, 16
    %v2152 = vpop.permute.xlu0 %2151
    %v2153 = vsel %vm195, %v2150, %v2152
    %v2154 = vsel %vm195, %v2152, %v2150
    %v2155 = vmul.f32 %v2154, %v118
    %v2156 = vmul.f32 %v2153, %v119
    %s2157 = sld [smem:[#allocation7 + $0x13]]
    %v2158 = vstv %s2157
    %v2159 = vmul.f32 %v2158, %v2155
    %v2160 = vmul.f32 %v2158, %v2156
    %v2161 = vadd.f32 %v2129, %v2159
    %v2162 = vadd.f32 %v2130, %v2160
    %s2163 = sld [smem:[#allocation7 + $0x37]]
    %v2164 = vstv %s2163
    %v2165 = vmul.f32 %v2164, %v2155
    %v2166 = vmul.f32 %v2164, %v2156
    %v2167 = vadd.f32 %v2135, %v2165
    %v2168 = vadd.f32 %v2136, %v2166
    %s2169 = sld [smem:[#allocation7 + $0x5b]]
    %v2170 = vstv %s2169
    %v2171 = vmul.f32 %v2170, %v2155
    %v2172 = vmul.f32 %v2170, %v2156
    %v2173 = vadd.f32 %v2141, %v2171
    %v2174 = vadd.f32 %v2142, %v2172
    %s2175 = sld [smem:[#allocation7 + $0x7f]]
    %v2176 = vstv %s2175
    %v2177 = vmul.f32 %v2176, %v2155
    %v2178 = vmul.f32 %v2176, %v2156
    %v2179 = vadd.f32 %v2147, %v2177
    %v2180 = vadd.f32 %v2148, %v2178
    %2181 = vrot.lane.b32.xlu0 %v1510, 15
    %v2182 = vpop.permute.xlu0 %2181
    %2183 = vrot.lane.b32.xlu0 %v1511, 15
    %v2184 = vpop.permute.xlu0 %2183
    %v2185 = vsel %vm228, %v2182, %v2184
    %v2186 = vsel %vm228, %v2184, %v2182
    %v2187 = vmul.f32 %v2186, %v124
    %v2188 = vmul.f32 %v2185, %v125
    %s2189 = sld [smem:[#allocation7 + $0x14]]
    %v2190 = vstv %s2189
    %v2191 = vmul.f32 %v2190, %v2187
    %v2192 = vmul.f32 %v2190, %v2188
    %v2193 = vadd.f32 %v2161, %v2191
    %v2194 = vadd.f32 %v2162, %v2192
    %s2195 = sld [smem:[#allocation7 + $0x38]]
    %v2196 = vstv %s2195
    %v2197 = vmul.f32 %v2196, %v2187
    %v2198 = vmul.f32 %v2196, %v2188
    %v2199 = vadd.f32 %v2167, %v2197
    %v2200 = vadd.f32 %v2168, %v2198
    %s2201 = sld [smem:[#allocation7 + $0x5c]]
    %v2202 = vstv %s2201
    %v2203 = vmul.f32 %v2202, %v2187
    %v2204 = vmul.f32 %v2202, %v2188
    %v2205 = vadd.f32 %v2173, %v2203
    %v2206 = vadd.f32 %v2174, %v2204
    %s2207 = sld [smem:[#allocation7 + $0x80]]
    %v2208 = vstv %s2207
    %v2209 = vmul.f32 %v2208, %v2187
    %v2210 = vmul.f32 %v2208, %v2188
    %v2211 = vadd.f32 %v2179, %v2209
    %v2212 = vadd.f32 %v2180, %v2210
    %2213 = vrot.lane.b32.xlu0 %v1510, 1
    %v2214 = vpop.permute.xlu0 %2213
    %2215 = vrot.lane.b32.xlu0 %v1511, 1
    %v2216 = vpop.permute.xlu0 %2215
    %v2217 = vsel %vm261, %v2214, %v2216
    %v2218 = vsel %vm261, %v2216, %v2214
    %v2219 = vmul.f32 %v2218, %v128
    %v2220 = vmul.f32 %v2217, %v129
    %s2221 = sld [smem:[#allocation7 + $0x15]]
    %v2222 = vstv %s2221
    %v2223 = vmul.f32 %v2222, %v2219
    %v2224 = vmul.f32 %v2222, %v2220
    %v2225 = vadd.f32 %v2193, %v2223
    %v2226 = vadd.f32 %v2194, %v2224
    %s2227 = sld [smem:[#allocation7 + $0x39]]
    %v2228 = vstv %s2227
    %v2229 = vmul.f32 %v2228, %v2219
    %v2230 = vmul.f32 %v2228, %v2220
    %v2231 = vadd.f32 %v2199, %v2229
    %v2232 = vadd.f32 %v2200, %v2230
    %s2233 = sld [smem:[#allocation7 + $0x5d]]
    %v2234 = vstv %s2233
    %v2235 = vmul.f32 %v2234, %v2219
    %v2236 = vmul.f32 %v2234, %v2220
    %v2237 = vadd.f32 %v2205, %v2235
    %v2238 = vadd.f32 %v2206, %v2236
    %s2239 = sld [smem:[#allocation7 + $0x81]]
    %v2240 = vstv %s2239
    %v2241 = vmul.f32 %v2240, %v2219
    %v2242 = vmul.f32 %v2240, %v2220
    %v2243 = vadd.f32 %v2211, %v2241
    %v2244 = vadd.f32 %v2212, %v2242
    %s2245 = sld [smem:[#allocation7 + $0x16]]
    %v2246 = vstv %s2245
    %v2247 = vmul.f32 %v2246, %v1510
    %v2248 = vmul.f32 %v2246, %v1511
    %v2249 = vadd.f32 %v2225, %v2247
    %v2250 = vadd.f32 %v2226, %v2248
    %s2251 = sld [smem:[#allocation7 + $0x3a]]
    %v2252 = vstv %s2251
    %v2253 = vmul.f32 %v2252, %v1510
    %v2254 = vmul.f32 %v2252, %v1511
    %v2255 = vadd.f32 %v2231, %v2253
    %v2256 = vadd.f32 %v2232, %v2254
    %s2257 = sld [smem:[#allocation7 + $0x5e]]
    %v2258 = vstv %s2257
    %v2259 = vmul.f32 %v2258, %v1510
    %v2260 = vmul.f32 %v2258, %v1511
    %v2261 = vadd.f32 %v2237, %v2259
    %v2262 = vadd.f32 %v2238, %v2260
    %s2263 = sld [smem:[#allocation7 + $0x82]]
    %v2264 = vstv %s2263
    %v2265 = vmul.f32 %v2264, %v1510
    %v2266 = vmul.f32 %v2264, %v1511
    %v2267 = vadd.f32 %v2243, %v2265
    %v2268 = vadd.f32 %v2244, %v2266
    %2269 = vrot.lane.b32.xlu0 %v1510, 127
    %v2270 = vpop.permute.xlu0 %2269
    %2271 = vrot.lane.b32.xlu0 %v1511, 127
    %v2272 = vpop.permute.xlu0 %2271
    %v2273 = vsel %vm318, %v2270, %v2272
    %v2274 = vsel %vm318, %v2272, %v2270
    %v2275 = vmul.f32 %v2273, %v132
    %v2276 = vmul.f32 %v2274, %v133
    %s2277 = sld [smem:[#allocation7 + $0x17]]
    %v2278 = vstv %s2277
    %v2279 = vmul.f32 %v2278, %v2275
    %v2280 = vmul.f32 %v2278, %v2276
    %v2281 = vadd.f32 %v2249, %v2279
    %v2282 = vadd.f32 %v2250, %v2280
    %s2283 = sld [smem:[#allocation7 + $0x3b]]
    %v2284 = vstv %s2283
    %v2285 = vmul.f32 %v2284, %v2275
    %v2286 = vmul.f32 %v2284, %v2276
    %v2287 = vadd.f32 %v2255, %v2285
    %v2288 = vadd.f32 %v2256, %v2286
    %s2289 = sld [smem:[#allocation7 + $0x5f]]
    %v2290 = vstv %s2289
    %v2291 = vmul.f32 %v2290, %v2275
    %v2292 = vmul.f32 %v2290, %v2276
    %v2293 = vadd.f32 %v2261, %v2291
    %v2294 = vadd.f32 %v2262, %v2292
    %s2295 = sld [smem:[#allocation7 + $0x83]]
    %v2296 = vstv %s2295
    %v2297 = vmul.f32 %v2296, %v2275
    %v2298 = vmul.f32 %v2296, %v2276
    %v2299 = vadd.f32 %v2267, %v2297
    %v2300 = vadd.f32 %v2268, %v2298
    %2301 = vrot.lane.b32.xlu0 %v1510, 113
    %v2302 = vpop.permute.xlu0 %2301
    %2303 = vrot.lane.b32.xlu0 %v1511, 113
    %v2304 = vpop.permute.xlu0 %2303
    %v2305 = vsel %vm351, %v2302, %v2304
    %v2306 = vsel %vm351, %v2304, %v2302
    %v2307 = vmul.f32 %v2305, %v138
    %v2308 = vmul.f32 %v2306, %v139
    %s2309 = sld [smem:[#allocation7 + $0x18]]
    %v2310 = vstv %s2309
    %v2311 = vmul.f32 %v2310, %v2307
    %v2312 = vmul.f32 %v2310, %v2308
    %v2313 = vadd.f32 %v2281, %v2311
    %v2314 = vadd.f32 %v2282, %v2312
    %s2315 = sld [smem:[#allocation7 + $0x3c]]
    %v2316 = vstv %s2315
    %v2317 = vmul.f32 %v2316, %v2307
    %v2318 = vmul.f32 %v2316, %v2308
    %v2319 = vadd.f32 %v2287, %v2317
    %v2320 = vadd.f32 %v2288, %v2318
    %s2321 = sld [smem:[#allocation7 + $0x60]]
    %v2322 = vstv %s2321
    %v2323 = vmul.f32 %v2322, %v2307
    %v2324 = vmul.f32 %v2322, %v2308
    %v2325 = vadd.f32 %v2293, %v2323
    %v2326 = vadd.f32 %v2294, %v2324
    %s2327 = sld [smem:[#allocation7 + $0x84]]
    %v2328 = vstv %s2327
    %v2329 = vmul.f32 %v2328, %v2307
    %v2330 = vmul.f32 %v2328, %v2308
    %v2331 = vadd.f32 %v2299, %v2329
    %v2332 = vadd.f32 %v2300, %v2330
    %2333 = vrot.lane.b32.xlu0 %v1510, 112
    %v2334 = vpop.permute.xlu0 %2333
    %2335 = vrot.lane.b32.xlu0 %v1511, 112
    %v2336 = vpop.permute.xlu0 %2335
    %v2337 = vsel %vm384, %v2334, %v2336
    %v2338 = vsel %vm384, %v2336, %v2334
    %v2339 = vmul.f32 %v2337, %v142
    %v2340 = vmul.f32 %v2338, %v143
    %s2341 = sld [smem:[#allocation7 + $0x19]]
    %v2342 = vstv %s2341
    %v2343 = vmul.f32 %v2342, %v2339
    %v2344 = vmul.f32 %v2342, %v2340
    %v2345 = vadd.f32 %v2313, %v2343
    %v2346 = vadd.f32 %v2314, %v2344
    %s2347 = sld [smem:[#allocation7 + $0x3d]]
    %v2348 = vstv %s2347
    %v2349 = vmul.f32 %v2348, %v2339
    %v2350 = vmul.f32 %v2348, %v2340
    %v2351 = vadd.f32 %v2319, %v2349
    %v2352 = vadd.f32 %v2320, %v2350
    %s2353 = sld [smem:[#allocation7 + $0x61]]
    %v2354 = vstv %s2353
    %v2355 = vmul.f32 %v2354, %v2339
    %v2356 = vmul.f32 %v2354, %v2340
    %v2357 = vadd.f32 %v2325, %v2355
    %v2358 = vadd.f32 %v2326, %v2356
    %s2359 = sld [smem:[#allocation7 + $0x85]]
    %v2360 = vstv %s2359
    %v2361 = vmul.f32 %v2360, %v2339
    %v2362 = vmul.f32 %v2360, %v2340
    %v2363 = vadd.f32 %v2331, %v2361
    %v2364 = vadd.f32 %v2332, %v2362
    %2365 = vrot.lane.b32.xlu0 %v1510, 111
    %v2366 = vpop.permute.xlu0 %2365
    %2367 = vrot.lane.b32.xlu0 %v1511, 111
    %v2368 = vpop.permute.xlu0 %2367
    %v2369 = vsel %vm417, %v2366, %v2368
    %v2370 = vsel %vm417, %v2368, %v2366
    %v2371 = vmul.f32 %v2369, %v148
    %v2372 = vmul.f32 %v2370, %v149
    %s2373 = sld [smem:[#allocation7 + $0x1a]]
    %v2374 = vstv %s2373
    %v2375 = vmul.f32 %v2374, %v2371
    %v2376 = vmul.f32 %v2374, %v2372
    %v2377 = vadd.f32 %v2345, %v2375
    %v2378 = vadd.f32 %v2346, %v2376
    %s2379 = sld [smem:[#allocation7 + $0x3e]]
    %v2380 = vstv %s2379
    %v2381 = vmul.f32 %v2380, %v2371
    %v2382 = vmul.f32 %v2380, %v2372
    %v2383 = vadd.f32 %v2351, %v2381
    %v2384 = vadd.f32 %v2352, %v2382
    %s2385 = sld [smem:[#allocation7 + $0x62]]
    %v2386 = vstv %s2385
    %v2387 = vmul.f32 %v2386, %v2371
    %v2388 = vmul.f32 %v2386, %v2372
    %v2389 = vadd.f32 %v2357, %v2387
    %v2390 = vadd.f32 %v2358, %v2388
    %s2391 = sld [smem:[#allocation7 + $0x86]]
    %v2392 = vstv %s2391
    %v2393 = vmul.f32 %v2392, %v2371
    %v2394 = vmul.f32 %v2392, %v2372
    %v2395 = vadd.f32 %v2363, %v2393
    %v2396 = vadd.f32 %v2364, %v2394
    %2397 = vrot.lane.b32.xlu0 %v1555, 17
    %v2398 = vpop.permute.xlu0 %2397
    %2399 = vrot.lane.b32.xlu0 %v1556, 17
    %v2400 = vpop.permute.xlu0 %2399
    %v2401 = vsel %vm162, %v2398, %v2400
    %v2402 = vsel %vm162, %v2400, %v2398
    %v2403 = vmul.f32 %v2402, %v114
    %v2404 = vmul.f32 %v2401, %v115
    %s2405 = sld [smem:[#allocation7 + $0x1b]]
    %v2406 = vstv %s2405
    %v2407 = vmul.f32 %v2406, %v2403
    %v2408 = vmul.f32 %v2406, %v2404
    %v2409 = vadd.f32 %v2377, %v2407
    %v2410 = vadd.f32 %v2378, %v2408
    %s2411 = sld [smem:[#allocation7 + $0x3f]]
    %v2412 = vstv %s2411
    %v2413 = vmul.f32 %v2412, %v2403
    %v2414 = vmul.f32 %v2412, %v2404
    %v2415 = vadd.f32 %v2383, %v2413
    %v2416 = vadd.f32 %v2384, %v2414
    %s2417 = sld [smem:[#allocation7 + $0x63]]
    %v2418 = vstv %s2417
    %v2419 = vmul.f32 %v2418, %v2403
    %v2420 = vmul.f32 %v2418, %v2404
    %v2421 = vadd.f32 %v2389, %v2419
    %v2422 = vadd.f32 %v2390, %v2420
    %s2423 = sld [smem:[#allocation7 + $0x87]]
    %v2424 = vstv %s2423
    %v2425 = vmul.f32 %v2424, %v2403
    %v2426 = vmul.f32 %v2424, %v2404
    %v2427 = vadd.f32 %v2395, %v2425
    %v2428 = vadd.f32 %v2396, %v2426
    %2429 = vrot.lane.b32.xlu0 %v1555, 16
    %v2430 = vpop.permute.xlu0 %2429
    %2431 = vrot.lane.b32.xlu0 %v1556, 16
    %v2432 = vpop.permute.xlu0 %2431
    %v2433 = vsel %vm195, %v2430, %v2432
    %v2434 = vsel %vm195, %v2432, %v2430
    %v2435 = vmul.f32 %v2434, %v118
    %v2436 = vmul.f32 %v2433, %v119
    %s2437 = sld [smem:[#allocation7 + $0x1c]]
    %v2438 = vstv %s2437
    %v2439 = vmul.f32 %v2438, %v2435
    %v2440 = vmul.f32 %v2438, %v2436
    %v2441 = vadd.f32 %v2409, %v2439
    %v2442 = vadd.f32 %v2410, %v2440
    %s2443 = sld [smem:[#allocation7 + $0x40]]
    %v2444 = vstv %s2443
    %v2445 = vmul.f32 %v2444, %v2435
    %v2446 = vmul.f32 %v2444, %v2436
    %v2447 = vadd.f32 %v2415, %v2445
    %v2448 = vadd.f32 %v2416, %v2446
    %s2449 = sld [smem:[#allocation7 + $0x64]]
    %v2450 = vstv %s2449
    %v2451 = vmul.f32 %v2450, %v2435
    %v2452 = vmul.f32 %v2450, %v2436
    %v2453 = vadd.f32 %v2421, %v2451
    %v2454 = vadd.f32 %v2422, %v2452
    %s2455 = sld [smem:[#allocation7 + $0x88]]
    %v2456 = vstv %s2455
    %v2457 = vmul.f32 %v2456, %v2435
    %v2458 = vmul.f32 %v2456, %v2436
    %v2459 = vadd.f32 %v2427, %v2457
    %v2460 = vadd.f32 %v2428, %v2458
    %2461 = vrot.lane.b32.xlu0 %v1555, 15
    %v2462 = vpop.permute.xlu0 %2461
    %2463 = vrot.lane.b32.xlu0 %v1556, 15
    %v2464 = vpop.permute.xlu0 %2463
    %v2465 = vsel %vm228, %v2462, %v2464
    %v2466 = vsel %vm228, %v2464, %v2462
    %v2467 = vmul.f32 %v2466, %v124
    %v2468 = vmul.f32 %v2465, %v125
    %s2469 = sld [smem:[#allocation7 + $0x1d]]
    %v2470 = vstv %s2469
    %v2471 = vmul.f32 %v2470, %v2467
    %v2472 = vmul.f32 %v2470, %v2468
    %v2473 = vadd.f32 %v2441, %v2471
    %v2474 = vadd.f32 %v2442, %v2472
    %s2475 = sld [smem:[#allocation7 + $0x41]]
    %v2476 = vstv %s2475
    %v2477 = vmul.f32 %v2476, %v2467
    %v2478 = vmul.f32 %v2476, %v2468
    %v2479 = vadd.f32 %v2447, %v2477
    %v2480 = vadd.f32 %v2448, %v2478
    %s2481 = sld [smem:[#allocation7 + $0x65]]
    %v2482 = vstv %s2481
    %v2483 = vmul.f32 %v2482, %v2467
    %v2484 = vmul.f32 %v2482, %v2468
    %v2485 = vadd.f32 %v2453, %v2483
    %v2486 = vadd.f32 %v2454, %v2484
    %s2487 = sld [smem:[#allocation7 + $0x89]]
    %v2488 = vstv %s2487
    %v2489 = vmul.f32 %v2488, %v2467
    %v2490 = vmul.f32 %v2488, %v2468
    %v2491 = vadd.f32 %v2459, %v2489
    %v2492 = vadd.f32 %v2460, %v2490
    %2493 = vrot.lane.b32.xlu0 %v1555, 1
    %v2494 = vpop.permute.xlu0 %2493
    %2495 = vrot.lane.b32.xlu0 %v1556, 1
    %v2496 = vpop.permute.xlu0 %2495
    %v2497 = vsel %vm261, %v2494, %v2496
    %v2498 = vsel %vm261, %v2496, %v2494
    %v2499 = vmul.f32 %v2498, %v128
    %v2500 = vmul.f32 %v2497, %v129
    %s2501 = sld [smem:[#allocation7 + $0x1e]]
    %v2502 = vstv %s2501
    %v2503 = vmul.f32 %v2502, %v2499
    %v2504 = vmul.f32 %v2502, %v2500
    %v2505 = vadd.f32 %v2473, %v2503
    %v2506 = vadd.f32 %v2474, %v2504
    %s2507 = sld [smem:[#allocation7 + $0x42]]
    %v2508 = vstv %s2507
    %v2509 = vmul.f32 %v2508, %v2499
    %v2510 = vmul.f32 %v2508, %v2500
    %v2511 = vadd.f32 %v2479, %v2509
    %v2512 = vadd.f32 %v2480, %v2510
    %s2513 = sld [smem:[#allocation7 + $0x66]]
    %v2514 = vstv %s2513
    %v2515 = vmul.f32 %v2514, %v2499
    %v2516 = vmul.f32 %v2514, %v2500
    %v2517 = vadd.f32 %v2485, %v2515
    %v2518 = vadd.f32 %v2486, %v2516
    %s2519 = sld [smem:[#allocation7 + $0x8a]]
    %v2520 = vstv %s2519
    %v2521 = vmul.f32 %v2520, %v2499
    %v2522 = vmul.f32 %v2520, %v2500
    %v2523 = vadd.f32 %v2491, %v2521
    %v2524 = vadd.f32 %v2492, %v2522
    %s2525 = sld [smem:[#allocation7 + $0x1f]]
    %v2526 = vstv %s2525
    %v2527 = vmul.f32 %v2526, %v1555
    %v2528 = vmul.f32 %v2526, %v1556
    %v2529 = vadd.f32 %v2505, %v2527
    %v2530 = vadd.f32 %v2506, %v2528
    %s2531 = sld [smem:[#allocation7 + $0x43]]
    %v2532 = vstv %s2531
    %v2533 = vmul.f32 %v2532, %v1555
    %v2534 = vmul.f32 %v2532, %v1556
    %v2535 = vadd.f32 %v2511, %v2533
    %v2536 = vadd.f32 %v2512, %v2534
    %s2537 = sld [smem:[#allocation7 + $0x67]]
    %v2538 = vstv %s2537
    %v2539 = vmul.f32 %v2538, %v1555
    %v2540 = vmul.f32 %v2538, %v1556
    %v2541 = vadd.f32 %v2517, %v2539
    %v2542 = vadd.f32 %v2518, %v2540
    %s2543 = sld [smem:[#allocation7 + $0x8b]]
    %v2544 = vstv %s2543
    %v2545 = vmul.f32 %v2544, %v1555
    %v2546 = vmul.f32 %v2544, %v1556
    %v2547 = vadd.f32 %v2523, %v2545
    %v2548 = vadd.f32 %v2524, %v2546
    %2549 = vrot.lane.b32.xlu0 %v1555, 127
    %v2550 = vpop.permute.xlu0 %2549
    %2551 = vrot.lane.b32.xlu0 %v1556, 127
    %v2552 = vpop.permute.xlu0 %2551
    %v2553 = vsel %vm318, %v2550, %v2552
    %v2554 = vsel %vm318, %v2552, %v2550
    %v2555 = vmul.f32 %v2553, %v132
    %v2556 = vmul.f32 %v2554, %v133
    %s2557 = sld [smem:[#allocation7 + $0x20]]
    %v2558 = vstv %s2557
    %v2559 = vmul.f32 %v2558, %v2555
    %v2560 = vmul.f32 %v2558, %v2556
    %v2561 = vadd.f32 %v2529, %v2559
    %v2562 = vadd.f32 %v2530, %v2560
    %s2563 = sld [smem:[#allocation7 + $0x44]]
    %v2564 = vstv %s2563
    %v2565 = vmul.f32 %v2564, %v2555
    %v2566 = vmul.f32 %v2564, %v2556
    %v2567 = vadd.f32 %v2535, %v2565
    %v2568 = vadd.f32 %v2536, %v2566
    %s2569 = sld [smem:[#allocation7 + $0x68]]
    %v2570 = vstv %s2569
    %v2571 = vmul.f32 %v2570, %v2555
    %v2572 = vmul.f32 %v2570, %v2556
    %v2573 = vadd.f32 %v2541, %v2571
    %v2574 = vadd.f32 %v2542, %v2572
    %s2575 = sld [smem:[#allocation7 + $0x8c]]
    %v2576 = vstv %s2575
    %v2577 = vmul.f32 %v2576, %v2555
    %v2578 = vmul.f32 %v2576, %v2556
    %v2579 = vadd.f32 %v2547, %v2577
    %v2580 = vadd.f32 %v2548, %v2578
    %2581 = vrot.lane.b32.xlu0 %v1555, 113
    %v2582 = vpop.permute.xlu0 %2581
    %2583 = vrot.lane.b32.xlu0 %v1556, 113
    %v2584 = vpop.permute.xlu0 %2583
    %v2585 = vsel %vm351, %v2582, %v2584
    %v2586 = vsel %vm351, %v2584, %v2582
    %v2587 = vmul.f32 %v2585, %v138
    %v2588 = vmul.f32 %v2586, %v139
    %s2589 = sld [smem:[#allocation7 + $0x21]]
    %v2590 = vstv %s2589
    %v2591 = vmul.f32 %v2590, %v2587
    %v2592 = vmul.f32 %v2590, %v2588
    %v2593 = vadd.f32 %v2561, %v2591
    %v2594 = vadd.f32 %v2562, %v2592
    %s2595 = sld [smem:[#allocation7 + $0x45]]
    %v2596 = vstv %s2595
    %v2597 = vmul.f32 %v2596, %v2587
    %v2598 = vmul.f32 %v2596, %v2588
    %v2599 = vadd.f32 %v2567, %v2597
    %v2600 = vadd.f32 %v2568, %v2598
    %s2601 = sld [smem:[#allocation7 + $0x69]]
    %v2602 = vstv %s2601
    %v2603 = vmul.f32 %v2602, %v2587
    %v2604 = vmul.f32 %v2602, %v2588
    %v2605 = vadd.f32 %v2573, %v2603
    %v2606 = vadd.f32 %v2574, %v2604
    %s2607 = sld [smem:[#allocation7 + $0x8d]]
    %v2608 = vstv %s2607
    %v2609 = vmul.f32 %v2608, %v2587
    %v2610 = vmul.f32 %v2608, %v2588
    %v2611 = vadd.f32 %v2579, %v2609
    %v2612 = vadd.f32 %v2580, %v2610
    %2613 = vrot.lane.b32.xlu0 %v1555, 112
    %v2614 = vpop.permute.xlu0 %2613
    %2615 = vrot.lane.b32.xlu0 %v1556, 112
    %v2616 = vpop.permute.xlu0 %2615
    %v2617 = vsel %vm384, %v2614, %v2616
    %v2618 = vsel %vm384, %v2616, %v2614
    %v2619 = vmul.f32 %v2617, %v142
    %v2620 = vmul.f32 %v2618, %v143
    %s2621 = sld [smem:[#allocation7 + $0x22]]
    %v2622 = vstv %s2621
    %v2623 = vmul.f32 %v2622, %v2619
    %v2624 = vmul.f32 %v2622, %v2620
    %v2625 = vadd.f32 %v2593, %v2623
    %v2626 = vadd.f32 %v2594, %v2624
    %s2627 = sld [smem:[#allocation7 + $0x46]]
    %v2628 = vstv %s2627
    %v2629 = vmul.f32 %v2628, %v2619
    %v2630 = vmul.f32 %v2628, %v2620
    %v2631 = vadd.f32 %v2599, %v2629
    %v2632 = vadd.f32 %v2600, %v2630
    %s2633 = sld [smem:[#allocation7 + $0x6a]]
    %v2634 = vstv %s2633
    %v2635 = vmul.f32 %v2634, %v2619
    %v2636 = vmul.f32 %v2634, %v2620
    %v2637 = vadd.f32 %v2605, %v2635
    %v2638 = vadd.f32 %v2606, %v2636
    %s2639 = sld [smem:[#allocation7 + $0x8e]]
    %v2640 = vstv %s2639
    %v2641 = vmul.f32 %v2640, %v2619
    %v2642 = vmul.f32 %v2640, %v2620
    %v2643 = vadd.f32 %v2611, %v2641
    %v2644 = vadd.f32 %v2612, %v2642
    %2645 = vrot.lane.b32.xlu0 %v1555, 111
    %v2646 = vpop.permute.xlu0 %2645
    %2647 = vrot.lane.b32.xlu0 %v1556, 111
    %v2648 = vpop.permute.xlu0 %2647
    %v2649 = vsel %vm417, %v2646, %v2648
    %v2650 = vsel %vm417, %v2648, %v2646
    %v2651 = vmul.f32 %v2649, %v148
    %v2652 = vmul.f32 %v2650, %v149
    %s2653 = sld [smem:[#allocation7 + $0x23]]
    %v2654 = vstv %s2653
    %v2655 = vmul.f32 %v2654, %v2651
    %v2656 = vmul.f32 %v2654, %v2652
    %v2657 = vadd.f32 %v2625, %v2655
    %v2658 = vadd.f32 %v2626, %v2656
    %s2659 = sld [smem:[#allocation7 + $0x47]]
    %v2660 = vstv %s2659
    %v2661 = vmul.f32 %v2660, %v2651
    %v2662 = vmul.f32 %v2660, %v2652
    %v2663 = vadd.f32 %v2631, %v2661
    %v2664 = vadd.f32 %v2632, %v2662
    %s2665 = sld [smem:[#allocation7 + $0x6b]]
    %v2666 = vstv %s2665
    %v2667 = vmul.f32 %v2666, %v2651
    %v2668 = vmul.f32 %v2666, %v2652
    %v2669 = vadd.f32 %v2637, %v2667
    %v2670 = vadd.f32 %v2638, %v2668
    %s2671 = sld [smem:[#allocation7 + $0x8f]]
    %v2672 = vstv %s2671
    %v2673 = vmul.f32 %v2672, %v2651
    %v2674 = vmul.f32 %v2672, %v2652
    %v2675 = vadd.f32 %v2643, %v2673
    %v2676 = vadd.f32 %v2644, %v2674
    %v2677 = vsel %vm1376, %v2657, 0.0
    %v2678 = vsel %vm1376, %v2658, 0.0
    %v2679 = vadd.f32 %v2677, %v2678
    %2680 = vadd.xlane.f32.xlu0 %v2679
    %v2681 = vpop.xlane.xlu0 %2680
    %v2682 = vsel %vm1376, %v2681, 0.0
    %v2683 = vrot.slane %v2682, 4
    %v2684 = vadd.f32 %v2682, %v2683
    %v2685 = vrot.slane %v2684, 2
    %v2686 = vadd.f32 %v2684, %v2685
    %v2687 = vrot.slane %v2686, 1
    %v2688 = vadd.f32 %v2686, %v2687
    %v2689 = vmul.f32 %v2657, %v2657
    %v2690 = vmul.f32 %v2658, %v2658
    %v2691 = vsel %vm1376, %v2689, 0.0
    %v2692 = vsel %vm1376, %v2690, 0.0
    %v2693 = vadd.f32 %v2691, %v2692
    %2694 = vadd.xlane.f32.xlu0 %v2693
    %v2695 = vpop.xlane.xlu0 %2694
    %v2696 = vsel %vm1376, %v2695, 0.0
    %v2697 = vrot.slane %v2696, 4
    %v2698 = vadd.f32 %v2696, %v2697
    %v2699 = vrot.slane %v2698, 2
    %v2700 = vadd.f32 %v2698, %v2699
    %v2701 = vrot.slane %v2700, 1
    %v2702 = vadd.f32 %v2700, %v2701
    %v2703 = vmul.f32 %v2688, 0.001953125
    %v2704 = vmul.f32 %v2702, 0.001953125
    %v2705 = vmul.f32 %v2703, %v2703
    %v2706 = vsub.f32 %v2704, %v2705
    %s2707 = sld [smem:[#allocation9]]
    %v2708 = vadd.f32 %v2706, 1e-05
    %v2709 = vrsqrt.pop %v2708
    %v2710 = vstv %s2707
    %v2711 = vmul.f32 %v2710, %v2709
    %s2712 = sld [smem:[#allocation10]]
    %v2713 = vmul.f32 %v2703, %v2711
    %v2714 = vstv %s2712
    %v2715 = vsub.f32 %v2714, %v2713
    %v2716 = vmul.f32 %v2657, %v2711
    %v2717 = vmul.f32 %v2658, %v2711
    %v2718 = vadd.f32 %v2716, %v2715
    %v2719 = vadd.f32 %v2717, %v2715
    %v2720 = vsel %vm1376, %v2663, 0.0
    %v2721 = vsel %vm1376, %v2664, 0.0
    %v2722 = vadd.f32 %v2720, %v2721
    %2723 = vadd.xlane.f32.xlu0 %v2722
    %v2724 = vpop.xlane.xlu0 %2723
    %v2725 = vsel %vm1376, %v2724, 0.0
    %v2726 = vrot.slane %v2725, 4
    %v2727 = vadd.f32 %v2725, %v2726
    %v2728 = vrot.slane %v2727, 2
    %v2729 = vadd.f32 %v2727, %v2728
    %v2730 = vrot.slane %v2729, 1
    %v2731 = vadd.f32 %v2729, %v2730
    %v2732 = vmul.f32 %v2663, %v2663
    %v2733 = vmul.f32 %v2664, %v2664
    %v2734 = vsel %vm1376, %v2732, 0.0
    %v2735 = vsel %vm1376, %v2733, 0.0
    %v2736 = vadd.f32 %v2734, %v2735
    %2737 = vadd.xlane.f32.xlu0 %v2736
    %v2738 = vpop.xlane.xlu0 %2737
    %v2739 = vsel %vm1376, %v2738, 0.0
    %v2740 = vrot.slane %v2739, 4
    %v2741 = vadd.f32 %v2739, %v2740
    %v2742 = vrot.slane %v2741, 2
    %v2743 = vadd.f32 %v2741, %v2742
    %v2744 = vrot.slane %v2743, 1
    %v2745 = vadd.f32 %v2743, %v2744
    %v2746 = vmul.f32 %v2731, 0.001953125
    %v2747 = vmul.f32 %v2745, 0.001953125
    %v2748 = vmul.f32 %v2746, %v2746
    %v2749 = vsub.f32 %v2747, %v2748
    %s2750 = sld [smem:[#allocation9 + $0x1]]
    %v2751 = vadd.f32 %v2749, 1e-05
    %v2752 = vrsqrt.pop %v2751
    %v2753 = vstv %s2750
    %v2754 = vmul.f32 %v2753, %v2752
    %s2755 = sld [smem:[#allocation10 + $0x1]]
    %v2756 = vmul.f32 %v2746, %v2754
    %v2757 = vstv %s2755
    %v2758 = vsub.f32 %v2757, %v2756
    %v2759 = vmul.f32 %v2663, %v2754
    %v2760 = vmul.f32 %v2664, %v2754
    %v2761 = vadd.f32 %v2759, %v2758
    %v2762 = vadd.f32 %v2760, %v2758
    %v2763 = vsel %vm1376, %v2669, 0.0
    %v2764 = vsel %vm1376, %v2670, 0.0
    %v2765 = vadd.f32 %v2763, %v2764
    %2766 = vadd.xlane.f32.xlu0 %v2765
    %v2767 = vpop.xlane.xlu0 %2766
    %v2768 = vsel %vm1376, %v2767, 0.0
    %v2769 = vrot.slane %v2768, 4
    %v2770 = vadd.f32 %v2768, %v2769
    %v2771 = vrot.slane %v2770, 2
    %v2772 = vadd.f32 %v2770, %v2771
    %v2773 = vrot.slane %v2772, 1
    %v2774 = vadd.f32 %v2772, %v2773
    %v2775 = vmul.f32 %v2669, %v2669
    %v2776 = vmul.f32 %v2670, %v2670
    %v2777 = vsel %vm1376, %v2775, 0.0
    %v2778 = vsel %vm1376, %v2776, 0.0
    %v2779 = vadd.f32 %v2777, %v2778
    %2780 = vadd.xlane.f32.xlu0 %v2779
    %v2781 = vpop.xlane.xlu0 %2780
    %v2782 = vsel %vm1376, %v2781, 0.0
    %v2783 = vrot.slane %v2782, 4
    %v2784 = vadd.f32 %v2782, %v2783
    %v2785 = vrot.slane %v2784, 2
    %v2786 = vadd.f32 %v2784, %v2785
    %v2787 = vrot.slane %v2786, 1
    %v2788 = vadd.f32 %v2786, %v2787
    %v2789 = vmul.f32 %v2774, 0.001953125
    %v2790 = vmul.f32 %v2788, 0.001953125
    %v2791 = vmul.f32 %v2789, %v2789
    %v2792 = vsub.f32 %v2790, %v2791
    %s2793 = sld [smem:[#allocation9 + $0x2]]
    %v2794 = vadd.f32 %v2792, 1e-05
    %v2795 = vrsqrt.pop %v2794
    %v2796 = vstv %s2793
    %v2797 = vmul.f32 %v2796, %v2795
    %s2798 = sld [smem:[#allocation10 + $0x2]]
    %v2799 = vmul.f32 %v2789, %v2797
    %v2800 = vstv %s2798
    %v2801 = vsub.f32 %v2800, %v2799
    %v2802 = vmul.f32 %v2669, %v2797
    %v2803 = vmul.f32 %v2670, %v2797
    %v2804 = vadd.f32 %v2802, %v2801
    %v2805 = vadd.f32 %v2803, %v2801
    %v2806 = vsel %vm1376, %v2675, 0.0
    %v2807 = vsel %vm1376, %v2676, 0.0
    %v2808 = vadd.f32 %v2806, %v2807
    %2809 = vadd.xlane.f32.xlu0 %v2808
    %v2810 = vpop.xlane.xlu0 %2809
    %v2811 = vsel %vm1376, %v2810, 0.0
    %v2812 = vrot.slane %v2811, 4
    %v2813 = vadd.f32 %v2811, %v2812
    %v2814 = vrot.slane %v2813, 2
    %v2815 = vadd.f32 %v2813, %v2814
    %v2816 = vrot.slane %v2815, 1
    %v2817 = vadd.f32 %v2815, %v2816
    %v2818 = vmul.f32 %v2675, %v2675
    %v2819 = vmul.f32 %v2676, %v2676
    %v2820 = vsel %vm1376, %v2818, 0.0
    %v2821 = vsel %vm1376, %v2819, 0.0
    %v2822 = vadd.f32 %v2820, %v2821
    %2823 = vadd.xlane.f32.xlu0 %v2822
    %v2824 = vpop.xlane.xlu0 %2823
    %v2825 = vsel %vm1376, %v2824, 0.0
    %v2826 = vrot.slane %v2825, 4
    %v2827 = vadd.f32 %v2825, %v2826
    %v2828 = vrot.slane %v2827, 2
    %v2829 = vadd.f32 %v2827, %v2828
    %v2830 = vrot.slane %v2829, 1
    %v2831 = vadd.f32 %v2829, %v2830
    %v2832 = vmul.f32 %v2817, 0.001953125
    %v2833 = vmul.f32 %v2831, 0.001953125
    %v2834 = vmul.f32 %v2832, %v2832
    %v2835 = vsub.f32 %v2833, %v2834
    %s2836 = sld [smem:[#allocation9 + $0x3]]
    %v2837 = vadd.f32 %v2835, 1e-05
    %v2838 = vrsqrt.pop %v2837
    %v2839 = vstv %s2836
    %v2840 = vmul.f32 %v2839, %v2838
    %s2841 = sld [smem:[#allocation10 + $0x3]]
    %v2842 = vmul.f32 %v2832, %v2840
    %v2843 = vstv %s2841
    %v2844 = vsub.f32 %v2843, %v2842
    %v2845 = vmul.f32 %v2675, %v2840
    %v2846 = vmul.f32 %v2676, %v2840
    %v2847 = vadd.f32 %v2845, %v2844
    %v2848 = vadd.f32 %v2846, %v2844
    %v2849 = vadd.f32 %v2718, %v150
    %v2850 = vadd.f32 %v2719, %v151
    %v2851 = vmax.f32 %v2849, 0.0
    %v2852 = vmax.f32 %v2850, 0.0
    %2853 = vst [vmem:[%s7] sm:$0x3] %v2851
    %2854 = vst [vmem:[%s7 + $0x8] sm:$0x3] %v2852
    %v2855 = vadd.f32 %v2761, %v448
    %v2856 = vadd.f32 %v2762, %v449
    %v2857 = vmax.f32 %v2855, 0.0
    %v2858 = vmax.f32 %v2856, 0.0
    %v2861 = vrot.slane %v2857, 6
    %v2862 = vrot.slane %v2858, 6
    %2865 = vst [vmem:[%s7] sm:$0xc] %v2861
    %2866 = vst [vmem:[%s7 + $0x8] sm:$0xc] %v2862
    %v2867 = vadd.f32 %v2804, %v758
    %v2868 = vadd.f32 %v2805, %v759
    %v2869 = vmax.f32 %v2867, 0.0
    %v2870 = vmax.f32 %v2868, 0.0
    %v2873 = vrot.slane %v2869, 4
    %v2874 = vrot.slane %v2870, 4
    %2877 = vst [vmem:[%s7] sm:$0x30] %v2873
    %2878 = vst [vmem:[%s7 + $0x8] sm:$0x30] %v2874
    %v2879 = vadd.f32 %v2847, %v1068
    %v2880 = vadd.f32 %v2848, %v1069
    %v2881 = vmax.f32 %v2879, 0.0
    %v2882 = vmax.f32 %v2880, 0.0
    %v2885 = vrot.slane %v2881, 2
    %v2886 = vrot.slane %v2882, 2
    %2889 = vst [vmem:[%s7] sm:$0xc0] %v2885
    %2890 = vst [vmem:[%s7 + $0x8] sm:$0xc0] %v2886
    // Predicated region
    $region54: #{basic_block_forward.1} parent=1 // pred_check
      _
    $region55: #{basic_block_forward.1} parent=1 // pred_check_branch
      %2892 = sbr.rel (0) target = $region57
    $region56: #{basic_block_forward.1} parent=1 // pred_region
      _
    $region57: #{basic_block_forward.1} parent=1 // pred_fallthru
      _
    // Predicated region
    $region58: #{basic_block_forward.1} parent=1 // pred_check
      _
    $region59: #{basic_block_forward.1} parent=1 // pred_check_branch
      %2894 = sbr.rel (0) target = $region61
    $region60: #{basic_block_forward.1} parent=1 // pred_region
      _
    $region61: #{basic_block_forward.1} parent=1 // pred_fallthru
      _
    %2895 = vsyncpa [#allocation3], 1
    %2896 = vsyncpa [#allocation5], 1
    %2897 = vsyncpa [#allocation8], 1
    %2898 = vsyncpa [#allocation11], 1

</llo_original>
